<compile_context>
chip_gen: v6e
topology: v6e:2x2x1
jax: 0.10.0
libtpu: 0.0.40
codegen_flags: <defaults>
</compile_context>

<pallas_src>
import functools

import jax
import jax.numpy as jnp
import numpy as np
from jax import lax
from jax.experimental import pallas as pl
from jax.experimental.pallas import tpu as pltpu

LANE = 128


def _round_up(n, m):
    return ((n + m - 1) // m) * m


# ----------------------------------------------------------------------------
# Fused 2-layer LSTM encoder kernel (single pallas_call, no grid)
# ----------------------------------------------------------------------------
def _make_fused_encoder_kernel(T: int, H1p: int, H2p: int):
    """Kernel: x (T, Ip) -> final layer-2 hidden state (1, H2p)."""

    def lstm_recurrence(xp_ref, whh, Hp, h_seq_ref=None):
        """Run the recurrence given the precomputed input projection xp_ref."""

        def step(t, carry):
            h, c = carry                                           # (1, Hp) each
            gates = xp_ref[pl.ds(t, 1), :] + jnp.dot(
                h, whh, preferred_element_type=jnp.float32)        # (1, 4*Hp)
            # Two full-row EUP passes; every gate slice below is a whole vreg.
            sig = jax.nn.sigmoid(gates)
            th = jnp.tanh(gates)
            i_g = sig[:, 0 * Hp:1 * Hp]
            f_g = sig[:, 1 * Hp:2 * Hp]
            g_g = th[:, 2 * Hp:3 * Hp]
            o_g = sig[:, 3 * Hp:4 * Hp]
            c_new = f_g * c + i_g * g_g
            h_new = o_g * jnp.tanh(c_new)
            if h_seq_ref is not None:
                h_seq_ref[pl.ds(t, 1), :] = h_new
            return (h_new, c_new)

        h0 = jnp.zeros((1, Hp), jnp.float32)
        c0 = jnp.zeros((1, Hp), jnp.float32)
        # T is static and tiny -> fully unroll so the LLO scheduler can overlap
        # step t's gate math with step t+1's recurrent matmul.
        return lax.fori_loop(0, T, step, (h0, c0), unroll=True)

    def kernel(x_ref, w1i_ref, w1h_ref, b1_ref,
               w2i_ref, w2h_ref, b2_ref,
               out_ref, h1_ref, xp1_ref, xp2_ref):
        # ---- Layer 1: hoisted input projection (one batched MXU matmul) ----
        xp1_ref[...] = (
            jnp.dot(x_ref[...], w1i_ref[...], preferred_element_type=jnp.float32)
            + b1_ref[...])
        lstm_recurrence(xp1_ref, w1h_ref[...], H1p, h_seq_ref=h1_ref)

        # ---- Layer 2: input projection over the whole layer-1 hidden seq ----
        xp2_ref[...] = (
            jnp.dot(h1_ref[...], w2i_ref[...], preferred_element_type=jnp.float32)
            + b2_ref[...])
        h_final, _ = lstm_recurrence(xp2_ref, w2h_ref[...], H2p)

        out_ref[...] = h_final                                     # (1, H2p), lane-dense

    return kernel


# ----------------------------------------------------------------------------
# Parameter init (PyTorch layout) + one-time packing into the kernel layout
# ----------------------------------------------------------------------------
def init_encoder_params(key, seq_len, n_features, embedding_dim):
    hidden_dim = 2 * embedding_dim

    def lstm_params(key, input_size, hidden_size):
        k = 1.0 / np.sqrt(hidden_size)
        k0, k1, k2, k3 = jax.random.split(key, 4)
        u = lambda kk, shape: jax.random.uniform(
            kk, shape, jnp.float32, minval=-k, maxval=k)
        return {
            "w_ih": u(k0, (4 * hidden_size, input_size)),
            "w_hh": u(k1, (4 * hidden_size, hidden_size)),
            "b_ih": u(k2, (4 * hidden_size,)),
            "b_hh": u(k3, (4 * hidden_size,)),
        }

    k1, k2 = jax.random.split(key, 2)
    return {
        "rnn1": lstm_params(k1, n_features, hidden_dim),
        "rnn2": lstm_params(k2, hidden_dim, embedding_dim),
    }


def _pack_lstm_params(w_ih, w_hh, b_ih, b_hh, in_pad, h_pad):
    """PyTorch (4H, I)/(4H, H)/(4H,) -> lane-padded (in_pad, 4*h_pad),
    (h_pad, 4*h_pad), (1, 4*h_pad).  Padded rows/columns are zero, so the
    padded hidden lanes stay exactly 0 through the recurrence."""
    fourH, I = w_ih.shape
    H = fourH // 4
    wih_g = jnp.transpose(w_ih.reshape(4, H, I), (0, 2, 1))    # (4, I, H)
    whh_g = jnp.transpose(w_hh.reshape(4, H, H), (0, 2, 1))    # (4, H, H)
    b_g = (b_ih + b_hh).reshape(4, H)

    wih_p = jnp.zeros((4, in_pad, h_pad), jnp.float32).at[:, :I, :H].set(wih_g)
    whh_p = jnp.zeros((4, h_pad, h_pad), jnp.float32).at[:, :H, :H].set(whh_g)
    b_p = jnp.zeros((4, h_pad), jnp.float32).at[:, :H].set(b_g)

    wih_packed = jnp.concatenate(list(wih_p), axis=1)          # (in_pad, 4*h_pad)
    whh_packed = jnp.concatenate(list(whh_p), axis=1)          # (h_pad, 4*h_pad)
    b_packed = b_p.reshape(1, 4 * h_pad)                       # gate-major row
    return wih_packed, whh_packed, b_packed


def pack_encoder_params(params, n_features, embedding_dim):
    hidden_dim = 2 * embedding_dim
    Ip = _round_up(max(n_features, 1), LANE)
    H1p = _round_up(hidden_dim, LANE)
    H2p = _round_up(embedding_dim, LANE)
    w1i, w1h, b1 = _pack_lstm_params(**params["rnn1"], in_pad=Ip, h_pad=H1p)
    w2i, w2h, b2 = _pack_lstm_params(**params["rnn2"], in_pad=H1p, h_pad=H2p)
    return {"w1i": w1i, "w1h": w1h, "b1": b1,
            "w2i": w2i, "w2h": w2h, "b2": b2}


# ----------------------------------------------------------------------------
# Encoder forward: reshape -> fused LSTM(LSTM(x)) kernel -> final hidden
# ----------------------------------------------------------------------------
def encoder_forward(packed, x, seq_len, n_features, embedding_dim):
    hidden_dim = 2 * embedding_dim
    Ip = _round_up(max(n_features, 1), LANE)
    H1p = _round_up(hidden_dim, LANE)
    H2p = _round_up(embedding_dim, LANE)
    T = seq_len

    # Same reshape semantics as the torch module.
    xs = x.reshape(1, seq_len, n_features)[0].astype(jnp.float32)   # (T, n_features)
    x_pad = jnp.zeros((T, Ip), jnp.float32).at[:, :n_features].set(xs)

    kernel = _make_fused_encoder_kernel(T, H1p, H2p)
    out = pl.pallas_call(
        kernel,
        out_shape=jax.ShapeDtypeStruct((1, H2p), jnp.float32),
        in_specs=[pl.BlockSpec(memory_space=pltpu.MemorySpace.VMEM)] * 7,
        out_specs=pl.BlockSpec(memory_space=pltpu.MemorySpace.VMEM),
        scratch_shapes=[
            pltpu.VMEM((T, H1p), jnp.float32),        # layer-1 hidden sequence
            pltpu.VMEM((T, 4 * H1p), jnp.float32),    # layer-1 input projection
            pltpu.VMEM((T, 4 * H2p), jnp.float32),    # layer-2 input projection
        ],
    )(x_pad, packed["w1i"], packed["w1h"], packed["b1"],
      packed["w2i"], packed["w2h"], packed["b2"])

    hidden_n = out[0, :embedding_dim]                 # drop lane padding
    return hidden_n.reshape(n_features, embedding_dim)


# ----------------------------------------------------------------------------
# Pure-JAX reference (for numerics check)
# ----------------------------------------------------------------------------
def _lstm_layer_ref(x, w_ih, w_hh, b_ih, b_hh):
    H = w_hh.shape[1]

    def step(carry, x_t):
        h, c = carry
        gates = x_t @ w_ih.T + h @ w_hh.T + b_ih + b_hh
        i_g = jax.nn.sigmoid(gates[0 * H:1 * H])
        f_g = jax.nn.sigmoid(gates[1 * H:2 * H])
        g_g = jnp.tanh(gates[2 * H:3 * H])
        o_g = jax.nn.sigmoid(gates[3 * H:4 * H])
        c_new = f_g * c + i_g * g_g
        h_new = o_g * jnp.tanh(c_new)
        return (h_new, c_new), h_new

    (_, _), hs = lax.scan(step, (jnp.zeros(H), jnp.zeros(H)), x)
    return hs


def encoder_forward_ref(params, x, seq_len, n_features, embedding_dim):
    xs = x.reshape(1, seq_len, n_features)[0]
    h1 = _lstm_layer_ref(xs, **params["rnn1"])
    h2 = _lstm_layer_ref(h1, **params["rnn2"])
    return h2[-1].reshape(n_features, embedding_dim)


if __name__ == "__main__":
    seq_len, n_features, embedding_dim = 8, 1, 32

    key = jax.random.PRNGKey(0)
    kp, kx = jax.random.split(key)
    params = init_encoder_params(kp, seq_len, n_features, embedding_dim)
    packed = pack_encoder_params(params, n_features, embedding_dim)  # one-time pack
    x = jax.random.normal(kx, (seq_len, n_features), jnp.float32)

    fwd = jax.jit(functools.partial(
        encoder_forward, seq_len=seq_len, n_features=n_features,
        embedding_dim=embedding_dim))
    out = fwd(packed, x)
    jax.block_until_ready(out)

    ref = encoder_forward_ref(params, x, seq_len, n_features, embedding_dim)
    np.testing.assert_allclose(np.asarray(out), np.asarray(ref),
                               rtol=1e-5, atol=1e-5)
    assert out.shape == (n_features, embedding_dim)
    print("KERNEL_OK")
</pallas_src>

<mosaic_0001>
module attributes {stable_mosaic.version = 11 : i64} {
  func.func @kernel(%arg0: memref<8x128xf32, #tpu.memory_space<vmem>>, %arg1: memref<128x512xf32, #tpu.memory_space<vmem>>, %arg2: memref<128x512xf32, #tpu.memory_space<vmem>>, %arg3: memref<1x512xf32, #tpu.memory_space<vmem>>, %arg4: memref<128x512xf32, #tpu.memory_space<vmem>>, %arg5: memref<128x512xf32, #tpu.memory_space<vmem>>, %arg6: memref<1x512xf32, #tpu.memory_space<vmem>>, %arg7: memref<1x128xf32, #tpu.memory_space<vmem>>, %arg8: memref<8x128xf32, #tpu.memory_space<vmem>>, %arg9: memref<8x512xf32, #tpu.memory_space<vmem>>, %arg10: memref<8x512xf32, #tpu.memory_space<vmem>>) attributes {dimension_semantics = [], scalar_prefetch = 0 : i64, scratch_operands = 3 : i64, tpu.core_type = #tpu.core_type<tc>} {
    %c0 = arith.constant 0 : index
    %c0_0 = arith.constant 0 : index
    %0 = vector.load %arg0[%c0, %c0_0] : memref<8x128xf32, #tpu.memory_space<vmem>>, vector<8x128xf32>
    %c0_1 = arith.constant 0 : index
    %c0_2 = arith.constant 0 : index
    %1 = vector.load %arg1[%c0_1, %c0_2] : memref<128x512xf32, #tpu.memory_space<vmem>>, vector<128x512xf32>
    %cst = arith.constant dense<0.000000e+00> : vector<8x512xf32>
    %2 = tpu.matmul %0, %1, %cst {dimension_numbers = #tpu.dot_dimension_numbers<[1], [0], [0], [1], [0, 0, 1, 1], [], []>} : vector<8x128xf32>, vector<128x512xf32>, vector<8x512xf32> -> vector<8x512xf32>
    %c0_3 = arith.constant 0 : index
    %c0_4 = arith.constant 0 : index
    %3 = vector.load %arg3[%c0_3, %c0_4] : memref<1x512xf32, #tpu.memory_space<vmem>>, vector<1x512xf32>
    %4 = vector.broadcast %3 : vector<1x512xf32> to vector<8x512xf32>
    %5 = arith.addf %2, %4 : vector<8x512xf32>
    %c0_5 = arith.constant 0 : index
    %c0_6 = arith.constant 0 : index
    %6 = vector.load %arg9[%c0_5, %c0_6] : memref<8x512xf32, #tpu.memory_space<vmem>>, vector<8x512xf32>
    tpu.vector_store %arg9[%c0_5, %c0_6], %5 {strides = array<i32>} : memref<8x512xf32, #tpu.memory_space<vmem>>, vector<8x512xf32>,
    %c0_7 = arith.constant 0 : index
    %c0_8 = arith.constant 0 : index
    %7 = vector.load %arg2[%c0_7, %c0_8] : memref<128x512xf32, #tpu.memory_space<vmem>>, vector<128x512xf32>
    %cst_9 = arith.constant 0.000000e+00 : f32
    %8 = vector.broadcast %cst_9 : f32 to vector<1x128xf32>
    %cst_10 = arith.constant 0.000000e+00 : f32
    %9 = vector.broadcast %cst_10 : f32 to vector<1x128xf32>
    %c0_i32 = arith.constant 0 : i32
    %10 = arith.index_cast %c0_i32 : i32 to index
    %c0_11 = arith.constant 0 : index
    %11 = vector.load %arg9[%10, %c0_11] : memref<8x512xf32, #tpu.memory_space<vmem>>, vector<1x512xf32>
    %cst_12 = arith.constant dense<0.000000e+00> : vector<1x512xf32>
    %12 = tpu.matmul %8, %7, %cst_12 {dimension_numbers = #tpu.dot_dimension_numbers<[1], [0], [0], [1], [0, 0, 1, 1], [], []>} : vector<1x128xf32>, vector<128x512xf32>, vector<1x512xf32> -> vector<1x512xf32>
    %13 = arith.addf %11, %12 : vector<1x512xf32>
    %14 = arith.negf %13 : vector<1x512xf32>
    %15 = math.exp %14 : vector<1x512xf32>
    %cst_13 = arith.constant 1.000000e+00 : f32
    %16 = vector.broadcast %cst_13 : f32 to vector<1x512xf32>
    %17 = arith.addf %16, %15 : vector<1x512xf32>
    %18 = arith.divf %16, %17 : vector<1x512xf32>
    %19 = math.tanh %13 : vector<1x512xf32>
    %20 = vector.extract_strided_slice %18 {offsets = [0, 0], sizes = [1, 128], strides = [1, 1]} : vector<1x512xf32> to vector<1x128xf32>
    %21 = vector.extract_strided_slice %18 {offsets = [0, 128], sizes = [1, 128], strides = [1, 1]} : vector<1x512xf32> to vector<1x128xf32>
    %22 = vector.extract_strided_slice %19 {offsets = [0, 256], sizes = [1, 128], strides = [1, 1]} : vector<1x512xf32> to vector<1x128xf32>
    %23 = vector.extract_strided_slice %18 {offsets = [0, 384], sizes = [1, 128], strides = [1, 1]} : vector<1x512xf32> to vector<1x128xf32>
    %24 = arith.mulf %21, %9 : vector<1x128xf32>
    %25 = arith.mulf %20, %22 : vector<1x128xf32>
    %26 = arith.addf %24, %25 : vector<1x128xf32>
    %27 = math.tanh %26 : vector<1x128xf32>
    %28 = arith.mulf %23, %27 : vector<1x128xf32>
    %29 = arith.index_cast %c0_i32 : i32 to index
    %c0_14 = arith.constant 0 : index
    %30 = vector.load %arg8[%29, %c0_14] : memref<8x128xf32, #tpu.memory_space<vmem>>, vector<1x128xf32>
    tpu.vector_store %arg8[%29, %c0_14], %28 {strides = array<i32>} : memref<8x128xf32, #tpu.memory_space<vmem>>, vector<1x128xf32>,
    %c1_i32 = arith.constant 1 : i32
    %31 = arith.index_cast %c1_i32 : i32 to index
    %c0_15 = arith.constant 0 : index
    %32 = vector.load %arg9[%31, %c0_15] : memref<8x512xf32, #tpu.memory_space<vmem>>, vector<1x512xf32>
    %cst_16 = arith.constant dense<0.000000e+00> : vector<1x512xf32>
    %33 = tpu.matmul %28, %7, %cst_16 {dimension_numbers = #tpu.dot_dimension_numbers<[1], [0], [0], [1], [0, 0, 1, 1], [], []>} : vector<1x128xf32>, vector<128x512xf32>, vector<1x512xf32> -> vector<1x512xf32>
    %34 = arith.addf %32, %33 : vector<1x512xf32>
    %35 = arith.negf %34 : vector<1x512xf32>
    %36 = math.exp %35 : vector<1x512xf32>
    %cst_17 = arith.constant 1.000000e+00 : f32
    %37 = vector.broadcast %cst_17 : f32 to vector<1x512xf32>
    %38 = arith.addf %37, %36 : vector<1x512xf32>
    %39 = arith.divf %37, %38 : vector<1x512xf32>
    %40 = math.tanh %34 : vector<1x512xf32>
    %41 = vector.extract_strided_slice %39 {offsets = [0, 0], sizes = [1, 128], strides = [1, 1]} : vector<1x512xf32> to vector<1x128xf32>
    %42 = vector.extract_strided_slice %39 {offsets = [0, 128], sizes = [1, 128], strides = [1, 1]} : vector<1x512xf32> to vector<1x128xf32>
    %43 = vector.extract_strided_slice %40 {offsets = [0, 256], sizes = [1, 128], strides = [1, 1]} : vector<1x512xf32> to vector<1x128xf32>
    %44 = vector.extract_strided_slice %39 {offsets = [0, 384], sizes = [1, 128], strides = [1, 1]} : vector<1x512xf32> to vector<1x128xf32>
    %45 = arith.mulf %42, %26 : vector<1x128xf32>
    %46 = arith.mulf %41, %43 : vector<1x128xf32>
    %47 = arith.addf %45, %46 : vector<1x128xf32>
    %48 = math.tanh %47 : vector<1x128xf32>
    %49 = arith.mulf %44, %48 : vector<1x128xf32>
    %50 = arith.index_cast %c1_i32 : i32 to index
    %c0_18 = arith.constant 0 : index
    %51 = vector.load %arg8[%50, %c0_18] : memref<8x128xf32, #tpu.memory_space<vmem>>, vector<1x128xf32>
    tpu.vector_store %arg8[%50, %c0_18], %49 {strides = array<i32>} : memref<8x128xf32, #tpu.memory_space<vmem>>, vector<1x128xf32>,
    %c2_i32 = arith.constant 2 : i32
    %52 = arith.index_cast %c2_i32 : i32 to index
    %c0_19 = arith.constant 0 : index
    %53 = vector.load %arg9[%52, %c0_19] : memref<8x512xf32, #tpu.memory_space<vmem>>, vector<1x512xf32>
    %cst_20 = arith.constant dense<0.000000e+00> : vector<1x512xf32>
    %54 = tpu.matmul %49, %7, %cst_20 {dimension_numbers = #tpu.dot_dimension_numbers<[1], [0], [0], [1], [0, 0, 1, 1], [], []>} : vector<1x128xf32>, vector<128x512xf32>, vector<1x512xf32> -> vector<1x512xf32>
    %55 = arith.addf %53, %54 : vector<1x512xf32>
    %56 = arith.negf %55 : vector<1x512xf32>
    %57 = math.exp %56 : vector<1x512xf32>
    %cst_21 = arith.constant 1.000000e+00 : f32
    %58 = vector.broadcast %cst_21 : f32 to vector<1x512xf32>
    %59 = arith.addf %58, %57 : vector<1x512xf32>
    %60 = arith.divf %58, %59 : vector<1x512xf32>
    %61 = math.tanh %55 : vector<1x512xf32>
    %62 = vector.extract_strided_slice %60 {offsets = [0, 0], sizes = [1, 128], strides = [1, 1]} : vector<1x512xf32> to vector<1x128xf32>
    %63 = vector.extract_strided_slice %60 {offsets = [0, 128], sizes = [1, 128], strides = [1, 1]} : vector<1x512xf32> to vector<1x128xf32>
    %64 = vector.extract_strided_slice %61 {offsets = [0, 256], sizes = [1, 128], strides = [1, 1]} : vector<1x512xf32> to vector<1x128xf32>
    %65 = vector.extract_strided_slice %60 {offsets = [0, 384], sizes = [1, 128], strides = [1, 1]} : vector<1x512xf32> to vector<1x128xf32>
    %66 = arith.mulf %63, %47 : vector<1x128xf32>
    %67 = arith.mulf %62, %64 : vector<1x128xf32>
    %68 = arith.addf %66, %67 : vector<1x128xf32>
    %69 = math.tanh %68 : vector<1x128xf32>
    %70 = arith.mulf %65, %69 : vector<1x128xf32>
    %71 = arith.index_cast %c2_i32 : i32 to index
    %c0_22 = arith.constant 0 : index
    %72 = vector.load %arg8[%71, %c0_22] : memref<8x128xf32, #tpu.memory_space<vmem>>, vector<1x128xf32>
    tpu.vector_store %arg8[%71, %c0_22], %70 {strides = array<i32>} : memref<8x128xf32, #tpu.memory_space<vmem>>, vector<1x128xf32>,
    %c3_i32 = arith.constant 3 : i32
    %73 = arith.index_cast %c3_i32 : i32 to index
    %c0_23 = arith.constant 0 : index
    %74 = vector.load %arg9[%73, %c0_23] : memref<8x512xf32, #tpu.memory_space<vmem>>, vector<1x512xf32>
    %cst_24 = arith.constant dense<0.000000e+00> : vector<1x512xf32>
    %75 = tpu.matmul %70, %7, %cst_24 {dimension_numbers = #tpu.dot_dimension_numbers<[1], [0], [0], [1], [0, 0, 1, 1], [], []>} : vector<1x128xf32>, vector<128x512xf32>, vector<1x512xf32> -> vector<1x512xf32>
    %76 = arith.addf %74, %75 : vector<1x512xf32>
    %77 = arith.negf %76 : vector<1x512xf32>
    %78 = math.exp %77 : vector<1x512xf32>
    %cst_25 = arith.constant 1.000000e+00 : f32
    %79 = vector.broadcast %cst_25 : f32 to vector<1x512xf32>
    %80 = arith.addf %79, %78 : vector<1x512xf32>
    %81 = arith.divf %79, %80 : vector<1x512xf32>
    %82 = math.tanh %76 : vector<1x512xf32>
    %83 = vector.extract_strided_slice %81 {offsets = [0, 0], sizes = [1, 128], strides = [1, 1]} : vector<1x512xf32> to vector<1x128xf32>
    %84 = vector.extract_strided_slice %81 {offsets = [0, 128], sizes = [1, 128], strides = [1, 1]} : vector<1x512xf32> to vector<1x128xf32>
    %85 = vector.extract_strided_slice %82 {offsets = [0, 256], sizes = [1, 128], strides = [1, 1]} : vector<1x512xf32> to vector<1x128xf32>
    %86 = vector.extract_strided_slice %81 {offsets = [0, 384], sizes = [1, 128], strides = [1, 1]} : vector<1x512xf32> to vector<1x128xf32>
    %87 = arith.mulf %84, %68 : vector<1x128xf32>
    %88 = arith.mulf %83, %85 : vector<1x128xf32>
    %89 = arith.addf %87, %88 : vector<1x128xf32>
    %90 = math.tanh %89 : vector<1x128xf32>
    %91 = arith.mulf %86, %90 : vector<1x128xf32>
    %92 = arith.index_cast %c3_i32 : i32 to index
    %c0_26 = arith.constant 0 : index
    %93 = vector.load %arg8[%92, %c0_26] : memref<8x128xf32, #tpu.memory_space<vmem>>, vector<1x128xf32>
    tpu.vector_store %arg8[%92, %c0_26], %91 {strides = array<i32>} : memref<8x128xf32, #tpu.memory_space<vmem>>, vector<1x128xf32>,
    %c4_i32 = arith.constant 4 : i32
    %94 = arith.index_cast %c4_i32 : i32 to index
    %c0_27 = arith.constant 0 : index
    %95 = vector.load %arg9[%94, %c0_27] : memref<8x512xf32, #tpu.memory_space<vmem>>, vector<1x512xf32>
    %cst_28 = arith.constant dense<0.000000e+00> : vector<1x512xf32>
    %96 = tpu.matmul %91, %7, %cst_28 {dimension_numbers = #tpu.dot_dimension_numbers<[1], [0], [0], [1], [0, 0, 1, 1], [], []>} : vector<1x128xf32>, vector<128x512xf32>, vector<1x512xf32> -> vector<1x512xf32>
    %97 = arith.addf %95, %96 : vector<1x512xf32>
    %98 = arith.negf %97 : vector<1x512xf32>
    %99 = math.exp %98 : vector<1x512xf32>
    %cst_29 = arith.constant 1.000000e+00 : f32
    %100 = vector.broadcast %cst_29 : f32 to vector<1x512xf32>
    %101 = arith.addf %100, %99 : vector<1x512xf32>
    %102 = arith.divf %100, %101 : vector<1x512xf32>
    %103 = math.tanh %97 : vector<1x512xf32>
    %104 = vector.extract_strided_slice %102 {offsets = [0, 0], sizes = [1, 128], strides = [1, 1]} : vector<1x512xf32> to vector<1x128xf32>
    %105 = vector.extract_strided_slice %102 {offsets = [0, 128], sizes = [1, 128], strides = [1, 1]} : vector<1x512xf32> to vector<1x128xf32>
    %106 = vector.extract_strided_slice %103 {offsets = [0, 256], sizes = [1, 128], strides = [1, 1]} : vector<1x512xf32> to vector<1x128xf32>
    %107 = vector.extract_strided_slice %102 {offsets = [0, 384], sizes = [1, 128], strides = [1, 1]} : vector<1x512xf32> to vector<1x128xf32>
    %108 = arith.mulf %105, %89 : vector<1x128xf32>
    %109 = arith.mulf %104, %106 : vector<1x128xf32>
    %110 = arith.addf %108, %109 : vector<1x128xf32>
    %111 = math.tanh %110 : vector<1x128xf32>
    %112 = arith.mulf %107, %111 : vector<1x128xf32>
    %113 = arith.index_cast %c4_i32 : i32 to index
    %c0_30 = arith.constant 0 : index
    %114 = vector.load %arg8[%113, %c0_30] : memref<8x128xf32, #tpu.memory_space<vmem>>, vector<1x128xf32>
    tpu.vector_store %arg8[%113, %c0_30], %112 {strides = array<i32>} : memref<8x128xf32, #tpu.memory_space<vmem>>, vector<1x128xf32>,
    %c5_i32 = arith.constant 5 : i32
    %115 = arith.index_cast %c5_i32 : i32 to index
    %c0_31 = arith.constant 0 : index
    %116 = vector.load %arg9[%115, %c0_31] : memref<8x512xf32, #tpu.memory_space<vmem>>, vector<1x512xf32>
    %cst_32 = arith.constant dense<0.000000e+00> : vector<1x512xf32>
    %117 = tpu.matmul %112, %7, %cst_32 {dimension_numbers = #tpu.dot_dimension_numbers<[1], [0], [0], [1], [0, 0, 1, 1], [], []>} : vector<1x128xf32>, vector<128x512xf32>, vector<1x512xf32> -> vector<1x512xf32>
    %118 = arith.addf %116, %117 : vector<1x512xf32>
    %119 = arith.negf %118 : vector<1x512xf32>
    %120 = math.exp %119 : vector<1x512xf32>
    %cst_33 = arith.constant 1.000000e+00 : f32
    %121 = vector.broadcast %cst_33 : f32 to vector<1x512xf32>
    %122 = arith.addf %121, %120 : vector<1x512xf32>
    %123 = arith.divf %121, %122 : vector<1x512xf32>
    %124 = math.tanh %118 : vector<1x512xf32>
    %125 = vector.extract_strided_slice %123 {offsets = [0, 0], sizes = [1, 128], strides = [1, 1]} : vector<1x512xf32> to vector<1x128xf32>
    %126 = vector.extract_strided_slice %123 {offsets = [0, 128], sizes = [1, 128], strides = [1, 1]} : vector<1x512xf32> to vector<1x128xf32>
    %127 = vector.extract_strided_slice %124 {offsets = [0, 256], sizes = [1, 128], strides = [1, 1]} : vector<1x512xf32> to vector<1x128xf32>
    %128 = vector.extract_strided_slice %123 {offsets = [0, 384], sizes = [1, 128], strides = [1, 1]} : vector<1x512xf32> to vector<1x128xf32>
    %129 = arith.mulf %126, %110 : vector<1x128xf32>
    %130 = arith.mulf %125, %127 : vector<1x128xf32>
    %131 = arith.addf %129, %130 : vector<1x128xf32>
    %132 = math.tanh %131 : vector<1x128xf32>
    %133 = arith.mulf %128, %132 : vector<1x128xf32>
    %134 = arith.index_cast %c5_i32 : i32 to index
    %c0_34 = arith.constant 0 : index
    %135 = vector.load %arg8[%134, %c0_34] : memref<8x128xf32, #tpu.memory_space<vmem>>, vector<1x128xf32>
    tpu.vector_store %arg8[%134, %c0_34], %133 {strides = array<i32>} : memref<8x128xf32, #tpu.memory_space<vmem>>, vector<1x128xf32>,
    %c6_i32 = arith.constant 6 : i32
    %136 = arith.index_cast %c6_i32 : i32 to index
    %c0_35 = arith.constant 0 : index
    %137 = vector.load %arg9[%136, %c0_35] : memref<8x512xf32, #tpu.memory_space<vmem>>, vector<1x512xf32>
    %cst_36 = arith.constant dense<0.000000e+00> : vector<1x512xf32>
    %138 = tpu.matmul %133, %7, %cst_36 {dimension_numbers = #tpu.dot_dimension_numbers<[1], [0], [0], [1], [0, 0, 1, 1], [], []>} : vector<1x128xf32>, vector<128x512xf32>, vector<1x512xf32> -> vector<1x512xf32>
    %139 = arith.addf %137, %138 : vector<1x512xf32>
    %140 = arith.negf %139 : vector<1x512xf32>
    %141 = math.exp %140 : vector<1x512xf32>
    %cst_37 = arith.constant 1.000000e+00 : f32
    %142 = vector.broadcast %cst_37 : f32 to vector<1x512xf32>
    %143 = arith.addf %142, %141 : vector<1x512xf32>
    %144 = arith.divf %142, %143 : vector<1x512xf32>
    %145 = math.tanh %139 : vector<1x512xf32>
    %146 = vector.extract_strided_slice %144 {offsets = [0, 0], sizes = [1, 128], strides = [1, 1]} : vector<1x512xf32> to vector<1x128xf32>
    %147 = vector.extract_strided_slice %144 {offsets = [0, 128], sizes = [1, 128], strides = [1, 1]} : vector<1x512xf32> to vector<1x128xf32>
    %148 = vector.extract_strided_slice %145 {offsets = [0, 256], sizes = [1, 128], strides = [1, 1]} : vector<1x512xf32> to vector<1x128xf32>
    %149 = vector.extract_strided_slice %144 {offsets = [0, 384], sizes = [1, 128], strides = [1, 1]} : vector<1x512xf32> to vector<1x128xf32>
    %150 = arith.mulf %147, %131 : vector<1x128xf32>
    %151 = arith.mulf %146, %148 : vector<1x128xf32>
    %152 = arith.addf %150, %151 : vector<1x128xf32>
    %153 = math.tanh %152 : vector<1x128xf32>
    %154 = arith.mulf %149, %153 : vector<1x128xf32>
    %155 = arith.index_cast %c6_i32 : i32 to index
    %c0_38 = arith.constant 0 : index
    %156 = vector.load %arg8[%155, %c0_38] : memref<8x128xf32, #tpu.memory_space<vmem>>, vector<1x128xf32>
    tpu.vector_store %arg8[%155, %c0_38], %154 {strides = array<i32>} : memref<8x128xf32, #tpu.memory_space<vmem>>, vector<1x128xf32>,
    %c7_i32 = arith.constant 7 : i32
    %157 = arith.index_cast %c7_i32 : i32 to index
    %c0_39 = arith.constant 0 : index
    %158 = vector.load %arg9[%157, %c0_39] : memref<8x512xf32, #tpu.memory_space<vmem>>, vector<1x512xf32>
    %cst_40 = arith.constant dense<0.000000e+00> : vector<1x512xf32>
    %159 = tpu.matmul %154, %7, %cst_40 {dimension_numbers = #tpu.dot_dimension_numbers<[1], [0], [0], [1], [0, 0, 1, 1], [], []>} : vector<1x128xf32>, vector<128x512xf32>, vector<1x512xf32> -> vector<1x512xf32>
    %160 = arith.addf %158, %159 : vector<1x512xf32>
    %161 = arith.negf %160 : vector<1x512xf32>
    %162 = math.exp %161 : vector<1x512xf32>
    %cst_41 = arith.constant 1.000000e+00 : f32
    %163 = vector.broadcast %cst_41 : f32 to vector<1x512xf32>
    %164 = arith.addf %163, %162 : vector<1x512xf32>
    %165 = arith.divf %163, %164 : vector<1x512xf32>
    %166 = math.tanh %160 : vector<1x512xf32>
    %167 = vector.extract_strided_slice %165 {offsets = [0, 0], sizes = [1, 128], strides = [1, 1]} : vector<1x512xf32> to vector<1x128xf32>
    %168 = vector.extract_strided_slice %165 {offsets = [0, 128], sizes = [1, 128], strides = [1, 1]} : vector<1x512xf32> to vector<1x128xf32>
    %169 = vector.extract_strided_slice %166 {offsets = [0, 256], sizes = [1, 128], strides = [1, 1]} : vector<1x512xf32> to vector<1x128xf32>
    %170 = vector.extract_strided_slice %165 {offsets = [0, 384], sizes = [1, 128], strides = [1, 1]} : vector<1x512xf32> to vector<1x128xf32>
    %171 = arith.mulf %168, %152 : vector<1x128xf32>
    %172 = arith.mulf %167, %169 : vector<1x128xf32>
    %173 = arith.addf %171, %172 : vector<1x128xf32>
    %174 = math.tanh %173 : vector<1x128xf32>
    %175 = arith.mulf %170, %174 : vector<1x128xf32>
    %176 = arith.index_cast %c7_i32 : i32 to index
    %c0_42 = arith.constant 0 : index
    %177 = vector.load %arg8[%176, %c0_42] : memref<8x128xf32, #tpu.memory_space<vmem>>, vector<1x128xf32>
    tpu.vector_store %arg8[%176, %c0_42], %175 {strides = array<i32>} : memref<8x128xf32, #tpu.memory_space<vmem>>, vector<1x128xf32>,
    %c8_i32 = arith.constant 8 : i32
    %c0_43 = arith.constant 0 : index
    %c0_44 = arith.constant 0 : index
    %178 = vector.load %arg8[%c0_43, %c0_44] : memref<8x128xf32, #tpu.memory_space<vmem>>, vector<8x128xf32>
    %c0_45 = arith.constant 0 : index
    %c0_46 = arith.constant 0 : index
    %179 = vector.load %arg4[%c0_45, %c0_46] : memref<128x512xf32, #tpu.memory_space<vmem>>, vector<128x512xf32>
    %cst_47 = arith.constant dense<0.000000e+00> : vector<8x512xf32>
    %180 = tpu.matmul %178, %179, %cst_47 {dimension_numbers = #tpu.dot_dimension_numbers<[1], [0], [0], [1], [0, 0, 1, 1], [], []>} : vector<8x128xf32>, vector<128x512xf32>, vector<8x512xf32> -> vector<8x512xf32>
    %c0_48 = arith.constant 0 : index
    %c0_49 = arith.constant 0 : index
    %181 = vector.load %arg6[%c0_48, %c0_49] : memref<1x512xf32, #tpu.memory_space<vmem>>, vector<1x512xf32>
    %182 = vector.broadcast %181 : vector<1x512xf32> to vector<8x512xf32>
    %183 = arith.addf %180, %182 : vector<8x512xf32>
    %c0_50 = arith.constant 0 : index
    %c0_51 = arith.constant 0 : index
    %184 = vector.load %arg10[%c0_50, %c0_51] : memref<8x512xf32, #tpu.memory_space<vmem>>, vector<8x512xf32>
    tpu.vector_store %arg10[%c0_50, %c0_51], %183 {strides = array<i32>} : memref<8x512xf32, #tpu.memory_space<vmem>>, vector<8x512xf32>,
    %c0_52 = arith.constant 0 : index
    %c0_53 = arith.constant 0 : index
    %185 = vector.load %arg5[%c0_52, %c0_53] : memref<128x512xf32, #tpu.memory_space<vmem>>, vector<128x512xf32>
    %cst_54 = arith.constant 0.000000e+00 : f32
    %186 = vector.broadcast %cst_54 : f32 to vector<1x128xf32>
    %cst_55 = arith.constant 0.000000e+00 : f32
    %187 = vector.broadcast %cst_55 : f32 to vector<1x128xf32>
    %c0_i32_56 = arith.constant 0 : i32
    %188 = arith.index_cast %c0_i32_56 : i32 to index
    %c0_57 = arith.constant 0 : index
    %189 = vector.load %arg10[%188, %c0_57] : memref<8x512xf32, #tpu.memory_space<vmem>>, vector<1x512xf32>
    %cst_58 = arith.constant dense<0.000000e+00> : vector<1x512xf32>
    %190 = tpu.matmul %186, %185, %cst_58 {dimension_numbers = #tpu.dot_dimension_numbers<[1], [0], [0], [1], [0, 0, 1, 1], [], []>} : vector<1x128xf32>, vector<128x512xf32>, vector<1x512xf32> -> vector<1x512xf32>
    %191 = arith.addf %189, %190 : vector<1x512xf32>
    %192 = arith.negf %191 : vector<1x512xf32>
    %193 = math.exp %192 : vector<1x512xf32>
    %cst_59 = arith.constant 1.000000e+00 : f32
    %194 = vector.broadcast %cst_59 : f32 to vector<1x512xf32>
    %195 = arith.addf %194, %193 : vector<1x512xf32>
    %196 = arith.divf %194, %195 : vector<1x512xf32>
    %197 = math.tanh %191 : vector<1x512xf32>
    %198 = vector.extract_strided_slice %196 {offsets = [0, 0], sizes = [1, 128], strides = [1, 1]} : vector<1x512xf32> to vector<1x128xf32>
    %199 = vector.extract_strided_slice %196 {offsets = [0, 128], sizes = [1, 128], strides = [1, 1]} : vector<1x512xf32> to vector<1x128xf32>
    %200 = vector.extract_strided_slice %197 {offsets = [0, 256], sizes = [1, 128], strides = [1, 1]} : vector<1x512xf32> to vector<1x128xf32>
    %201 = vector.extract_strided_slice %196 {offsets = [0, 384], sizes = [1, 128], strides = [1, 1]} : vector<1x512xf32> to vector<1x128xf32>
    %202 = arith.mulf %199, %187 : vector<1x128xf32>
    %203 = arith.mulf %198, %200 : vector<1x128xf32>
    %204 = arith.addf %202, %203 : vector<1x128xf32>
    %205 = math.tanh %204 : vector<1x128xf32>
    %206 = arith.mulf %201, %205 : vector<1x128xf32>
    %c1_i32_60 = arith.constant 1 : i32
    %207 = arith.index_cast %c1_i32_60 : i32 to index
    %c0_61 = arith.constant 0 : index
    %208 = vector.load %arg10[%207, %c0_61] : memref<8x512xf32, #tpu.memory_space<vmem>>, vector<1x512xf32>
    %cst_62 = arith.constant dense<0.000000e+00> : vector<1x512xf32>
    %209 = tpu.matmul %206, %185, %cst_62 {dimension_numbers = #tpu.dot_dimension_numbers<[1], [0], [0], [1], [0, 0, 1, 1], [], []>} : vector<1x128xf32>, vector<128x512xf32>, vector<1x512xf32> -> vector<1x512xf32>
    %210 = arith.addf %208, %209 : vector<1x512xf32>
    %211 = arith.negf %210 : vector<1x512xf32>
    %212 = math.exp %211 : vector<1x512xf32>
    %cst_63 = arith.constant 1.000000e+00 : f32
    %213 = vector.broadcast %cst_63 : f32 to vector<1x512xf32>
    %214 = arith.addf %213, %212 : vector<1x512xf32>
    %215 = arith.divf %213, %214 : vector<1x512xf32>
    %216 = math.tanh %210 : vector<1x512xf32>
    %217 = vector.extract_strided_slice %215 {offsets = [0, 0], sizes = [1, 128], strides = [1, 1]} : vector<1x512xf32> to vector<1x128xf32>
    %218 = vector.extract_strided_slice %215 {offsets = [0, 128], sizes = [1, 128], strides = [1, 1]} : vector<1x512xf32> to vector<1x128xf32>
    %219 = vector.extract_strided_slice %216 {offsets = [0, 256], sizes = [1, 128], strides = [1, 1]} : vector<1x512xf32> to vector<1x128xf32>
    %220 = vector.extract_strided_slice %215 {offsets = [0, 384], sizes = [1, 128], strides = [1, 1]} : vector<1x512xf32> to vector<1x128xf32>
    %221 = arith.mulf %218, %204 : vector<1x128xf32>
    %222 = arith.mulf %217, %219 : vector<1x128xf32>
    %223 = arith.addf %221, %222 : vector<1x128xf32>
    %224 = math.tanh %223 : vector<1x128xf32>
    %225 = arith.mulf %220, %224 : vector<1x128xf32>
    %c2_i32_64 = arith.constant 2 : i32
    %226 = arith.index_cast %c2_i32_64 : i32 to index
    %c0_65 = arith.constant 0 : index
    %227 = vector.load %arg10[%226, %c0_65] : memref<8x512xf32, #tpu.memory_space<vmem>>, vector<1x512xf32>
    %cst_66 = arith.constant dense<0.000000e+00> : vector<1x512xf32>
    %228 = tpu.matmul %225, %185, %cst_66 {dimension_numbers = #tpu.dot_dimension_numbers<[1], [0], [0], [1], [0, 0, 1, 1], [], []>} : vector<1x128xf32>, vector<128x512xf32>, vector<1x512xf32> -> vector<1x512xf32>
    %229 = arith.addf %227, %228 : vector<1x512xf32>
    %230 = arith.negf %229 : vector<1x512xf32>
    %231 = math.exp %230 : vector<1x512xf32>
    %cst_67 = arith.constant 1.000000e+00 : f32
    %232 = vector.broadcast %cst_67 : f32 to vector<1x512xf32>
    %233 = arith.addf %232, %231 : vector<1x512xf32>
    %234 = arith.divf %232, %233 : vector<1x512xf32>
    %235 = math.tanh %229 : vector<1x512xf32>
    %236 = vector.extract_strided_slice %234 {offsets = [0, 0], sizes = [1, 128], strides = [1, 1]} : vector<1x512xf32> to vector<1x128xf32>
    %237 = vector.extract_strided_slice %234 {offsets = [0, 128], sizes = [1, 128], strides = [1, 1]} : vector<1x512xf32> to vector<1x128xf32>
    %238 = vector.extract_strided_slice %235 {offsets = [0, 256], sizes = [1, 128], strides = [1, 1]} : vector<1x512xf32> to vector<1x128xf32>
    %239 = vector.extract_strided_slice %234 {offsets = [0, 384], sizes = [1, 128], strides = [1, 1]} : vector<1x512xf32> to vector<1x128xf32>
    %240 = arith.mulf %237, %223 : vector<1x128xf32>
    %241 = arith.mulf %236, %238 : vector<1x128xf32>
    %242 = arith.addf %240, %241 : vector<1x128xf32>
    %243 = math.tanh %242 : vector<1x128xf32>
    %244 = arith.mulf %239, %243 : vector<1x128xf32>
    %c3_i32_68 = arith.constant 3 : i32
    %245 = arith.index_cast %c3_i32_68 : i32 to index
    %c0_69 = arith.constant 0 : index
    %246 = vector.load %arg10[%245, %c0_69] : memref<8x512xf32, #tpu.memory_space<vmem>>, vector<1x512xf32>
    %cst_70 = arith.constant dense<0.000000e+00> : vector<1x512xf32>
    %247 = tpu.matmul %244, %185, %cst_70 {dimension_numbers = #tpu.dot_dimension_numbers<[1], [0], [0], [1], [0, 0, 1, 1], [], []>} : vector<1x128xf32>, vector<128x512xf32>, vector<1x512xf32> -> vector<1x512xf32>
    %248 = arith.addf %246, %247 : vector<1x512xf32>
    %249 = arith.negf %248 : vector<1x512xf32>
    %250 = math.exp %249 : vector<1x512xf32>
    %cst_71 = arith.constant 1.000000e+00 : f32
    %251 = vector.broadcast %cst_71 : f32 to vector<1x512xf32>
    %252 = arith.addf %251, %250 : vector<1x512xf32>
    %253 = arith.divf %251, %252 : vector<1x512xf32>
    %254 = math.tanh %248 : vector<1x512xf32>
    %255 = vector.extract_strided_slice %253 {offsets = [0, 0], sizes = [1, 128], strides = [1, 1]} : vector<1x512xf32> to vector<1x128xf32>
    %256 = vector.extract_strided_slice %253 {offsets = [0, 128], sizes = [1, 128], strides = [1, 1]} : vector<1x512xf32> to vector<1x128xf32>
    %257 = vector.extract_strided_slice %254 {offsets = [0, 256], sizes = [1, 128], strides = [1, 1]} : vector<1x512xf32> to vector<1x128xf32>
    %258 = vector.extract_strided_slice %253 {offsets = [0, 384], sizes = [1, 128], strides = [1, 1]} : vector<1x512xf32> to vector<1x128xf32>
    %259 = arith.mulf %256, %242 : vector<1x128xf32>
    %260 = arith.mulf %255, %257 : vector<1x128xf32>
    %261 = arith.addf %259, %260 : vector<1x128xf32>
    %262 = math.tanh %261 : vector<1x128xf32>
    %263 = arith.mulf %258, %262 : vector<1x128xf32>
    %c4_i32_72 = arith.constant 4 : i32
    %264 = arith.index_cast %c4_i32_72 : i32 to index
    %c0_73 = arith.constant 0 : index
    %265 = vector.load %arg10[%264, %c0_73] : memref<8x512xf32, #tpu.memory_space<vmem>>, vector<1x512xf32>
    %cst_74 = arith.constant dense<0.000000e+00> : vector<1x512xf32>
    %266 = tpu.matmul %263, %185, %cst_74 {dimension_numbers = #tpu.dot_dimension_numbers<[1], [0], [0], [1], [0, 0, 1, 1], [], []>} : vector<1x128xf32>, vector<128x512xf32>, vector<1x512xf32> -> vector<1x512xf32>
    %267 = arith.addf %265, %266 : vector<1x512xf32>
    %268 = arith.negf %267 : vector<1x512xf32>
    %269 = math.exp %268 : vector<1x512xf32>
    %cst_75 = arith.constant 1.000000e+00 : f32
    %270 = vector.broadcast %cst_75 : f32 to vector<1x512xf32>
    %271 = arith.addf %270, %269 : vector<1x512xf32>
    %272 = arith.divf %270, %271 : vector<1x512xf32>
    %273 = math.tanh %267 : vector<1x512xf32>
    %274 = vector.extract_strided_slice %272 {offsets = [0, 0], sizes = [1, 128], strides = [1, 1]} : vector<1x512xf32> to vector<1x128xf32>
    %275 = vector.extract_strided_slice %272 {offsets = [0, 128], sizes = [1, 128], strides = [1, 1]} : vector<1x512xf32> to vector<1x128xf32>
    %276 = vector.extract_strided_slice %273 {offsets = [0, 256], sizes = [1, 128], strides = [1, 1]} : vector<1x512xf32> to vector<1x128xf32>
    %277 = vector.extract_strided_slice %272 {offsets = [0, 384], sizes = [1, 128], strides = [1, 1]} : vector<1x512xf32> to vector<1x128xf32>
    %278 = arith.mulf %275, %261 : vector<1x128xf32>
    %279 = arith.mulf %274, %276 : vector<1x128xf32>
    %280 = arith.addf %278, %279 : vector<1x128xf32>
    %281 = math.tanh %280 : vector<1x128xf32>
    %282 = arith.mulf %277, %281 : vector<1x128xf32>
    %c5_i32_76 = arith.constant 5 : i32
    %283 = arith.index_cast %c5_i32_76 : i32 to index
    %c0_77 = arith.constant 0 : index
    %284 = vector.load %arg10[%283, %c0_77] : memref<8x512xf32, #tpu.memory_space<vmem>>, vector<1x512xf32>
    %cst_78 = arith.constant dense<0.000000e+00> : vector<1x512xf32>
    %285 = tpu.matmul %282, %185, %cst_78 {dimension_numbers = #tpu.dot_dimension_numbers<[1], [0], [0], [1], [0, 0, 1, 1], [], []>} : vector<1x128xf32>, vector<128x512xf32>, vector<1x512xf32> -> vector<1x512xf32>
    %286 = arith.addf %284, %285 : vector<1x512xf32>
    %287 = arith.negf %286 : vector<1x512xf32>
    %288 = math.exp %287 : vector<1x512xf32>
    %cst_79 = arith.constant 1.000000e+00 : f32
    %289 = vector.broadcast %cst_79 : f32 to vector<1x512xf32>
    %290 = arith.addf %289, %288 : vector<1x512xf32>
    %291 = arith.divf %289, %290 : vector<1x512xf32>
    %292 = math.tanh %286 : vector<1x512xf32>
    %293 = vector.extract_strided_slice %291 {offsets = [0, 0], sizes = [1, 128], strides = [1, 1]} : vector<1x512xf32> to vector<1x128xf32>
    %294 = vector.extract_strided_slice %291 {offsets = [0, 128], sizes = [1, 128], strides = [1, 1]} : vector<1x512xf32> to vector<1x128xf32>
    %295 = vector.extract_strided_slice %292 {offsets = [0, 256], sizes = [1, 128], strides = [1, 1]} : vector<1x512xf32> to vector<1x128xf32>
    %296 = vector.extract_strided_slice %291 {offsets = [0, 384], sizes = [1, 128], strides = [1, 1]} : vector<1x512xf32> to vector<1x128xf32>
    %297 = arith.mulf %294, %280 : vector<1x128xf32>
    %298 = arith.mulf %293, %295 : vector<1x128xf32>
    %299 = arith.addf %297, %298 : vector<1x128xf32>
    %300 = math.tanh %299 : vector<1x128xf32>
    %301 = arith.mulf %296, %300 : vector<1x128xf32>
    %c6_i32_80 = arith.constant 6 : i32
    %302 = arith.index_cast %c6_i32_80 : i32 to index
    %c0_81 = arith.constant 0 : index
    %303 = vector.load %arg10[%302, %c0_81] : memref<8x512xf32, #tpu.memory_space<vmem>>, vector<1x512xf32>
    %cst_82 = arith.constant dense<0.000000e+00> : vector<1x512xf32>
    %304 = tpu.matmul %301, %185, %cst_82 {dimension_numbers = #tpu.dot_dimension_numbers<[1], [0], [0], [1], [0, 0, 1, 1], [], []>} : vector<1x128xf32>, vector<128x512xf32>, vector<1x512xf32> -> vector<1x512xf32>
    %305 = arith.addf %303, %304 : vector<1x512xf32>
    %306 = arith.negf %305 : vector<1x512xf32>
    %307 = math.exp %306 : vector<1x512xf32>
    %cst_83 = arith.constant 1.000000e+00 : f32
    %308 = vector.broadcast %cst_83 : f32 to vector<1x512xf32>
    %309 = arith.addf %308, %307 : vector<1x512xf32>
    %310 = arith.divf %308, %309 : vector<1x512xf32>
    %311 = math.tanh %305 : vector<1x512xf32>
    %312 = vector.extract_strided_slice %310 {offsets = [0, 0], sizes = [1, 128], strides = [1, 1]} : vector<1x512xf32> to vector<1x128xf32>
    %313 = vector.extract_strided_slice %310 {offsets = [0, 128], sizes = [1, 128], strides = [1, 1]} : vector<1x512xf32> to vector<1x128xf32>
    %314 = vector.extract_strided_slice %311 {offsets = [0, 256], sizes = [1, 128], strides = [1, 1]} : vector<1x512xf32> to vector<1x128xf32>
    %315 = vector.extract_strided_slice %310 {offsets = [0, 384], sizes = [1, 128], strides = [1, 1]} : vector<1x512xf32> to vector<1x128xf32>
    %316 = arith.mulf %313, %299 : vector<1x128xf32>
    %317 = arith.mulf %312, %314 : vector<1x128xf32>
    %318 = arith.addf %316, %317 : vector<1x128xf32>
    %319 = math.tanh %318 : vector<1x128xf32>
    %320 = arith.mulf %315, %319 : vector<1x128xf32>
    %c7_i32_84 = arith.constant 7 : i32
    %321 = arith.index_cast %c7_i32_84 : i32 to index
    %c0_85 = arith.constant 0 : index
    %322 = vector.load %arg10[%321, %c0_85] : memref<8x512xf32, #tpu.memory_space<vmem>>, vector<1x512xf32>
    %cst_86 = arith.constant dense<0.000000e+00> : vector<1x512xf32>
    %323 = tpu.matmul %320, %185, %cst_86 {dimension_numbers = #tpu.dot_dimension_numbers<[1], [0], [0], [1], [0, 0, 1, 1], [], []>} : vector<1x128xf32>, vector<128x512xf32>, vector<1x512xf32> -> vector<1x512xf32>
    %324 = arith.addf %322, %323 : vector<1x512xf32>
    %325 = arith.negf %324 : vector<1x512xf32>
    %326 = math.exp %325 : vector<1x512xf32>
    %cst_87 = arith.constant 1.000000e+00 : f32
    %327 = vector.broadcast %cst_87 : f32 to vector<1x512xf32>
    %328 = arith.addf %327, %326 : vector<1x512xf32>
    %329 = arith.divf %327, %328 : vector<1x512xf32>
    %330 = math.tanh %324 : vector<1x512xf32>
    %331 = vector.extract_strided_slice %329 {offsets = [0, 0], sizes = [1, 128], strides = [1, 1]} : vector<1x512xf32> to vector<1x128xf32>
    %332 = vector.extract_strided_slice %329 {offsets = [0, 128], sizes = [1, 128], strides = [1, 1]} : vector<1x512xf32> to vector<1x128xf32>
    %333 = vector.extract_strided_slice %330 {offsets = [0, 256], sizes = [1, 128], strides = [1, 1]} : vector<1x512xf32> to vector<1x128xf32>
    %334 = vector.extract_strided_slice %329 {offsets = [0, 384], sizes = [1, 128], strides = [1, 1]} : vector<1x512xf32> to vector<1x128xf32>
    %335 = arith.mulf %332, %318 : vector<1x128xf32>
    %336 = arith.mulf %331, %333 : vector<1x128xf32>
    %337 = arith.addf %335, %336 : vector<1x128xf32>
    %338 = math.tanh %337 : vector<1x128xf32>
    %339 = arith.mulf %334, %338 : vector<1x128xf32>
    %c8_i32_88 = arith.constant 8 : i32
    %c0_89 = arith.constant 0 : index
    %c0_90 = arith.constant 0 : index
    %340 = vector.load %arg7[%c0_89, %c0_90] : memref<1x128xf32, #tpu.memory_space<vmem>>, vector<1x128xf32>
    tpu.vector_store %arg7[%c0_89, %c0_90], %339 {strides = array<i32>} : memref<1x128xf32, #tpu.memory_space<vmem>>, vector<1x128xf32>,
    return
  }
}

</mosaic_0001>

<llo_original>
// kernel: encoder_forward.1
$region0: #{encoder_forward.1}
  #allocation0 [shape = 'u32[]', space=smem, size = 0x4, offset = 0x4, fixed_abs, tag = 'smem constant byte address 0x4 - core index']
  #allocation1 [shape = 'u32[144,128]{1,0:T(1,128)}', space=vmem, size = 0x12000, scoped, tag = 'internal scratch']
  #allocation2 [shape = 'f32[8,128]{1,0:T(8,128)}', space=vmem, size = 0x1000, scoped, tag = 'scratch operand']
  #allocation3 [shape = 'f32[8,512]{1,0:T(8,128)}', space=vmem, size = 0x4000, scoped, tag = 'scratch operand']
  #allocation4 [shape = 'f32[8,512]{1,0:T(8,128)}', space=vmem, size = 0x4000, scoped, tag = 'scratch operand']
  %s0 = inlined_call_operand.vmem [shape: f32[8,128], index: 0, kind: input, shape index: {}]
  %s1 = inlined_call_operand.hbm [shape: f32[128,512], index: 1, kind: input, shape index: {}]
  %s2 = inlined_call_operand.hbm [shape: f32[128,512], index: 2, kind: input, shape index: {}]
  %s3 = inlined_call_operand.vmem [shape: f32[1,512], index: 3, kind: input, shape index: {}]
  %s4 = inlined_call_operand.hbm [shape: f32[128,512], index: 4, kind: input, shape index: {}]
  %s5 = inlined_call_operand.hbm [shape: f32[128,512], index: 5, kind: input, shape index: {}]
  %s6 = inlined_call_operand.vmem [shape: f32[1,512], index: 6, kind: input, shape index: {}]
  %s7 = inlined_call_operand.hbm [shape: f32[1,128], index: 7, kind: output, shape index: {}]
  %s8 = sld [smem:[#allocation0]]
  $region54: #{encoder_forward.1} parent=0
    _
  %s10 = ssub.s32 1, %s8
  %s11 = scalar_select 0, %s10, %s8
  $region1: #{encoder_forward.1} parent=0
    #allocation5 [shape = 'u8[262144]{0}', space=vmem, size = 0x40000, scoped, tag = 'input window, operand 1, single buffered']
    #allocation6 [shape = 's32[1]{0}', space=sflag, size = 0x4, scoped, tag = 'scoped memory for encoder_forward.1']
    #allocation7 [shape = 's32[1]{0}', space=sflag, size = 0x4, scoped, tag = 'scoped memory for encoder_forward.1']
    #allocation8 [shape = 'u8[262144]{0}', space=vmem, size = 0x40000, scoped, tag = 'input window, operand 2, single buffered']
    #allocation9 [shape = 's32[1]{0}', space=sflag, size = 0x4, scoped, tag = 'scoped memory for encoder_forward.1']
    #allocation10 [shape = 'u8[262144]{0}', space=vmem, size = 0x40000, scoped, tag = 'input window, operand 4, single buffered']
    #allocation11 [shape = 'u8[262144]{0}', space=vmem, size = 0x40000, scoped, tag = 'input window, operand 5, single buffered']
    #allocation12 [shape = 's32[1]{0}', space=sflag, size = 0x4, scoped, tag = 'scoped memory for encoder_forward.1']
    #allocation13 [shape = 'u8[512]{0}', space=vmem, size = 0x400, scoped, tag = 'output window, operand 0, single buffered']
    %12 = vsyncpa [#allocation6], 0
    %13 = vsyncpa [#allocation9], 0
    %14 = vsyncpa [#allocation12], 0
    %15 = vsyncpa [#allocation7], 0
    // Predicated region
    $region2: #{encoder_forward.1} parent=1 // pred_check
      _
    $region3: #{encoder_forward.1} parent=1 // pred_check_branch
      %17 = sbr.rel (0) target = $region5
    $region4: #{encoder_forward.1} parent=1 // pred_region
      _
    $region5: #{encoder_forward.1} parent=1 // pred_fallthru
      _
    // Predicated region
    $region6: #{encoder_forward.1} parent=1 // pred_check
      _
    $region7: #{encoder_forward.1} parent=1 // pred_check_branch
      %19 = sbr.rel (0) target = $region9
    $region8: #{encoder_forward.1} parent=1 // pred_region
      %s21 = ssub.s32 8192, 8192
      %22 = vsyncadd [#allocation6], %s21
      %s23 = sshll.u32 [#allocation5], 4
      %s24 = int_to_ptr.vmem [resolvable:$true] %s23
      %29 = dma.hbm_to_vmem [thread:$0]  %s1, 8192, %s24, [#allocation6], 512, 512, 32
    $region9: #{encoder_forward.1} parent=1 // pred_fallthru
      _
    // Predicated region
    $region10: #{encoder_forward.1} parent=1 // pred_check
      _
    $region11: #{encoder_forward.1} parent=1 // pred_check_branch
      %31 = sbr.rel (0) target = $region13
    $region12: #{encoder_forward.1} parent=1 // pred_region
      %s33 = ssub.s32 8192, 8192
      %34 = vsyncadd [#allocation9], %s33
      %s35 = sshll.u32 [#allocation8], 4
      %s36 = int_to_ptr.vmem [resolvable:$true] %s35
      %41 = dma.hbm_to_vmem [thread:$0]  %s2, 8192, %s36, [#allocation9], 512, 512, 32
    $region13: #{encoder_forward.1} parent=1 // pred_fallthru
      _
    // Predicated region
    $region14: #{encoder_forward.1} parent=1 // pred_check
      _
    $region15: #{encoder_forward.1} parent=1 // pred_check_branch
      %43 = sbr.rel (0) target = $region17
    $region16: #{encoder_forward.1} parent=1 // pred_region
      _
    $region17: #{encoder_forward.1} parent=1 // pred_fallthru
      _
    // Predicated region
    $region18: #{encoder_forward.1} parent=1 // pred_check
      _
    $region19: #{encoder_forward.1} parent=1 // pred_check_branch
      %45 = sbr.rel (0) target = $region21
    $region20: #{encoder_forward.1} parent=1 // pred_region
      %s47 = ssub.s32 8192, 8192
      %48 = vsyncadd [#allocation9], %s47
      %s49 = sshll.u32 [#allocation10], 4
      %s50 = int_to_ptr.vmem [resolvable:$true] %s49
      %55 = dma.hbm_to_vmem [thread:$0]  %s4, 8192, %s50, [#allocation9], 512, 512, 32
    $region21: #{encoder_forward.1} parent=1 // pred_fallthru
      _
    // Predicated region
    $region22: #{encoder_forward.1} parent=1 // pred_check
      _
    $region23: #{encoder_forward.1} parent=1 // pred_check_branch
      %57 = sbr.rel (0) target = $region25
    $region24: #{encoder_forward.1} parent=1 // pred_region
      %s59 = ssub.s32 8192, 8192
      %60 = vsyncadd [#allocation12], %s59
      %s61 = sshll.u32 [#allocation11], 4
      %s62 = int_to_ptr.vmem [resolvable:$true] %s61
      %67 = dma.hbm_to_vmem [thread:$0]  %s5, 8192, %s62, [#allocation12], 512, 512, 32
    $region25: #{encoder_forward.1} parent=1 // pred_fallthru
      _
    // Predicated region
    $region26: #{encoder_forward.1} parent=1 // pred_check
      _
    $region27: #{encoder_forward.1} parent=1 // pred_check_branch
      %69 = sbr.rel (0) target = $region29
    $region28: #{encoder_forward.1} parent=1 // pred_region
      _
    $region29: #{encoder_forward.1} parent=1 // pred_fallthru
      _
    // Predicated region
    $region30: #{encoder_forward.1} parent=1 // pred_check
      _
    $region31: #{encoder_forward.1} parent=1 // pred_check_branch
      %71 = sbr.rel (0) target = $region33
    $region32: #{encoder_forward.1} parent=1 // pred_region
      %72 = dma.done [#allocation6], 8192
    $region33: #{encoder_forward.1} parent=1 // pred_fallthru
      _
    // Predicated region
    $region34: #{encoder_forward.1} parent=1 // pred_check
      _
    $region35: #{encoder_forward.1} parent=1 // pred_check_branch
      %74 = sbr.rel (0) target = $region37
    $region36: #{encoder_forward.1} parent=1 // pred_region
      %75 = dma.done [#allocation9], 8192
    $region37: #{encoder_forward.1} parent=1 // pred_fallthru
      _
    // Predicated region
    $region38: #{encoder_forward.1} parent=1 // pred_check
      _
    $region39: #{encoder_forward.1} parent=1 // pred_check_branch
      %77 = sbr.rel (0) target = $region41
    $region40: #{encoder_forward.1} parent=1 // pred_region
      %78 = dma.done [#allocation9], 8192
    $region41: #{encoder_forward.1} parent=1 // pred_fallthru
      _
    // Predicated region
    $region42: #{encoder_forward.1} parent=1 // pred_check
      _
    $region43: #{encoder_forward.1} parent=1 // pred_check_branch
      %80 = sbr.rel (0) target = $region45
    $region44: #{encoder_forward.1} parent=1 // pred_region
      %81 = dma.done [#allocation12], 8192
    $region45: #{encoder_forward.1} parent=1 // pred_fallthru
      _
    %v82 = vld [vmem:[%s0] sm:$0xff]
    %v83 = vld [vmem:[#allocation5] sm:$0xff]
    %v84 = vld [vmem:[#allocation5 + $0x8] sm:$0xff]
    %v85 = vld [vmem:[#allocation5 + $0x10] sm:$0xff]
    %v86 = vld [vmem:[#allocation5 + $0x18] sm:$0xff]
    %v87 = vld [vmem:[#allocation5 + $0x20] sm:$0xff]
    %v88 = vld [vmem:[#allocation5 + $0x28] sm:$0xff]
    %v89 = vld [vmem:[#allocation5 + $0x30] sm:$0xff]
    %v90 = vld [vmem:[#allocation5 + $0x38] sm:$0xff]
    %v91 = vld [vmem:[#allocation5 + $0x40] sm:$0xff]
    %v92 = vld [vmem:[#allocation5 + $0x48] sm:$0xff]
    %v93 = vld [vmem:[#allocation5 + $0x50] sm:$0xff]
    %v94 = vld [vmem:[#allocation5 + $0x58] sm:$0xff]
    %v95 = vld [vmem:[#allocation5 + $0x60] sm:$0xff]
    %v96 = vld [vmem:[#allocation5 + $0x68] sm:$0xff]
    %v97 = vld [vmem:[#allocation5 + $0x70] sm:$0xff]
    %v98 = vld [vmem:[#allocation5 + $0x78] sm:$0xff]
    %v99 = vld [vmem:[#allocation5 + $0x80] sm:$0xff]
    %v100 = vld [vmem:[#allocation5 + $0x88] sm:$0xff]
    %v101 = vld [vmem:[#allocation5 + $0x90] sm:$0xff]
    %v102 = vld [vmem:[#allocation5 + $0x98] sm:$0xff]
    %v103 = vld [vmem:[#allocation5 + $0xa0] sm:$0xff]
    %v104 = vld [vmem:[#allocation5 + $0xa8] sm:$0xff]
    %v105 = vld [vmem:[#allocation5 + $0xb0] sm:$0xff]
    %v106 = vld [vmem:[#allocation5 + $0xb8] sm:$0xff]
    %v107 = vld [vmem:[#allocation5 + $0xc0] sm:$0xff]
    %v108 = vld [vmem:[#allocation5 + $0xc8] sm:$0xff]
    %v109 = vld [vmem:[#allocation5 + $0xd0] sm:$0xff]
    %v110 = vld [vmem:[#allocation5 + $0xd8] sm:$0xff]
    %v111 = vld [vmem:[#allocation5 + $0xe0] sm:$0xff]
    %v112 = vld [vmem:[#allocation5 + $0xe8] sm:$0xff]
    %v113 = vld [vmem:[#allocation5 + $0xf0] sm:$0xff]
    %v114 = vld [vmem:[#allocation5 + $0xf8] sm:$0xff]
    %v115 = vld [vmem:[#allocation5 + $0x100] sm:$0xff]
    %v116 = vld [vmem:[#allocation5 + $0x108] sm:$0xff]
    %v117 = vld [vmem:[#allocation5 + $0x110] sm:$0xff]
    %v118 = vld [vmem:[#allocation5 + $0x118] sm:$0xff]
    %v119 = vld [vmem:[#allocation5 + $0x120] sm:$0xff]
    %v120 = vld [vmem:[#allocation5 + $0x128] sm:$0xff]
    %v121 = vld [vmem:[#allocation5 + $0x130] sm:$0xff]
    %v122 = vld [vmem:[#allocation5 + $0x138] sm:$0xff]
    %v123 = vld [vmem:[#allocation5 + $0x140] sm:$0xff]
    %v124 = vld [vmem:[#allocation5 + $0x148] sm:$0xff]
    %v125 = vld [vmem:[#allocation5 + $0x150] sm:$0xff]
    %v126 = vld [vmem:[#allocation5 + $0x158] sm:$0xff]
    %v127 = vld [vmem:[#allocation5 + $0x160] sm:$0xff]
    %v128 = vld [vmem:[#allocation5 + $0x168] sm:$0xff]
    %v129 = vld [vmem:[#allocation5 + $0x170] sm:$0xff]
    %v130 = vld [vmem:[#allocation5 + $0x178] sm:$0xff]
    %v131 = vld [vmem:[#allocation5 + $0x180] sm:$0xff]
    %v132 = vld [vmem:[#allocation5 + $0x188] sm:$0xff]
    %v133 = vld [vmem:[#allocation5 + $0x190] sm:$0xff]
    %v134 = vld [vmem:[#allocation5 + $0x198] sm:$0xff]
    %v135 = vld [vmem:[#allocation5 + $0x1a0] sm:$0xff]
    %v136 = vld [vmem:[#allocation5 + $0x1a8] sm:$0xff]
    %v137 = vld [vmem:[#allocation5 + $0x1b0] sm:$0xff]
    %v138 = vld [vmem:[#allocation5 + $0x1b8] sm:$0xff]
    %v139 = vld [vmem:[#allocation5 + $0x1c0] sm:$0xff]
    %v140 = vld [vmem:[#allocation5 + $0x1c8] sm:$0xff]
    %v141 = vld [vmem:[#allocation5 + $0x1d0] sm:$0xff]
    %v142 = vld [vmem:[#allocation5 + $0x1d8] sm:$0xff]
    %v143 = vld [vmem:[#allocation5 + $0x1e0] sm:$0xff]
    %v144 = vld [vmem:[#allocation5 + $0x1e8] sm:$0xff]
    %v145 = vld [vmem:[#allocation5 + $0x1f0] sm:$0xff]
    %v146 = vld [vmem:[#allocation5 + $0x1f8] sm:$0xff]
    %v147 = vld [vmem:[%s3] sm:$0xf]
    %v149 = vlaneseq
    %v150 = vshrl.u32 %v149, 7
    %v151 = vsub.s32 0, %v150
    %v152 = vrot.slane %v147, %v151
    %v153 = vlaneseq
    %v154 = vshrl.u32 %v153, 7
    %v155 = vsub.s32 1, %v154
    %v156 = vrot.slane %v147, %v155
    %v157 = vlaneseq
    %v158 = vshrl.u32 %v157, 7
    %v159 = vsub.s32 2, %v158
    %v160 = vrot.slane %v147, %v159
    %v161 = vlaneseq
    %v162 = vshrl.u32 %v161, 7
    %v163 = vsub.s32 3, %v162
    %v164 = vrot.slane %v147, %v163
    %169 = vmatprep.subr.mxu0 %v144
    %170 = vmatpush1.msra.mxu0 %v143
    %171 = vmatprep.subr.mxu0 %v140
    %172 = vmatpush1.msra.mxu0 %v139
    %173 = vmatprep.subr.mxu0 %v136
    %174 = vmatpush1.msra.mxu0 %v135
    %175 = vmatprep.subr.mxu0 %v132
    %176 = vmatpush1.msra.mxu0 %v131
    %177 = vmatprep.subr.mxu0 %v128
    %178 = vmatpush1.msra.mxu0 %v127
    %179 = vmatprep.subr.mxu0 %v124
    %180 = vmatpush1.msra.mxu0 %v123
    %181 = vmatprep.subr.mxu0 %v120
    %182 = vmatpush1.msra.mxu0 %v119
    %183 = vmatprep.subr.mxu0 %v116
    %184 = vmatpush1.msra.mxu0 %v115
    %185 = vmatprep.subr.mxu0 %v112
    %186 = vmatpush1.msra.mxu0 %v111
    %187 = vmatprep.subr.mxu0 %v108
    %188 = vmatpush1.msra.mxu0 %v107
    %189 = vmatprep.subr.mxu0 %v104
    %190 = vmatpush1.msra.mxu0 %v103
    %191 = vmatprep.subr.mxu0 %v100
    %192 = vmatpush1.msra.mxu0 %v99
    %193 = vmatprep.subr.mxu0 %v96
    %194 = vmatpush1.msra.mxu0 %v95
    %195 = vmatprep.subr.mxu0 %v92
    %196 = vmatpush1.msra.mxu0 %v91
    %197 = vmatprep.subr.mxu0 %v88
    %198 = vmatpush1.msra.mxu0 %v87
    %199 = vmatprep.subr.mxu0 %v84
    %200 = vmatpush1.msra.mxu0 %v83
    %201 = vmatprep.subr.mxu0 0.0
    %202 = vmatpush2.msra.mxu0 0.0
    %203 = vmatprep.subr.mxu0 0.0
    %204 = vmatpush2.msra.mxu0 0.0
    %205 = vmatprep.subr.mxu0 0.0
    %206 = vmatpush2.msra.mxu0 0.0
    %207 = vmatprep.subr.mxu0 0.0
    %208 = vmatpush2.msra.mxu0 0.0
    %209 = vmatprep.subr.mxu0 0.0
    %210 = vmatpush2.msra.mxu0 0.0
    %211 = vmatprep.subr.mxu0 0.0
    %212 = vmatpush2.msra.mxu0 0.0
    %213 = vmatprep.subr.mxu0 0.0
    %214 = vmatpush2.msra.mxu0 0.0
    %215 = vmatprep.subr.mxu0 0.0
    %216 = vmatpush2.msra.mxu0 0.0
    %217 = vmatprep.subr.mxu0 0.0
    %218 = vmatpush2.msra.mxu0 0.0
    %219 = vmatprep.subr.mxu0 0.0
    %220 = vmatpush2.msra.mxu0 0.0
    %221 = vmatprep.subr.mxu0 0.0
    %222 = vmatpush2.msra.mxu0 0.0
    %223 = vmatprep.subr.mxu0 0.0
    %224 = vmatpush2.msra.mxu0 0.0
    %225 = vmatprep.subr.mxu0 0.0
    %226 = vmatpush2.msra.mxu0 0.0
    %227 = vmatprep.subr.mxu0 0.0
    %228 = vmatpush2.msra.mxu0 0.0
    %229 = vmatprep.subr.mxu0 0.0
    %230 = vmatpush2.msra.mxu0 0.0
    %231 = vmatprep.subr.mxu0 0.0
    %232 = vmatpush2.msra.mxu0 0.0
    %233 = vmatprep.mubr.f32.mxu0 0.0
    %234 = vmatmul.mubr.f32.gmra.mxu0 %v82
    %v235 = vpop.f32.mrf.mxu0
    %v236 = vadd.f32 %v152, %v235
    %v237 = vpop.f32.mrf.mxu0
    %v238 = vadd.f32 %v156, %v237
    %239 = vdwg.mxu0
    %240 = vmatprep.subr.mxu0 %v146
    %241 = vmatpush1.msra.mxu0 %v145
    %242 = vmatprep.subr.mxu0 %v142
    %243 = vmatpush1.msra.mxu0 %v141
    %244 = vmatprep.subr.mxu0 %v138
    %245 = vmatpush1.msra.mxu0 %v137
    %246 = vmatprep.subr.mxu0 %v134
    %247 = vmatpush1.msra.mxu0 %v133
    %248 = vmatprep.subr.mxu0 %v130
    %249 = vmatpush1.msra.mxu0 %v129
    %250 = vmatprep.subr.mxu0 %v126
    %251 = vmatpush1.msra.mxu0 %v125
    %252 = vmatprep.subr.mxu0 %v122
    %253 = vmatpush1.msra.mxu0 %v121
    %254 = vmatprep.subr.mxu0 %v118
    %255 = vmatpush1.msra.mxu0 %v117
    %256 = vmatprep.subr.mxu0 %v114
    %257 = vmatpush1.msra.mxu0 %v113
    %258 = vmatprep.subr.mxu0 %v110
    %259 = vmatpush1.msra.mxu0 %v109
    %260 = vmatprep.subr.mxu0 %v106
    %261 = vmatpush1.msra.mxu0 %v105
    %262 = vmatprep.subr.mxu0 %v102
    %263 = vmatpush1.msra.mxu0 %v101
    %264 = vmatprep.subr.mxu0 %v98
    %265 = vmatpush1.msra.mxu0 %v97
    %266 = vmatprep.subr.mxu0 %v94
    %267 = vmatpush1.msra.mxu0 %v93
    %268 = vmatprep.subr.mxu0 %v90
    %269 = vmatpush1.msra.mxu0 %v89
    %270 = vmatprep.subr.mxu0 %v86
    %271 = vmatpush1.msra.mxu0 %v85
    %272 = vmatprep.subr.mxu0 0.0
    %273 = vmatpush2.msra.mxu0 0.0
    %274 = vmatprep.subr.mxu0 0.0
    %275 = vmatpush2.msra.mxu0 0.0
    %276 = vmatprep.subr.mxu0 0.0
    %277 = vmatpush2.msra.mxu0 0.0
    %278 = vmatprep.subr.mxu0 0.0
    %279 = vmatpush2.msra.mxu0 0.0
    %280 = vmatprep.subr.mxu0 0.0
    %281 = vmatpush2.msra.mxu0 0.0
    %282 = vmatprep.subr.mxu0 0.0
    %283 = vmatpush2.msra.mxu0 0.0
    %284 = vmatprep.subr.mxu0 0.0
    %285 = vmatpush2.msra.mxu0 0.0
    %286 = vmatprep.subr.mxu0 0.0
    %287 = vmatpush2.msra.mxu0 0.0
    %288 = vmatprep.subr.mxu0 0.0
    %289 = vmatpush2.msra.mxu0 0.0
    %290 = vmatprep.subr.mxu0 0.0
    %291 = vmatpush2.msra.mxu0 0.0
    %292 = vmatprep.subr.mxu0 0.0
    %293 = vmatpush2.msra.mxu0 0.0
    %294 = vmatprep.subr.mxu0 0.0
    %295 = vmatpush2.msra.mxu0 0.0
    %296 = vmatprep.subr.mxu0 0.0
    %297 = vmatpush2.msra.mxu0 0.0
    %298 = vmatprep.subr.mxu0 0.0
    %299 = vmatpush2.msra.mxu0 0.0
    %300 = vmatprep.subr.mxu0 0.0
    %301 = vmatpush2.msra.mxu0 0.0
    %302 = vmatprep.subr.mxu0 0.0
    %303 = vmatpush2.msra.mxu0 0.0
    %304 = vmatprep.mubr.f32.mxu0 0.0
    %305 = vmatmul.mubr.f32.gmra.mxu0 %v82
    %v306 = vpop.f32.mrf.mxu0
    %v307 = vadd.f32 %v160, %v306
    %v308 = vpop.f32.mrf.mxu0
    %v309 = vadd.f32 %v164, %v308
    %310 = vdwg.mxu0
    %311 = vst [vmem:[#allocation3] sm:$0xff] %v236
    %312 = vst [vmem:[#allocation3 + $0x8] sm:$0xff] %v238
    %313 = vst [vmem:[#allocation3 + $0x10] sm:$0xff] %v307
    %314 = vst [vmem:[#allocation3 + $0x18] sm:$0xff] %v309
    %v315 = vld [vmem:[#allocation8] sm:$0xff]
    %v316 = vld [vmem:[#allocation8 + $0x8] sm:$0xff]
    %v317 = vld [vmem:[#allocation8 + $0x10] sm:$0xff]
    %v318 = vld [vmem:[#allocation8 + $0x18] sm:$0xff]
    %v319 = vld [vmem:[#allocation8 + $0x20] sm:$0xff]
    %v320 = vld [vmem:[#allocation8 + $0x28] sm:$0xff]
    %v321 = vld [vmem:[#allocation8 + $0x30] sm:$0xff]
    %v322 = vld [vmem:[#allocation8 + $0x38] sm:$0xff]
    %v323 = vld [vmem:[#allocation8 + $0x40] sm:$0xff]
    %v324 = vld [vmem:[#allocation8 + $0x48] sm:$0xff]
    %v325 = vld [vmem:[#allocation8 + $0x50] sm:$0xff]
    %v326 = vld [vmem:[#allocation8 + $0x58] sm:$0xff]
    %v327 = vld [vmem:[#allocation8 + $0x60] sm:$0xff]
    %v328 = vld [vmem:[#allocation8 + $0x68] sm:$0xff]
    %v329 = vld [vmem:[#allocation8 + $0x70] sm:$0xff]
    %v330 = vld [vmem:[#allocation8 + $0x78] sm:$0xff]
    %v331 = vld [vmem:[#allocation8 + $0x80] sm:$0xff]
    %v332 = vld [vmem:[#allocation8 + $0x88] sm:$0xff]
    %v333 = vld [vmem:[#allocation8 + $0x90] sm:$0xff]
    %v334 = vld [vmem:[#allocation8 + $0x98] sm:$0xff]
    %v335 = vld [vmem:[#allocation8 + $0xa0] sm:$0xff]
    %v336 = vld [vmem:[#allocation8 + $0xa8] sm:$0xff]
    %v337 = vld [vmem:[#allocation8 + $0xb0] sm:$0xff]
    %v338 = vld [vmem:[#allocation8 + $0xb8] sm:$0xff]
    %v339 = vld [vmem:[#allocation8 + $0xc0] sm:$0xff]
    %v340 = vld [vmem:[#allocation8 + $0xc8] sm:$0xff]
    %v341 = vld [vmem:[#allocation8 + $0xd0] sm:$0xff]
    %v342 = vld [vmem:[#allocation8 + $0xd8] sm:$0xff]
    %v343 = vld [vmem:[#allocation8 + $0xe0] sm:$0xff]
    %v344 = vld [vmem:[#allocation8 + $0xe8] sm:$0xff]
    %v345 = vld [vmem:[#allocation8 + $0xf0] sm:$0xff]
    %v346 = vld [vmem:[#allocation8 + $0xf8] sm:$0xff]
    %v347 = vld [vmem:[#allocation8 + $0x100] sm:$0xff]
    %v348 = vld [vmem:[#allocation8 + $0x108] sm:$0xff]
    %v349 = vld [vmem:[#allocation8 + $0x110] sm:$0xff]
    %v350 = vld [vmem:[#allocation8 + $0x118] sm:$0xff]
    %v351 = vld [vmem:[#allocation8 + $0x120] sm:$0xff]
    %v352 = vld [vmem:[#allocation8 + $0x128] sm:$0xff]
    %v353 = vld [vmem:[#allocation8 + $0x130] sm:$0xff]
    %v354 = vld [vmem:[#allocation8 + $0x138] sm:$0xff]
    %v355 = vld [vmem:[#allocation8 + $0x140] sm:$0xff]
    %v356 = vld [vmem:[#allocation8 + $0x148] sm:$0xff]
    %v357 = vld [vmem:[#allocation8 + $0x150] sm:$0xff]
    %v358 = vld [vmem:[#allocation8 + $0x158] sm:$0xff]
    %v359 = vld [vmem:[#allocation8 + $0x160] sm:$0xff]
    %v360 = vld [vmem:[#allocation8 + $0x168] sm:$0xff]
    %v361 = vld [vmem:[#allocation8 + $0x170] sm:$0xff]
    %v362 = vld [vmem:[#allocation8 + $0x178] sm:$0xff]
    %v363 = vld [vmem:[#allocation8 + $0x180] sm:$0xff]
    %v364 = vld [vmem:[#allocation8 + $0x188] sm:$0xff]
    %v365 = vld [vmem:[#allocation8 + $0x190] sm:$0xff]
    %v366 = vld [vmem:[#allocation8 + $0x198] sm:$0xff]
    %v367 = vld [vmem:[#allocation8 + $0x1a0] sm:$0xff]
    %v368 = vld [vmem:[#allocation8 + $0x1a8] sm:$0xff]
    %v369 = vld [vmem:[#allocation8 + $0x1b0] sm:$0xff]
    %v370 = vld [vmem:[#allocation8 + $0x1b8] sm:$0xff]
    %v371 = vld [vmem:[#allocation8 + $0x1c0] sm:$0xff]
    %v372 = vld [vmem:[#allocation8 + $0x1c8] sm:$0xff]
    %v373 = vld [vmem:[#allocation8 + $0x1d0] sm:$0xff]
    %v374 = vld [vmem:[#allocation8 + $0x1d8] sm:$0xff]
    %v375 = vld [vmem:[#allocation8 + $0x1e0] sm:$0xff]
    %v376 = vld [vmem:[#allocation8 + $0x1e8] sm:$0xff]
    %v377 = vld [vmem:[#allocation8 + $0x1f0] sm:$0xff]
    %v378 = vld [vmem:[#allocation8 + $0x1f8] sm:$0xff]
    %v379 = vld [vmem:[#allocation3] ss:$8 sm:$0xf]
    %380 = vmatprep.subr.mxu0 %v376
    %381 = vmatpush1.msra.mxu0 %v375
    %382 = vmatprep.subr.mxu0 %v372
    %383 = vmatpush1.msra.mxu0 %v371
    %384 = vmatprep.subr.mxu0 %v368
    %385 = vmatpush1.msra.mxu0 %v367
    %386 = vmatprep.subr.mxu0 %v364
    %387 = vmatpush1.msra.mxu0 %v363
    %388 = vmatprep.subr.mxu0 %v360
    %389 = vmatpush1.msra.mxu0 %v359
    %390 = vmatprep.subr.mxu0 %v356
    %391 = vmatpush1.msra.mxu0 %v355
    %392 = vmatprep.subr.mxu0 %v352
    %393 = vmatpush1.msra.mxu0 %v351
    %394 = vmatprep.subr.mxu0 %v348
    %395 = vmatpush1.msra.mxu0 %v347
    %396 = vmatprep.subr.mxu0 %v344
    %397 = vmatpush1.msra.mxu0 %v343
    %398 = vmatprep.subr.mxu0 %v340
    %399 = vmatpush1.msra.mxu0 %v339
    %400 = vmatprep.subr.mxu0 %v336
    %401 = vmatpush1.msra.mxu0 %v335
    %402 = vmatprep.subr.mxu0 %v332
    %403 = vmatpush1.msra.mxu0 %v331
    %404 = vmatprep.subr.mxu0 %v328
    %405 = vmatpush1.msra.mxu0 %v327
    %406 = vmatprep.subr.mxu0 %v324
    %407 = vmatpush1.msra.mxu0 %v323
    %408 = vmatprep.subr.mxu0 %v320
    %409 = vmatpush1.msra.mxu0 %v319
    %410 = vmatprep.subr.mxu0 %v316
    %411 = vmatpush1.msra.mxu0 %v315
    %412 = vmatprep.subr.mxu0 0.0
    %413 = vmatpush2.msra.mxu0 0.0
    %414 = vmatprep.subr.mxu0 0.0
    %415 = vmatpush2.msra.mxu0 0.0
    %416 = vmatprep.subr.mxu0 0.0
    %417 = vmatpush2.msra.mxu0 0.0
    %418 = vmatprep.subr.mxu0 0.0
    %419 = vmatpush2.msra.mxu0 0.0
    %420 = vmatprep.subr.mxu0 0.0
    %421 = vmatpush2.msra.mxu0 0.0
    %422 = vmatprep.subr.mxu0 0.0
    %423 = vmatpush2.msra.mxu0 0.0
    %424 = vmatprep.subr.mxu0 0.0
    %425 = vmatpush2.msra.mxu0 0.0
    %426 = vmatprep.subr.mxu0 0.0
    %427 = vmatpush2.msra.mxu0 0.0
    %428 = vmatprep.subr.mxu0 0.0
    %429 = vmatpush2.msra.mxu0 0.0
    %430 = vmatprep.subr.mxu0 0.0
    %431 = vmatpush2.msra.mxu0 0.0
    %432 = vmatprep.subr.mxu0 0.0
    %433 = vmatpush2.msra.mxu0 0.0
    %434 = vmatprep.subr.mxu0 0.0
    %435 = vmatpush2.msra.mxu0 0.0
    %436 = vmatprep.subr.mxu0 0.0
    %437 = vmatpush2.msra.mxu0 0.0
    %438 = vmatprep.subr.mxu0 0.0
    %439 = vmatpush2.msra.mxu0 0.0
    %440 = vmatprep.subr.mxu0 0.0
    %441 = vmatpush2.msra.mxu0 0.0
    %442 = vmatprep.subr.mxu0 0.0
    %443 = vmatpush2.msra.mxu0 0.0
    %444 = vmatprep.mubr.f32.mxu0 0.0
    %445 = vmatmul.mubr.f32.gmra.mxu0 0.0
    %v446 = vpop.f32.mrf.mxu0
    %v447 = vadd.f32 0.0, %v446
    %v448 = vpop.f32.mrf.mxu0
    %v449 = vadd.f32 0.0, %v448
    %450 = vdwg.mxu0
    %451 = vmatprep.subr.mxu0 %v378
    %452 = vmatpush1.msra.mxu0 %v377
    %453 = vmatprep.subr.mxu0 %v374
    %454 = vmatpush1.msra.mxu0 %v373
    %455 = vmatprep.subr.mxu0 %v370
    %456 = vmatpush1.msra.mxu0 %v369
    %457 = vmatprep.subr.mxu0 %v366
    %458 = vmatpush1.msra.mxu0 %v365
    %459 = vmatprep.subr.mxu0 %v362
    %460 = vmatpush1.msra.mxu0 %v361
    %461 = vmatprep.subr.mxu0 %v358
    %462 = vmatpush1.msra.mxu0 %v357
    %463 = vmatprep.subr.mxu0 %v354
    %464 = vmatpush1.msra.mxu0 %v353
    %465 = vmatprep.subr.mxu0 %v350
    %466 = vmatpush1.msra.mxu0 %v349
    %467 = vmatprep.subr.mxu0 %v346
    %468 = vmatpush1.msra.mxu0 %v345
    %469 = vmatprep.subr.mxu0 %v342
    %470 = vmatpush1.msra.mxu0 %v341
    %471 = vmatprep.subr.mxu0 %v338
    %472 = vmatpush1.msra.mxu0 %v337
    %473 = vmatprep.subr.mxu0 %v334
    %474 = vmatpush1.msra.mxu0 %v333
    %475 = vmatprep.subr.mxu0 %v330
    %476 = vmatpush1.msra.mxu0 %v329
    %477 = vmatprep.subr.mxu0 %v326
    %478 = vmatpush1.msra.mxu0 %v325
    %479 = vmatprep.subr.mxu0 %v322
    %480 = vmatpush1.msra.mxu0 %v321
    %481 = vmatprep.subr.mxu0 %v318
    %482 = vmatpush1.msra.mxu0 %v317
    %483 = vmatprep.subr.mxu0 0.0
    %484 = vmatpush2.msra.mxu0 0.0
    %485 = vmatprep.subr.mxu0 0.0
    %486 = vmatpush2.msra.mxu0 0.0
    %487 = vmatprep.subr.mxu0 0.0
    %488 = vmatpush2.msra.mxu0 0.0
    %489 = vmatprep.subr.mxu0 0.0
    %490 = vmatpush2.msra.mxu0 0.0
    %491 = vmatprep.subr.mxu0 0.0
    %492 = vmatpush2.msra.mxu0 0.0
    %493 = vmatprep.subr.mxu0 0.0
    %494 = vmatpush2.msra.mxu0 0.0
    %495 = vmatprep.subr.mxu0 0.0
    %496 = vmatpush2.msra.mxu0 0.0
    %497 = vmatprep.subr.mxu0 0.0
    %498 = vmatpush2.msra.mxu0 0.0
    %499 = vmatprep.subr.mxu0 0.0
    %500 = vmatpush2.msra.mxu0 0.0
    %501 = vmatprep.subr.mxu0 0.0
    %502 = vmatpush2.msra.mxu0 0.0
    %503 = vmatprep.subr.mxu0 0.0
    %504 = vmatpush2.msra.mxu0 0.0
    %505 = vmatprep.subr.mxu0 0.0
    %506 = vmatpush2.msra.mxu0 0.0
    %507 = vmatprep.subr.mxu0 0.0
    %508 = vmatpush2.msra.mxu0 0.0
    %509 = vmatprep.subr.mxu0 0.0
    %510 = vmatpush2.msra.mxu0 0.0
    %511 = vmatprep.subr.mxu0 0.0
    %512 = vmatpush2.msra.mxu0 0.0
    %513 = vmatprep.subr.mxu0 0.0
    %514 = vmatpush2.msra.mxu0 0.0
    %515 = vmatprep.mubr.f32.mxu0 0.0
    %516 = vmatmul.mubr.f32.gmra.mxu0 0.0
    %v517 = vpop.f32.mrf.mxu0
    %v518 = vadd.f32 0.0, %v517
    %v519 = vpop.f32.mrf.mxu0
    %v520 = vadd.f32 0.0, %v519
    %521 = vdwg.mxu0
    %v526 = vcombine.low %v447, %v449
    %v527 = vcombine.low %v518, %v520
    %v529 = vunpack.c.l.s4 1966171168
    %v530 = vunpack.c.0.s8 %v529
    %v531 = vlaneseq
    %v532 = vshrl.u32 %v531, 7
    %v533 = vsub.s32 %v530, %v532
    %v534 = vrot.slane %v526, %v533
    %v536 = vunpack.c.l.s4 1966171168
    %v537 = vunpack.c.0.s8 %v536
    %v538 = vlaneseq
    %v539 = vshrl.u32 %v538, 7
    %v540 = vsub.s32 %v537, %v539
    %v541 = vrot.slane %v527, %v540
    %v542 = vcombine.low %v534, %v541
    %v544 = vunpack.c.l.s4 1966171168
    %v545 = vunpack.c.0.s8 %v544
    %v546 = vlaneseq
    %v547 = vshrl.u32 %v546, 7
    %v548 = vsub.s32 %v545, %v547
    %v549 = vrot.slane %v542, %v548
    %v551 = vadd.f32 %v379, %v549
    %v552 = vxor.u32 %v551, 2147483648
    %v553 = vmul.f32 %v552, 1.442695
    %v554 = vpow.pop %v553
    %v555 = vadd.f32 %v554, 1.0
    %v556 = vrcp.pop %v555
    %v557 = vmul.f32 1.0, %v556
    %v558 = vtanh.pop %v551
    %v560 = vrot.slane %v557, 1
    %v562 = vmul.f32 %v560, 0.0
    %v564 = vrot.slane %v558, 2
    %v566 = vmul.f32 %v557, %v564
    %v567 = vadd.f32 %v562, %v566
    %v568 = vtanh.pop %v567
    %v569 = vrot.slane %v557, 3
    %v571 = vmul.f32 %v569, %v568
    %572 = vst [vmem:[#allocation2] sm:$0x1] %v571
    %s573 = scalar_lea.vmem [#allocation3], 1
    %v574 = vld [vmem:[%s573] ss:$8 sm:$0xf]
    %575 = vmatprep.subr.mxu0 %v376
    %576 = vmatpush1.msra.mxu0 %v375
    %577 = vmatprep.subr.mxu0 %v372
    %578 = vmatpush1.msra.mxu0 %v371
    %579 = vmatprep.subr.mxu0 %v368
    %580 = vmatpush1.msra.mxu0 %v367
    %581 = vmatprep.subr.mxu0 %v364
    %582 = vmatpush1.msra.mxu0 %v363
    %583 = vmatprep.subr.mxu0 %v360
    %584 = vmatpush1.msra.mxu0 %v359
    %585 = vmatprep.subr.mxu0 %v356
    %586 = vmatpush1.msra.mxu0 %v355
    %587 = vmatprep.subr.mxu0 %v352
    %588 = vmatpush1.msra.mxu0 %v351
    %589 = vmatprep.subr.mxu0 %v348
    %590 = vmatpush1.msra.mxu0 %v347
    %591 = vmatprep.subr.mxu0 %v344
    %592 = vmatpush1.msra.mxu0 %v343
    %593 = vmatprep.subr.mxu0 %v340
    %594 = vmatpush1.msra.mxu0 %v339
    %595 = vmatprep.subr.mxu0 %v336
    %596 = vmatpush1.msra.mxu0 %v335
    %597 = vmatprep.subr.mxu0 %v332
    %598 = vmatpush1.msra.mxu0 %v331
    %599 = vmatprep.subr.mxu0 %v328
    %600 = vmatpush1.msra.mxu0 %v327
    %601 = vmatprep.subr.mxu0 %v324
    %602 = vmatpush1.msra.mxu0 %v323
    %603 = vmatprep.subr.mxu0 %v320
    %604 = vmatpush1.msra.mxu0 %v319
    %605 = vmatprep.subr.mxu0 %v316
    %606 = vmatpush1.msra.mxu0 %v315
    %607 = vmatprep.subr.mxu0 0.0
    %608 = vmatpush2.msra.mxu0 0.0
    %609 = vmatprep.subr.mxu0 0.0
    %610 = vmatpush2.msra.mxu0 0.0
    %611 = vmatprep.subr.mxu0 0.0
    %612 = vmatpush2.msra.mxu0 0.0
    %613 = vmatprep.subr.mxu0 0.0
    %614 = vmatpush2.msra.mxu0 0.0
    %615 = vmatprep.subr.mxu0 0.0
    %616 = vmatpush2.msra.mxu0 0.0
    %617 = vmatprep.subr.mxu0 0.0
    %618 = vmatpush2.msra.mxu0 0.0
    %619 = vmatprep.subr.mxu0 0.0
    %620 = vmatpush2.msra.mxu0 0.0
    %621 = vmatprep.subr.mxu0 0.0
    %622 = vmatpush2.msra.mxu0 0.0
    %623 = vmatprep.subr.mxu0 0.0
    %624 = vmatpush2.msra.mxu0 0.0
    %625 = vmatprep.subr.mxu0 0.0
    %626 = vmatpush2.msra.mxu0 0.0
    %627 = vmatprep.subr.mxu0 0.0
    %628 = vmatpush2.msra.mxu0 0.0
    %629 = vmatprep.subr.mxu0 0.0
    %630 = vmatpush2.msra.mxu0 0.0
    %631 = vmatprep.subr.mxu0 0.0
    %632 = vmatpush2.msra.mxu0 0.0
    %633 = vmatprep.subr.mxu0 0.0
    %634 = vmatpush2.msra.mxu0 0.0
    %635 = vmatprep.subr.mxu0 0.0
    %636 = vmatpush2.msra.mxu0 0.0
    %637 = vmatprep.subr.mxu0 0.0
    %638 = vmatpush2.msra.mxu0 0.0
    %639 = vmatprep.mubr.f32.mxu0 0.0
    %640 = vmatmul.mubr.f32.gmra.mxu0 %v571
    %v641 = vpop.f32.mrf.mxu0
    %v642 = vadd.f32 0.0, %v641
    %v643 = vpop.f32.mrf.mxu0
    %v644 = vadd.f32 0.0, %v643
    %645 = vdwg.mxu0
    %646 = vmatprep.subr.mxu0 %v378
    %647 = vmatpush1.msra.mxu0 %v377
    %648 = vmatprep.subr.mxu0 %v374
    %649 = vmatpush1.msra.mxu0 %v373
    %650 = vmatprep.subr.mxu0 %v370
    %651 = vmatpush1.msra.mxu0 %v369
    %652 = vmatprep.subr.mxu0 %v366
    %653 = vmatpush1.msra.mxu0 %v365
    %654 = vmatprep.subr.mxu0 %v362
    %655 = vmatpush1.msra.mxu0 %v361
    %656 = vmatprep.subr.mxu0 %v358
    %657 = vmatpush1.msra.mxu0 %v357
    %658 = vmatprep.subr.mxu0 %v354
    %659 = vmatpush1.msra.mxu0 %v353
    %660 = vmatprep.subr.mxu0 %v350
    %661 = vmatpush1.msra.mxu0 %v349
    %662 = vmatprep.subr.mxu0 %v346
    %663 = vmatpush1.msra.mxu0 %v345
    %664 = vmatprep.subr.mxu0 %v342
    %665 = vmatpush1.msra.mxu0 %v341
    %666 = vmatprep.subr.mxu0 %v338
    %667 = vmatpush1.msra.mxu0 %v337
    %668 = vmatprep.subr.mxu0 %v334
    %669 = vmatpush1.msra.mxu0 %v333
    %670 = vmatprep.subr.mxu0 %v330
    %671 = vmatpush1.msra.mxu0 %v329
    %672 = vmatprep.subr.mxu0 %v326
    %673 = vmatpush1.msra.mxu0 %v325
    %674 = vmatprep.subr.mxu0 %v322
    %675 = vmatpush1.msra.mxu0 %v321
    %676 = vmatprep.subr.mxu0 %v318
    %677 = vmatpush1.msra.mxu0 %v317
    %678 = vmatprep.subr.mxu0 0.0
    %679 = vmatpush2.msra.mxu0 0.0
    %680 = vmatprep.subr.mxu0 0.0
    %681 = vmatpush2.msra.mxu0 0.0
    %682 = vmatprep.subr.mxu0 0.0
    %683 = vmatpush2.msra.mxu0 0.0
    %684 = vmatprep.subr.mxu0 0.0
    %685 = vmatpush2.msra.mxu0 0.0
    %686 = vmatprep.subr.mxu0 0.0
    %687 = vmatpush2.msra.mxu0 0.0
    %688 = vmatprep.subr.mxu0 0.0
    %689 = vmatpush2.msra.mxu0 0.0
    %690 = vmatprep.subr.mxu0 0.0
    %691 = vmatpush2.msra.mxu0 0.0
    %692 = vmatprep.subr.mxu0 0.0
    %693 = vmatpush2.msra.mxu0 0.0
    %694 = vmatprep.subr.mxu0 0.0
    %695 = vmatpush2.msra.mxu0 0.0
    %696 = vmatprep.subr.mxu0 0.0
    %697 = vmatpush2.msra.mxu0 0.0
    %698 = vmatprep.subr.mxu0 0.0
    %699 = vmatpush2.msra.mxu0 0.0
    %700 = vmatprep.subr.mxu0 0.0
    %701 = vmatpush2.msra.mxu0 0.0
    %702 = vmatprep.subr.mxu0 0.0
    %703 = vmatpush2.msra.mxu0 0.0
    %704 = vmatprep.subr.mxu0 0.0
    %705 = vmatpush2.msra.mxu0 0.0
    %706 = vmatprep.subr.mxu0 0.0
    %707 = vmatpush2.msra.mxu0 0.0
    %708 = vmatprep.subr.mxu0 0.0
    %709 = vmatpush2.msra.mxu0 0.0
    %710 = vmatprep.mubr.f32.mxu0 0.0
    %711 = vmatmul.mubr.f32.gmra.mxu0 %v571
    %v712 = vpop.f32.mrf.mxu0
    %v713 = vadd.f32 0.0, %v712
    %v714 = vpop.f32.mrf.mxu0
    %v715 = vadd.f32 0.0, %v714
    %716 = vdwg.mxu0
    %v721 = vcombine.low %v642, %v644
    %v722 = vcombine.low %v713, %v715
    %v724 = vunpack.c.l.s4 1966171168
    %v725 = vunpack.c.0.s8 %v724
    %v726 = vlaneseq
    %v727 = vshrl.u32 %v726, 7
    %v728 = vsub.s32 %v725, %v727
    %v729 = vrot.slane %v721, %v728
    %v731 = vunpack.c.l.s4 1966171168
    %v732 = vunpack.c.0.s8 %v731
    %v733 = vlaneseq
    %v734 = vshrl.u32 %v733, 7
    %v735 = vsub.s32 %v732, %v734
    %v736 = vrot.slane %v722, %v735
    %v737 = vcombine.low %v729, %v736
    %v739 = vunpack.c.l.s4 1966171168
    %v740 = vunpack.c.0.s8 %v739
    %v741 = vlaneseq
    %v742 = vshrl.u32 %v741, 7
    %v743 = vsub.s32 %v740, %v742
    %v744 = vrot.slane %v737, %v743
    %v746 = vadd.f32 %v574, %v744
    %v747 = vxor.u32 %v746, 2147483648
    %v748 = vmul.f32 %v747, 1.442695
    %v749 = vpow.pop %v748
    %v750 = vadd.f32 %v749, 1.0
    %v751 = vrcp.pop %v750
    %v752 = vmul.f32 1.0, %v751
    %v753 = vtanh.pop %v746
    %v755 = vrot.slane %v752, 1
    %v757 = vmul.f32 %v755, %v567
    %v759 = vrot.slane %v753, 2
    %v761 = vmul.f32 %v752, %v759
    %v762 = vadd.f32 %v757, %v761
    %v763 = vtanh.pop %v762
    %v764 = vrot.slane %v752, 3
    %v766 = vmul.f32 %v764, %v763
    %767 = vst [vmem:[#allocation2 + $0x1] sm:$0x1] %v766
    %s768 = scalar_lea.vmem [#allocation3], 2
    %v769 = vld [vmem:[%s768] ss:$8 sm:$0xf]
    %770 = vmatprep.subr.mxu0 %v376
    %771 = vmatpush1.msra.mxu0 %v375
    %772 = vmatprep.subr.mxu0 %v372
    %773 = vmatpush1.msra.mxu0 %v371
    %774 = vmatprep.subr.mxu0 %v368
    %775 = vmatpush1.msra.mxu0 %v367
    %776 = vmatprep.subr.mxu0 %v364
    %777 = vmatpush1.msra.mxu0 %v363
    %778 = vmatprep.subr.mxu0 %v360
    %779 = vmatpush1.msra.mxu0 %v359
    %780 = vmatprep.subr.mxu0 %v356
    %781 = vmatpush1.msra.mxu0 %v355
    %782 = vmatprep.subr.mxu0 %v352
    %783 = vmatpush1.msra.mxu0 %v351
    %784 = vmatprep.subr.mxu0 %v348
    %785 = vmatpush1.msra.mxu0 %v347
    %786 = vmatprep.subr.mxu0 %v344
    %787 = vmatpush1.msra.mxu0 %v343
    %788 = vmatprep.subr.mxu0 %v340
    %789 = vmatpush1.msra.mxu0 %v339
    %790 = vmatprep.subr.mxu0 %v336
    %791 = vmatpush1.msra.mxu0 %v335
    %792 = vmatprep.subr.mxu0 %v332
    %793 = vmatpush1.msra.mxu0 %v331
    %794 = vmatprep.subr.mxu0 %v328
    %795 = vmatpush1.msra.mxu0 %v327
    %796 = vmatprep.subr.mxu0 %v324
    %797 = vmatpush1.msra.mxu0 %v323
    %798 = vmatprep.subr.mxu0 %v320
    %799 = vmatpush1.msra.mxu0 %v319
    %800 = vmatprep.subr.mxu0 %v316
    %801 = vmatpush1.msra.mxu0 %v315
    %802 = vmatprep.subr.mxu0 0.0
    %803 = vmatpush2.msra.mxu0 0.0
    %804 = vmatprep.subr.mxu0 0.0
    %805 = vmatpush2.msra.mxu0 0.0
    %806 = vmatprep.subr.mxu0 0.0
    %807 = vmatpush2.msra.mxu0 0.0
    %808 = vmatprep.subr.mxu0 0.0
    %809 = vmatpush2.msra.mxu0 0.0
    %810 = vmatprep.subr.mxu0 0.0
    %811 = vmatpush2.msra.mxu0 0.0
    %812 = vmatprep.subr.mxu0 0.0
    %813 = vmatpush2.msra.mxu0 0.0
    %814 = vmatprep.subr.mxu0 0.0
    %815 = vmatpush2.msra.mxu0 0.0
    %816 = vmatprep.subr.mxu0 0.0
    %817 = vmatpush2.msra.mxu0 0.0
    %818 = vmatprep.subr.mxu0 0.0
    %819 = vmatpush2.msra.mxu0 0.0
    %820 = vmatprep.subr.mxu0 0.0
    %821 = vmatpush2.msra.mxu0 0.0
    %822 = vmatprep.subr.mxu0 0.0
    %823 = vmatpush2.msra.mxu0 0.0
    %824 = vmatprep.subr.mxu0 0.0
    %825 = vmatpush2.msra.mxu0 0.0
    %826 = vmatprep.subr.mxu0 0.0
    %827 = vmatpush2.msra.mxu0 0.0
    %828 = vmatprep.subr.mxu0 0.0
    %829 = vmatpush2.msra.mxu0 0.0
    %830 = vmatprep.subr.mxu0 0.0
    %831 = vmatpush2.msra.mxu0 0.0
    %832 = vmatprep.subr.mxu0 0.0
    %833 = vmatpush2.msra.mxu0 0.0
    %834 = vmatprep.mubr.f32.mxu0 0.0
    %835 = vmatmul.mubr.f32.gmra.mxu0 %v766
    %v836 = vpop.f32.mrf.mxu0
    %v837 = vadd.f32 0.0, %v836
    %v838 = vpop.f32.mrf.mxu0
    %v839 = vadd.f32 0.0, %v838
    %840 = vdwg.mxu0
    %841 = vmatprep.subr.mxu0 %v378
    %842 = vmatpush1.msra.mxu0 %v377
    %843 = vmatprep.subr.mxu0 %v374
    %844 = vmatpush1.msra.mxu0 %v373
    %845 = vmatprep.subr.mxu0 %v370
    %846 = vmatpush1.msra.mxu0 %v369
    %847 = vmatprep.subr.mxu0 %v366
    %848 = vmatpush1.msra.mxu0 %v365
    %849 = vmatprep.subr.mxu0 %v362
    %850 = vmatpush1.msra.mxu0 %v361
    %851 = vmatprep.subr.mxu0 %v358
    %852 = vmatpush1.msra.mxu0 %v357
    %853 = vmatprep.subr.mxu0 %v354
    %854 = vmatpush1.msra.mxu0 %v353
    %855 = vmatprep.subr.mxu0 %v350
    %856 = vmatpush1.msra.mxu0 %v349
    %857 = vmatprep.subr.mxu0 %v346
    %858 = vmatpush1.msra.mxu0 %v345
    %859 = vmatprep.subr.mxu0 %v342
    %860 = vmatpush1.msra.mxu0 %v341
    %861 = vmatprep.subr.mxu0 %v338
    %862 = vmatpush1.msra.mxu0 %v337
    %863 = vmatprep.subr.mxu0 %v334
    %864 = vmatpush1.msra.mxu0 %v333
    %865 = vmatprep.subr.mxu0 %v330
    %866 = vmatpush1.msra.mxu0 %v329
    %867 = vmatprep.subr.mxu0 %v326
    %868 = vmatpush1.msra.mxu0 %v325
    %869 = vmatprep.subr.mxu0 %v322
    %870 = vmatpush1.msra.mxu0 %v321
    %871 = vmatprep.subr.mxu0 %v318
    %872 = vmatpush1.msra.mxu0 %v317
    %873 = vmatprep.subr.mxu0 0.0
    %874 = vmatpush2.msra.mxu0 0.0
    %875 = vmatprep.subr.mxu0 0.0
    %876 = vmatpush2.msra.mxu0 0.0
    %877 = vmatprep.subr.mxu0 0.0
    %878 = vmatpush2.msra.mxu0 0.0
    %879 = vmatprep.subr.mxu0 0.0
    %880 = vmatpush2.msra.mxu0 0.0
    %881 = vmatprep.subr.mxu0 0.0
    %882 = vmatpush2.msra.mxu0 0.0
    %883 = vmatprep.subr.mxu0 0.0
    %884 = vmatpush2.msra.mxu0 0.0
    %885 = vmatprep.subr.mxu0 0.0
    %886 = vmatpush2.msra.mxu0 0.0
    %887 = vmatprep.subr.mxu0 0.0
    %888 = vmatpush2.msra.mxu0 0.0
    %889 = vmatprep.subr.mxu0 0.0
    %890 = vmatpush2.msra.mxu0 0.0
    %891 = vmatprep.subr.mxu0 0.0
    %892 = vmatpush2.msra.mxu0 0.0
    %893 = vmatprep.subr.mxu0 0.0
    %894 = vmatpush2.msra.mxu0 0.0
    %895 = vmatprep.subr.mxu0 0.0
    %896 = vmatpush2.msra.mxu0 0.0
    %897 = vmatprep.subr.mxu0 0.0
    %898 = vmatpush2.msra.mxu0 0.0
    %899 = vmatprep.subr.mxu0 0.0
    %900 = vmatpush2.msra.mxu0 0.0
    %901 = vmatprep.subr.mxu0 0.0
    %902 = vmatpush2.msra.mxu0 0.0
    %903 = vmatprep.subr.mxu0 0.0
    %904 = vmatpush2.msra.mxu0 0.0
    %905 = vmatprep.mubr.f32.mxu0 0.0
    %906 = vmatmul.mubr.f32.gmra.mxu0 %v766
    %v907 = vpop.f32.mrf.mxu0
    %v908 = vadd.f32 0.0, %v907
    %v909 = vpop.f32.mrf.mxu0
    %v910 = vadd.f32 0.0, %v909
    %911 = vdwg.mxu0
    %v916 = vcombine.low %v837, %v839
    %v917 = vcombine.low %v908, %v910
    %v919 = vunpack.c.l.s4 1966171168
    %v920 = vunpack.c.0.s8 %v919
    %v921 = vlaneseq
    %v922 = vshrl.u32 %v921, 7
    %v923 = vsub.s32 %v920, %v922
    %v924 = vrot.slane %v916, %v923
    %v926 = vunpack.c.l.s4 1966171168
    %v927 = vunpack.c.0.s8 %v926
    %v928 = vlaneseq
    %v929 = vshrl.u32 %v928, 7
    %v930 = vsub.s32 %v927, %v929
    %v931 = vrot.slane %v917, %v930
    %v932 = vcombine.low %v924, %v931
    %v934 = vunpack.c.l.s4 1966171168
    %v935 = vunpack.c.0.s8 %v934
    %v936 = vlaneseq
    %v937 = vshrl.u32 %v936, 7
    %v938 = vsub.s32 %v935, %v937
    %v939 = vrot.slane %v932, %v938
    %v941 = vadd.f32 %v769, %v939
    %v942 = vxor.u32 %v941, 2147483648
    %v943 = vmul.f32 %v942, 1.442695
    %v944 = vpow.pop %v943
    %v945 = vadd.f32 %v944, 1.0
    %v946 = vrcp.pop %v945
    %v947 = vmul.f32 1.0, %v946
    %v948 = vtanh.pop %v941
    %v950 = vrot.slane %v947, 1
    %v952 = vmul.f32 %v950, %v762
    %v954 = vrot.slane %v948, 2
    %v956 = vmul.f32 %v947, %v954
    %v957 = vadd.f32 %v952, %v956
    %v958 = vtanh.pop %v957
    %v959 = vrot.slane %v947, 3
    %v961 = vmul.f32 %v959, %v958
    %962 = vst [vmem:[#allocation2 + $0x2] sm:$0x1] %v961
    %s963 = scalar_lea.vmem [#allocation3], 3
    %v964 = vld [vmem:[%s963] ss:$8 sm:$0xf]
    %965 = vmatprep.subr.mxu0 %v376
    %966 = vmatpush1.msra.mxu0 %v375
    %967 = vmatprep.subr.mxu0 %v372
    %968 = vmatpush1.msra.mxu0 %v371
    %969 = vmatprep.subr.mxu0 %v368
    %970 = vmatpush1.msra.mxu0 %v367
    %971 = vmatprep.subr.mxu0 %v364
    %972 = vmatpush1.msra.mxu0 %v363
    %973 = vmatprep.subr.mxu0 %v360
    %974 = vmatpush1.msra.mxu0 %v359
    %975 = vmatprep.subr.mxu0 %v356
    %976 = vmatpush1.msra.mxu0 %v355
    %977 = vmatprep.subr.mxu0 %v352
    %978 = vmatpush1.msra.mxu0 %v351
    %979 = vmatprep.subr.mxu0 %v348
    %980 = vmatpush1.msra.mxu0 %v347
    %981 = vmatprep.subr.mxu0 %v344
    %982 = vmatpush1.msra.mxu0 %v343
    %983 = vmatprep.subr.mxu0 %v340
    %984 = vmatpush1.msra.mxu0 %v339
    %985 = vmatprep.subr.mxu0 %v336
    %986 = vmatpush1.msra.mxu0 %v335
    %987 = vmatprep.subr.mxu0 %v332
    %988 = vmatpush1.msra.mxu0 %v331
    %989 = vmatprep.subr.mxu0 %v328
    %990 = vmatpush1.msra.mxu0 %v327
    %991 = vmatprep.subr.mxu0 %v324
    %992 = vmatpush1.msra.mxu0 %v323
    %993 = vmatprep.subr.mxu0 %v320
    %994 = vmatpush1.msra.mxu0 %v319
    %995 = vmatprep.subr.mxu0 %v316
    %996 = vmatpush1.msra.mxu0 %v315
    %997 = vmatprep.subr.mxu0 0.0
    %998 = vmatpush2.msra.mxu0 0.0
    %999 = vmatprep.subr.mxu0 0.0
    %1000 = vmatpush2.msra.mxu0 0.0
    %1001 = vmatprep.subr.mxu0 0.0
    %1002 = vmatpush2.msra.mxu0 0.0
    %1003 = vmatprep.subr.mxu0 0.0
    %1004 = vmatpush2.msra.mxu0 0.0
    %1005 = vmatprep.subr.mxu0 0.0
    %1006 = vmatpush2.msra.mxu0 0.0
    %1007 = vmatprep.subr.mxu0 0.0
    %1008 = vmatpush2.msra.mxu0 0.0
    %1009 = vmatprep.subr.mxu0 0.0
    %1010 = vmatpush2.msra.mxu0 0.0
    %1011 = vmatprep.subr.mxu0 0.0
    %1012 = vmatpush2.msra.mxu0 0.0
    %1013 = vmatprep.subr.mxu0 0.0
    %1014 = vmatpush2.msra.mxu0 0.0
    %1015 = vmatprep.subr.mxu0 0.0
    %1016 = vmatpush2.msra.mxu0 0.0
    %1017 = vmatprep.subr.mxu0 0.0
    %1018 = vmatpush2.msra.mxu0 0.0
    %1019 = vmatprep.subr.mxu0 0.0
    %1020 = vmatpush2.msra.mxu0 0.0
    %1021 = vmatprep.subr.mxu0 0.0
    %1022 = vmatpush2.msra.mxu0 0.0
    %1023 = vmatprep.subr.mxu0 0.0
    %1024 = vmatpush2.msra.mxu0 0.0
    %1025 = vmatprep.subr.mxu0 0.0
    %1026 = vmatpush2.msra.mxu0 0.0
    %1027 = vmatprep.subr.mxu0 0.0
    %1028 = vmatpush2.msra.mxu0 0.0
    %1029 = vmatprep.mubr.f32.mxu0 0.0
    %1030 = vmatmul.mubr.f32.gmra.mxu0 %v961
    %v1031 = vpop.f32.mrf.mxu0
    %v1032 = vadd.f32 0.0, %v1031
    %v1033 = vpop.f32.mrf.mxu0
    %v1034 = vadd.f32 0.0, %v1033
    %1035 = vdwg.mxu0
    %1036 = vmatprep.subr.mxu0 %v378
    %1037 = vmatpush1.msra.mxu0 %v377
    %1038 = vmatprep.subr.mxu0 %v374
    %1039 = vmatpush1.msra.mxu0 %v373
    %1040 = vmatprep.subr.mxu0 %v370
    %1041 = vmatpush1.msra.mxu0 %v369
    %1042 = vmatprep.subr.mxu0 %v366
    %1043 = vmatpush1.msra.mxu0 %v365
    %1044 = vmatprep.subr.mxu0 %v362
    %1045 = vmatpush1.msra.mxu0 %v361
    %1046 = vmatprep.subr.mxu0 %v358
    %1047 = vmatpush1.msra.mxu0 %v357
    %1048 = vmatprep.subr.mxu0 %v354
    %1049 = vmatpush1.msra.mxu0 %v353
    %1050 = vmatprep.subr.mxu0 %v350
    %1051 = vmatpush1.msra.mxu0 %v349
    %1052 = vmatprep.subr.mxu0 %v346
    %1053 = vmatpush1.msra.mxu0 %v345
    %1054 = vmatprep.subr.mxu0 %v342
    %1055 = vmatpush1.msra.mxu0 %v341
    %1056 = vmatprep.subr.mxu0 %v338
    %1057 = vmatpush1.msra.mxu0 %v337
    %1058 = vmatprep.subr.mxu0 %v334
    %1059 = vmatpush1.msra.mxu0 %v333
    %1060 = vmatprep.subr.mxu0 %v330
    %1061 = vmatpush1.msra.mxu0 %v329
    %1062 = vmatprep.subr.mxu0 %v326
    %1063 = vmatpush1.msra.mxu0 %v325
    %1064 = vmatprep.subr.mxu0 %v322
    %1065 = vmatpush1.msra.mxu0 %v321
    %1066 = vmatprep.subr.mxu0 %v318
    %1067 = vmatpush1.msra.mxu0 %v317
    %1068 = vmatprep.subr.mxu0 0.0
    %1069 = vmatpush2.msra.mxu0 0.0
    %1070 = vmatprep.subr.mxu0 0.0
    %1071 = vmatpush2.msra.mxu0 0.0
    %1072 = vmatprep.subr.mxu0 0.0
    %1073 = vmatpush2.msra.mxu0 0.0
    %1074 = vmatprep.subr.mxu0 0.0
    %1075 = vmatpush2.msra.mxu0 0.0
    %1076 = vmatprep.subr.mxu0 0.0
    %1077 = vmatpush2.msra.mxu0 0.0
    %1078 = vmatprep.subr.mxu0 0.0
    %1079 = vmatpush2.msra.mxu0 0.0
    %1080 = vmatprep.subr.mxu0 0.0
    %1081 = vmatpush2.msra.mxu0 0.0
    %1082 = vmatprep.subr.mxu0 0.0
    %1083 = vmatpush2.msra.mxu0 0.0
    %1084 = vmatprep.subr.mxu0 0.0
    %1085 = vmatpush2.msra.mxu0 0.0
    %1086 = vmatprep.subr.mxu0 0.0
    %1087 = vmatpush2.msra.mxu0 0.0
    %1088 = vmatprep.subr.mxu0 0.0
    %1089 = vmatpush2.msra.mxu0 0.0
    %1090 = vmatprep.subr.mxu0 0.0
    %1091 = vmatpush2.msra.mxu0 0.0
    %1092 = vmatprep.subr.mxu0 0.0
    %1093 = vmatpush2.msra.mxu0 0.0
    %1094 = vmatprep.subr.mxu0 0.0
    %1095 = vmatpush2.msra.mxu0 0.0
    %1096 = vmatprep.subr.mxu0 0.0
    %1097 = vmatpush2.msra.mxu0 0.0
    %1098 = vmatprep.subr.mxu0 0.0
    %1099 = vmatpush2.msra.mxu0 0.0
    %1100 = vmatprep.mubr.f32.mxu0 0.0
    %1101 = vmatmul.mubr.f32.gmra.mxu0 %v961
    %v1102 = vpop.f32.mrf.mxu0
    %v1103 = vadd.f32 0.0, %v1102
    %v1104 = vpop.f32.mrf.mxu0
    %v1105 = vadd.f32 0.0, %v1104
    %1106 = vdwg.mxu0
    %v1111 = vcombine.low %v1032, %v1034
    %v1112 = vcombine.low %v1103, %v1105
    %v1114 = vunpack.c.l.s4 1966171168
    %v1115 = vunpack.c.0.s8 %v1114
    %v1116 = vlaneseq
    %v1117 = vshrl.u32 %v1116, 7
    %v1118 = vsub.s32 %v1115, %v1117
    %v1119 = vrot.slane %v1111, %v1118
    %v1121 = vunpack.c.l.s4 1966171168
    %v1122 = vunpack.c.0.s8 %v1121
    %v1123 = vlaneseq
    %v1124 = vshrl.u32 %v1123, 7
    %v1125 = vsub.s32 %v1122, %v1124
    %v1126 = vrot.slane %v1112, %v1125
    %v1127 = vcombine.low %v1119, %v1126
    %v1129 = vunpack.c.l.s4 1966171168
    %v1130 = vunpack.c.0.s8 %v1129
    %v1131 = vlaneseq
    %v1132 = vshrl.u32 %v1131, 7
    %v1133 = vsub.s32 %v1130, %v1132
    %v1134 = vrot.slane %v1127, %v1133
    %v1136 = vadd.f32 %v964, %v1134
    %v1137 = vxor.u32 %v1136, 2147483648
    %v1138 = vmul.f32 %v1137, 1.442695
    %v1139 = vpow.pop %v1138
    %v1140 = vadd.f32 %v1139, 1.0
    %v1141 = vrcp.pop %v1140
    %v1142 = vmul.f32 1.0, %v1141
    %v1143 = vtanh.pop %v1136
    %v1145 = vrot.slane %v1142, 1
    %v1147 = vmul.f32 %v1145, %v957
    %v1149 = vrot.slane %v1143, 2
    %v1151 = vmul.f32 %v1142, %v1149
    %v1152 = vadd.f32 %v1147, %v1151
    %v1153 = vtanh.pop %v1152
    %v1154 = vrot.slane %v1142, 3
    %v1156 = vmul.f32 %v1154, %v1153
    %1157 = vst [vmem:[#allocation2 + $0x3] sm:$0x1] %v1156
    %s1158 = scalar_lea.vmem [#allocation3], 4
    %v1159 = vld [vmem:[%s1158] ss:$8 sm:$0xf]
    %1160 = vmatprep.subr.mxu0 %v376
    %1161 = vmatpush1.msra.mxu0 %v375
    %1162 = vmatprep.subr.mxu0 %v372
    %1163 = vmatpush1.msra.mxu0 %v371
    %1164 = vmatprep.subr.mxu0 %v368
    %1165 = vmatpush1.msra.mxu0 %v367
    %1166 = vmatprep.subr.mxu0 %v364
    %1167 = vmatpush1.msra.mxu0 %v363
    %1168 = vmatprep.subr.mxu0 %v360
    %1169 = vmatpush1.msra.mxu0 %v359
    %1170 = vmatprep.subr.mxu0 %v356
    %1171 = vmatpush1.msra.mxu0 %v355
    %1172 = vmatprep.subr.mxu0 %v352
    %1173 = vmatpush1.msra.mxu0 %v351
    %1174 = vmatprep.subr.mxu0 %v348
    %1175 = vmatpush1.msra.mxu0 %v347
    %1176 = vmatprep.subr.mxu0 %v344
    %1177 = vmatpush1.msra.mxu0 %v343
    %1178 = vmatprep.subr.mxu0 %v340
    %1179 = vmatpush1.msra.mxu0 %v339
    %1180 = vmatprep.subr.mxu0 %v336
    %1181 = vmatpush1.msra.mxu0 %v335
    %1182 = vmatprep.subr.mxu0 %v332
    %1183 = vmatpush1.msra.mxu0 %v331
    %1184 = vmatprep.subr.mxu0 %v328
    %1185 = vmatpush1.msra.mxu0 %v327
    %1186 = vmatprep.subr.mxu0 %v324
    %1187 = vmatpush1.msra.mxu0 %v323
    %1188 = vmatprep.subr.mxu0 %v320
    %1189 = vmatpush1.msra.mxu0 %v319
    %1190 = vmatprep.subr.mxu0 %v316
    %1191 = vmatpush1.msra.mxu0 %v315
    %1192 = vmatprep.subr.mxu0 0.0
    %1193 = vmatpush2.msra.mxu0 0.0
    %1194 = vmatprep.subr.mxu0 0.0
    %1195 = vmatpush2.msra.mxu0 0.0
    %1196 = vmatprep.subr.mxu0 0.0
    %1197 = vmatpush2.msra.mxu0 0.0
    %1198 = vmatprep.subr.mxu0 0.0
    %1199 = vmatpush2.msra.mxu0 0.0
    %1200 = vmatprep.subr.mxu0 0.0
    %1201 = vmatpush2.msra.mxu0 0.0
    %1202 = vmatprep.subr.mxu0 0.0
    %1203 = vmatpush2.msra.mxu0 0.0
    %1204 = vmatprep.subr.mxu0 0.0
    %1205 = vmatpush2.msra.mxu0 0.0
    %1206 = vmatprep.subr.mxu0 0.0
    %1207 = vmatpush2.msra.mxu0 0.0
    %1208 = vmatprep.subr.mxu0 0.0
    %1209 = vmatpush2.msra.mxu0 0.0
    %1210 = vmatprep.subr.mxu0 0.0
    %1211 = vmatpush2.msra.mxu0 0.0
    %1212 = vmatprep.subr.mxu0 0.0
    %1213 = vmatpush2.msra.mxu0 0.0
    %1214 = vmatprep.subr.mxu0 0.0
    %1215 = vmatpush2.msra.mxu0 0.0
    %1216 = vmatprep.subr.mxu0 0.0
    %1217 = vmatpush2.msra.mxu0 0.0
    %1218 = vmatprep.subr.mxu0 0.0
    %1219 = vmatpush2.msra.mxu0 0.0
    %1220 = vmatprep.subr.mxu0 0.0
    %1221 = vmatpush2.msra.mxu0 0.0
    %1222 = vmatprep.subr.mxu0 0.0
    %1223 = vmatpush2.msra.mxu0 0.0
    %1224 = vmatprep.mubr.f32.mxu0 0.0
    %1225 = vmatmul.mubr.f32.gmra.mxu0 %v1156
    %v1226 = vpop.f32.mrf.mxu0
    %v1227 = vadd.f32 0.0, %v1226
    %v1228 = vpop.f32.mrf.mxu0
    %v1229 = vadd.f32 0.0, %v1228
    %1230 = vdwg.mxu0
    %1231 = vmatprep.subr.mxu0 %v378
    %1232 = vmatpush1.msra.mxu0 %v377
    %1233 = vmatprep.subr.mxu0 %v374
    %1234 = vmatpush1.msra.mxu0 %v373
    %1235 = vmatprep.subr.mxu0 %v370
    %1236 = vmatpush1.msra.mxu0 %v369
    %1237 = vmatprep.subr.mxu0 %v366
    %1238 = vmatpush1.msra.mxu0 %v365
    %1239 = vmatprep.subr.mxu0 %v362
    %1240 = vmatpush1.msra.mxu0 %v361
    %1241 = vmatprep.subr.mxu0 %v358
    %1242 = vmatpush1.msra.mxu0 %v357
    %1243 = vmatprep.subr.mxu0 %v354
    %1244 = vmatpush1.msra.mxu0 %v353
    %1245 = vmatprep.subr.mxu0 %v350
    %1246 = vmatpush1.msra.mxu0 %v349
    %1247 = vmatprep.subr.mxu0 %v346
    %1248 = vmatpush1.msra.mxu0 %v345
    %1249 = vmatprep.subr.mxu0 %v342
    %1250 = vmatpush1.msra.mxu0 %v341
    %1251 = vmatprep.subr.mxu0 %v338
    %1252 = vmatpush1.msra.mxu0 %v337
    %1253 = vmatprep.subr.mxu0 %v334
    %1254 = vmatpush1.msra.mxu0 %v333
    %1255 = vmatprep.subr.mxu0 %v330
    %1256 = vmatpush1.msra.mxu0 %v329
    %1257 = vmatprep.subr.mxu0 %v326
    %1258 = vmatpush1.msra.mxu0 %v325
    %1259 = vmatprep.subr.mxu0 %v322
    %1260 = vmatpush1.msra.mxu0 %v321
    %1261 = vmatprep.subr.mxu0 %v318
    %1262 = vmatpush1.msra.mxu0 %v317
    %1263 = vmatprep.subr.mxu0 0.0
    %1264 = vmatpush2.msra.mxu0 0.0
    %1265 = vmatprep.subr.mxu0 0.0
    %1266 = vmatpush2.msra.mxu0 0.0
    %1267 = vmatprep.subr.mxu0 0.0
    %1268 = vmatpush2.msra.mxu0 0.0
    %1269 = vmatprep.subr.mxu0 0.0
    %1270 = vmatpush2.msra.mxu0 0.0
    %1271 = vmatprep.subr.mxu0 0.0
    %1272 = vmatpush2.msra.mxu0 0.0
    %1273 = vmatprep.subr.mxu0 0.0
    %1274 = vmatpush2.msra.mxu0 0.0
    %1275 = vmatprep.subr.mxu0 0.0
    %1276 = vmatpush2.msra.mxu0 0.0
    %1277 = vmatprep.subr.mxu0 0.0
    %1278 = vmatpush2.msra.mxu0 0.0
    %1279 = vmatprep.subr.mxu0 0.0
    %1280 = vmatpush2.msra.mxu0 0.0
    %1281 = vmatprep.subr.mxu0 0.0
    %1282 = vmatpush2.msra.mxu0 0.0
    %1283 = vmatprep.subr.mxu0 0.0
    %1284 = vmatpush2.msra.mxu0 0.0
    %1285 = vmatprep.subr.mxu0 0.0
    %1286 = vmatpush2.msra.mxu0 0.0
    %1287 = vmatprep.subr.mxu0 0.0
    %1288 = vmatpush2.msra.mxu0 0.0
    %1289 = vmatprep.subr.mxu0 0.0
    %1290 = vmatpush2.msra.mxu0 0.0
    %1291 = vmatprep.subr.mxu0 0.0
    %1292 = vmatpush2.msra.mxu0 0.0
    %1293 = vmatprep.subr.mxu0 0.0
    %1294 = vmatpush2.msra.mxu0 0.0
    %1295 = vmatprep.mubr.f32.mxu0 0.0
    %1296 = vmatmul.mubr.f32.gmra.mxu0 %v1156
    %v1297 = vpop.f32.mrf.mxu0
    %v1298 = vadd.f32 0.0, %v1297
    %v1299 = vpop.f32.mrf.mxu0
    %v1300 = vadd.f32 0.0, %v1299
    %1301 = vdwg.mxu0
    %v1306 = vcombine.low %v1227, %v1229
    %v1307 = vcombine.low %v1298, %v1300
    %v1309 = vunpack.c.l.s4 1966171168
    %v1310 = vunpack.c.0.s8 %v1309
    %v1311 = vlaneseq
    %v1312 = vshrl.u32 %v1311, 7
    %v1313 = vsub.s32 %v1310, %v1312
    %v1314 = vrot.slane %v1306, %v1313
    %v1316 = vunpack.c.l.s4 1966171168
    %v1317 = vunpack.c.0.s8 %v1316
    %v1318 = vlaneseq
    %v1319 = vshrl.u32 %v1318, 7
    %v1320 = vsub.s32 %v1317, %v1319
    %v1321 = vrot.slane %v1307, %v1320
    %v1322 = vcombine.low %v1314, %v1321
    %v1324 = vunpack.c.l.s4 1966171168
    %v1325 = vunpack.c.0.s8 %v1324
    %v1326 = vlaneseq
    %v1327 = vshrl.u32 %v1326, 7
    %v1328 = vsub.s32 %v1325, %v1327
    %v1329 = vrot.slane %v1322, %v1328
    %v1331 = vadd.f32 %v1159, %v1329
    %v1332 = vxor.u32 %v1331, 2147483648
    %v1333 = vmul.f32 %v1332, 1.442695
    %v1334 = vpow.pop %v1333
    %v1335 = vadd.f32 %v1334, 1.0
    %v1336 = vrcp.pop %v1335
    %v1337 = vmul.f32 1.0, %v1336
    %v1338 = vtanh.pop %v1331
    %v1340 = vrot.slane %v1337, 1
    %v1342 = vmul.f32 %v1340, %v1152
    %v1344 = vrot.slane %v1338, 2
    %v1346 = vmul.f32 %v1337, %v1344
    %v1347 = vadd.f32 %v1342, %v1346
    %v1348 = vtanh.pop %v1347
    %v1349 = vrot.slane %v1337, 3
    %v1351 = vmul.f32 %v1349, %v1348
    %1352 = vst [vmem:[#allocation2 + $0x4] sm:$0x1] %v1351
    %s1353 = scalar_lea.vmem [#allocation3], 5
    %v1354 = vld [vmem:[%s1353] ss:$8 sm:$0xf]
    %1355 = vmatprep.subr.mxu0 %v376
    %1356 = vmatpush1.msra.mxu0 %v375
    %1357 = vmatprep.subr.mxu0 %v372
    %1358 = vmatpush1.msra.mxu0 %v371
    %1359 = vmatprep.subr.mxu0 %v368
    %1360 = vmatpush1.msra.mxu0 %v367
    %1361 = vmatprep.subr.mxu0 %v364
    %1362 = vmatpush1.msra.mxu0 %v363
    %1363 = vmatprep.subr.mxu0 %v360
    %1364 = vmatpush1.msra.mxu0 %v359
    %1365 = vmatprep.subr.mxu0 %v356
    %1366 = vmatpush1.msra.mxu0 %v355
    %1367 = vmatprep.subr.mxu0 %v352
    %1368 = vmatpush1.msra.mxu0 %v351
    %1369 = vmatprep.subr.mxu0 %v348
    %1370 = vmatpush1.msra.mxu0 %v347
    %1371 = vmatprep.subr.mxu0 %v344
    %1372 = vmatpush1.msra.mxu0 %v343
    %1373 = vmatprep.subr.mxu0 %v340
    %1374 = vmatpush1.msra.mxu0 %v339
    %1375 = vmatprep.subr.mxu0 %v336
    %1376 = vmatpush1.msra.mxu0 %v335
    %1377 = vmatprep.subr.mxu0 %v332
    %1378 = vmatpush1.msra.mxu0 %v331
    %1379 = vmatprep.subr.mxu0 %v328
    %1380 = vmatpush1.msra.mxu0 %v327
    %1381 = vmatprep.subr.mxu0 %v324
    %1382 = vmatpush1.msra.mxu0 %v323
    %1383 = vmatprep.subr.mxu0 %v320
    %1384 = vmatpush1.msra.mxu0 %v319
    %1385 = vmatprep.subr.mxu0 %v316
    %1386 = vmatpush1.msra.mxu0 %v315
    %1387 = vmatprep.subr.mxu0 0.0
    %1388 = vmatpush2.msra.mxu0 0.0
    %1389 = vmatprep.subr.mxu0 0.0
    %1390 = vmatpush2.msra.mxu0 0.0
    %1391 = vmatprep.subr.mxu0 0.0
    %1392 = vmatpush2.msra.mxu0 0.0
    %1393 = vmatprep.subr.mxu0 0.0
    %1394 = vmatpush2.msra.mxu0 0.0
    %1395 = vmatprep.subr.mxu0 0.0
    %1396 = vmatpush2.msra.mxu0 0.0
    %1397 = vmatprep.subr.mxu0 0.0
    %1398 = vmatpush2.msra.mxu0 0.0
    %1399 = vmatprep.subr.mxu0 0.0
    %1400 = vmatpush2.msra.mxu0 0.0
    %1401 = vmatprep.subr.mxu0 0.0
    %1402 = vmatpush2.msra.mxu0 0.0
    %1403 = vmatprep.subr.mxu0 0.0
    %1404 = vmatpush2.msra.mxu0 0.0
    %1405 = vmatprep.subr.mxu0 0.0
    %1406 = vmatpush2.msra.mxu0 0.0
    %1407 = vmatprep.subr.mxu0 0.0
    %1408 = vmatpush2.msra.mxu0 0.0
    %1409 = vmatprep.subr.mxu0 0.0
    %1410 = vmatpush2.msra.mxu0 0.0
    %1411 = vmatprep.subr.mxu0 0.0
    %1412 = vmatpush2.msra.mxu0 0.0
    %1413 = vmatprep.subr.mxu0 0.0
    %1414 = vmatpush2.msra.mxu0 0.0
    %1415 = vmatprep.subr.mxu0 0.0
    %1416 = vmatpush2.msra.mxu0 0.0
    %1417 = vmatprep.subr.mxu0 0.0
    %1418 = vmatpush2.msra.mxu0 0.0
    %1419 = vmatprep.mubr.f32.mxu0 0.0
    %1420 = vmatmul.mubr.f32.gmra.mxu0 %v1351
    %v1421 = vpop.f32.mrf.mxu0
    %v1422 = vadd.f32 0.0, %v1421
    %v1423 = vpop.f32.mrf.mxu0
    %v1424 = vadd.f32 0.0, %v1423
    %1425 = vdwg.mxu0
    %1426 = vmatprep.subr.mxu0 %v378
    %1427 = vmatpush1.msra.mxu0 %v377
    %1428 = vmatprep.subr.mxu0 %v374
    %1429 = vmatpush1.msra.mxu0 %v373
    %1430 = vmatprep.subr.mxu0 %v370
    %1431 = vmatpush1.msra.mxu0 %v369
    %1432 = vmatprep.subr.mxu0 %v366
    %1433 = vmatpush1.msra.mxu0 %v365
    %1434 = vmatprep.subr.mxu0 %v362
    %1435 = vmatpush1.msra.mxu0 %v361
    %1436 = vmatprep.subr.mxu0 %v358
    %1437 = vmatpush1.msra.mxu0 %v357
    %1438 = vmatprep.subr.mxu0 %v354
    %1439 = vmatpush1.msra.mxu0 %v353
    %1440 = vmatprep.subr.mxu0 %v350
    %1441 = vmatpush1.msra.mxu0 %v349
    %1442 = vmatprep.subr.mxu0 %v346
    %1443 = vmatpush1.msra.mxu0 %v345
    %1444 = vmatprep.subr.mxu0 %v342
    %1445 = vmatpush1.msra.mxu0 %v341
    %1446 = vmatprep.subr.mxu0 %v338
    %1447 = vmatpush1.msra.mxu0 %v337
    %1448 = vmatprep.subr.mxu0 %v334
    %1449 = vmatpush1.msra.mxu0 %v333
    %1450 = vmatprep.subr.mxu0 %v330
    %1451 = vmatpush1.msra.mxu0 %v329
    %1452 = vmatprep.subr.mxu0 %v326
    %1453 = vmatpush1.msra.mxu0 %v325
    %1454 = vmatprep.subr.mxu0 %v322
    %1455 = vmatpush1.msra.mxu0 %v321
    %1456 = vmatprep.subr.mxu0 %v318
    %1457 = vmatpush1.msra.mxu0 %v317
    %1458 = vmatprep.subr.mxu0 0.0
    %1459 = vmatpush2.msra.mxu0 0.0
    %1460 = vmatprep.subr.mxu0 0.0
    %1461 = vmatpush2.msra.mxu0 0.0
    %1462 = vmatprep.subr.mxu0 0.0
    %1463 = vmatpush2.msra.mxu0 0.0
    %1464 = vmatprep.subr.mxu0 0.0
    %1465 = vmatpush2.msra.mxu0 0.0
    %1466 = vmatprep.subr.mxu0 0.0
    %1467 = vmatpush2.msra.mxu0 0.0
    %1468 = vmatprep.subr.mxu0 0.0
    %1469 = vmatpush2.msra.mxu0 0.0
    %1470 = vmatprep.subr.mxu0 0.0
    %1471 = vmatpush2.msra.mxu0 0.0
    %1472 = vmatprep.subr.mxu0 0.0
    %1473 = vmatpush2.msra.mxu0 0.0
    %1474 = vmatprep.subr.mxu0 0.0
    %1475 = vmatpush2.msra.mxu0 0.0
    %1476 = vmatprep.subr.mxu0 0.0
    %1477 = vmatpush2.msra.mxu0 0.0
    %1478 = vmatprep.subr.mxu0 0.0
    %1479 = vmatpush2.msra.mxu0 0.0
    %1480 = vmatprep.subr.mxu0 0.0
    %1481 = vmatpush2.msra.mxu0 0.0
    %1482 = vmatprep.subr.mxu0 0.0
    %1483 = vmatpush2.msra.mxu0 0.0
    %1484 = vmatprep.subr.mxu0 0.0
    %1485 = vmatpush2.msra.mxu0 0.0
    %1486 = vmatprep.subr.mxu0 0.0
    %1487 = vmatpush2.msra.mxu0 0.0
    %1488 = vmatprep.subr.mxu0 0.0
    %1489 = vmatpush2.msra.mxu0 0.0
    %1490 = vmatprep.mubr.f32.mxu0 0.0
    %1491 = vmatmul.mubr.f32.gmra.mxu0 %v1351
    %v1492 = vpop.f32.mrf.mxu0
    %v1493 = vadd.f32 0.0, %v1492
    %v1494 = vpop.f32.mrf.mxu0
    %v1495 = vadd.f32 0.0, %v1494
    %1496 = vdwg.mxu0
    %v1501 = vcombine.low %v1422, %v1424
    %v1502 = vcombine.low %v1493, %v1495
    %v1504 = vunpack.c.l.s4 1966171168
    %v1505 = vunpack.c.0.s8 %v1504
    %v1506 = vlaneseq
    %v1507 = vshrl.u32 %v1506, 7
    %v1508 = vsub.s32 %v1505, %v1507
    %v1509 = vrot.slane %v1501, %v1508
    %v1511 = vunpack.c.l.s4 1966171168
    %v1512 = vunpack.c.0.s8 %v1511
    %v1513 = vlaneseq
    %v1514 = vshrl.u32 %v1513, 7
    %v1515 = vsub.s32 %v1512, %v1514
    %v1516 = vrot.slane %v1502, %v1515
    %v1517 = vcombine.low %v1509, %v1516
    %v1519 = vunpack.c.l.s4 1966171168
    %v1520 = vunpack.c.0.s8 %v1519
    %v1521 = vlaneseq
    %v1522 = vshrl.u32 %v1521, 7
    %v1523 = vsub.s32 %v1520, %v1522
    %v1524 = vrot.slane %v1517, %v1523
    %v1526 = vadd.f32 %v1354, %v1524
    %v1527 = vxor.u32 %v1526, 2147483648
    %v1528 = vmul.f32 %v1527, 1.442695
    %v1529 = vpow.pop %v1528
    %v1530 = vadd.f32 %v1529, 1.0
    %v1531 = vrcp.pop %v1530
    %v1532 = vmul.f32 1.0, %v1531
    %v1533 = vtanh.pop %v1526
    %v1535 = vrot.slane %v1532, 1
    %v1537 = vmul.f32 %v1535, %v1347
    %v1539 = vrot.slane %v1533, 2
    %v1541 = vmul.f32 %v1532, %v1539
    %v1542 = vadd.f32 %v1537, %v1541
    %v1543 = vtanh.pop %v1542
    %v1544 = vrot.slane %v1532, 3
    %v1546 = vmul.f32 %v1544, %v1543
    %1547 = vst [vmem:[#allocation2 + $0x5] sm:$0x1] %v1546
    %s1548 = scalar_lea.vmem [#allocation3], 6
    %v1549 = vld [vmem:[%s1548] ss:$8 sm:$0xf]
    %1550 = vmatprep.subr.mxu0 %v376
    %1551 = vmatpush1.msra.mxu0 %v375
    %1552 = vmatprep.subr.mxu0 %v372
    %1553 = vmatpush1.msra.mxu0 %v371
    %1554 = vmatprep.subr.mxu0 %v368
    %1555 = vmatpush1.msra.mxu0 %v367
    %1556 = vmatprep.subr.mxu0 %v364
    %1557 = vmatpush1.msra.mxu0 %v363
    %1558 = vmatprep.subr.mxu0 %v360
    %1559 = vmatpush1.msra.mxu0 %v359
    %1560 = vmatprep.subr.mxu0 %v356
    %1561 = vmatpush1.msra.mxu0 %v355
    %1562 = vmatprep.subr.mxu0 %v352
    %1563 = vmatpush1.msra.mxu0 %v351
    %1564 = vmatprep.subr.mxu0 %v348
    %1565 = vmatpush1.msra.mxu0 %v347
    %1566 = vmatprep.subr.mxu0 %v344
    %1567 = vmatpush1.msra.mxu0 %v343
    %1568 = vmatprep.subr.mxu0 %v340
    %1569 = vmatpush1.msra.mxu0 %v339
    %1570 = vmatprep.subr.mxu0 %v336
    %1571 = vmatpush1.msra.mxu0 %v335
    %1572 = vmatprep.subr.mxu0 %v332
    %1573 = vmatpush1.msra.mxu0 %v331
    %1574 = vmatprep.subr.mxu0 %v328
    %1575 = vmatpush1.msra.mxu0 %v327
    %1576 = vmatprep.subr.mxu0 %v324
    %1577 = vmatpush1.msra.mxu0 %v323
    %1578 = vmatprep.subr.mxu0 %v320
    %1579 = vmatpush1.msra.mxu0 %v319
    %1580 = vmatprep.subr.mxu0 %v316
    %1581 = vmatpush1.msra.mxu0 %v315
    %1582 = vmatprep.subr.mxu0 0.0
    %1583 = vmatpush2.msra.mxu0 0.0
    %1584 = vmatprep.subr.mxu0 0.0
    %1585 = vmatpush2.msra.mxu0 0.0
    %1586 = vmatprep.subr.mxu0 0.0
    %1587 = vmatpush2.msra.mxu0 0.0
    %1588 = vmatprep.subr.mxu0 0.0
    %1589 = vmatpush2.msra.mxu0 0.0
    %1590 = vmatprep.subr.mxu0 0.0
    %1591 = vmatpush2.msra.mxu0 0.0
    %1592 = vmatprep.subr.mxu0 0.0
    %1593 = vmatpush2.msra.mxu0 0.0
    %1594 = vmatprep.subr.mxu0 0.0
    %1595 = vmatpush2.msra.mxu0 0.0
    %1596 = vmatprep.subr.mxu0 0.0
    %1597 = vmatpush2.msra.mxu0 0.0
    %1598 = vmatprep.subr.mxu0 0.0
    %1599 = vmatpush2.msra.mxu0 0.0
    %1600 = vmatprep.subr.mxu0 0.0
    %1601 = vmatpush2.msra.mxu0 0.0
    %1602 = vmatprep.subr.mxu0 0.0
    %1603 = vmatpush2.msra.mxu0 0.0
    %1604 = vmatprep.subr.mxu0 0.0
    %1605 = vmatpush2.msra.mxu0 0.0
    %1606 = vmatprep.subr.mxu0 0.0
    %1607 = vmatpush2.msra.mxu0 0.0
    %1608 = vmatprep.subr.mxu0 0.0
    %1609 = vmatpush2.msra.mxu0 0.0
    %1610 = vmatprep.subr.mxu0 0.0
    %1611 = vmatpush2.msra.mxu0 0.0
    %1612 = vmatprep.subr.mxu0 0.0
    %1613 = vmatpush2.msra.mxu0 0.0
    %1614 = vmatprep.mubr.f32.mxu0 0.0
    %1615 = vmatmul.mubr.f32.gmra.mxu0 %v1546
    %v1616 = vpop.f32.mrf.mxu0
    %v1617 = vadd.f32 0.0, %v1616
    %v1618 = vpop.f32.mrf.mxu0
    %v1619 = vadd.f32 0.0, %v1618
    %1620 = vdwg.mxu0
    %1621 = vmatprep.subr.mxu0 %v378
    %1622 = vmatpush1.msra.mxu0 %v377
    %1623 = vmatprep.subr.mxu0 %v374
    %1624 = vmatpush1.msra.mxu0 %v373
    %1625 = vmatprep.subr.mxu0 %v370
    %1626 = vmatpush1.msra.mxu0 %v369
    %1627 = vmatprep.subr.mxu0 %v366
    %1628 = vmatpush1.msra.mxu0 %v365
    %1629 = vmatprep.subr.mxu0 %v362
    %1630 = vmatpush1.msra.mxu0 %v361
    %1631 = vmatprep.subr.mxu0 %v358
    %1632 = vmatpush1.msra.mxu0 %v357
    %1633 = vmatprep.subr.mxu0 %v354
    %1634 = vmatpush1.msra.mxu0 %v353
    %1635 = vmatprep.subr.mxu0 %v350
    %1636 = vmatpush1.msra.mxu0 %v349
    %1637 = vmatprep.subr.mxu0 %v346
    %1638 = vmatpush1.msra.mxu0 %v345
    %1639 = vmatprep.subr.mxu0 %v342
    %1640 = vmatpush1.msra.mxu0 %v341
    %1641 = vmatprep.subr.mxu0 %v338
    %1642 = vmatpush1.msra.mxu0 %v337
    %1643 = vmatprep.subr.mxu0 %v334
    %1644 = vmatpush1.msra.mxu0 %v333
    %1645 = vmatprep.subr.mxu0 %v330
    %1646 = vmatpush1.msra.mxu0 %v329
    %1647 = vmatprep.subr.mxu0 %v326
    %1648 = vmatpush1.msra.mxu0 %v325
    %1649 = vmatprep.subr.mxu0 %v322
    %1650 = vmatpush1.msra.mxu0 %v321
    %1651 = vmatprep.subr.mxu0 %v318
    %1652 = vmatpush1.msra.mxu0 %v317
    %1653 = vmatprep.subr.mxu0 0.0
    %1654 = vmatpush2.msra.mxu0 0.0
    %1655 = vmatprep.subr.mxu0 0.0
    %1656 = vmatpush2.msra.mxu0 0.0
    %1657 = vmatprep.subr.mxu0 0.0
    %1658 = vmatpush2.msra.mxu0 0.0
    %1659 = vmatprep.subr.mxu0 0.0
    %1660 = vmatpush2.msra.mxu0 0.0
    %1661 = vmatprep.subr.mxu0 0.0
    %1662 = vmatpush2.msra.mxu0 0.0
    %1663 = vmatprep.subr.mxu0 0.0
    %1664 = vmatpush2.msra.mxu0 0.0
    %1665 = vmatprep.subr.mxu0 0.0
    %1666 = vmatpush2.msra.mxu0 0.0
    %1667 = vmatprep.subr.mxu0 0.0
    %1668 = vmatpush2.msra.mxu0 0.0
    %1669 = vmatprep.subr.mxu0 0.0
    %1670 = vmatpush2.msra.mxu0 0.0
    %1671 = vmatprep.subr.mxu0 0.0
    %1672 = vmatpush2.msra.mxu0 0.0
    %1673 = vmatprep.subr.mxu0 0.0
    %1674 = vmatpush2.msra.mxu0 0.0
    %1675 = vmatprep.subr.mxu0 0.0
    %1676 = vmatpush2.msra.mxu0 0.0
    %1677 = vmatprep.subr.mxu0 0.0
    %1678 = vmatpush2.msra.mxu0 0.0
    %1679 = vmatprep.subr.mxu0 0.0
    %1680 = vmatpush2.msra.mxu0 0.0
    %1681 = vmatprep.subr.mxu0 0.0
    %1682 = vmatpush2.msra.mxu0 0.0
    %1683 = vmatprep.subr.mxu0 0.0
    %1684 = vmatpush2.msra.mxu0 0.0
    %1685 = vmatprep.mubr.f32.mxu0 0.0
    %1686 = vmatmul.mubr.f32.gmra.mxu0 %v1546
    %v1687 = vpop.f32.mrf.mxu0
    %v1688 = vadd.f32 0.0, %v1687
    %v1689 = vpop.f32.mrf.mxu0
    %v1690 = vadd.f32 0.0, %v1689
    %1691 = vdwg.mxu0
    %v1696 = vcombine.low %v1617, %v1619
    %v1697 = vcombine.low %v1688, %v1690
    %v1699 = vunpack.c.l.s4 1966171168
    %v1700 = vunpack.c.0.s8 %v1699
    %v1701 = vlaneseq
    %v1702 = vshrl.u32 %v1701, 7
    %v1703 = vsub.s32 %v1700, %v1702
    %v1704 = vrot.slane %v1696, %v1703
    %v1706 = vunpack.c.l.s4 1966171168
    %v1707 = vunpack.c.0.s8 %v1706
    %v1708 = vlaneseq
    %v1709 = vshrl.u32 %v1708, 7
    %v1710 = vsub.s32 %v1707, %v1709
    %v1711 = vrot.slane %v1697, %v1710
    %v1712 = vcombine.low %v1704, %v1711
    %v1714 = vunpack.c.l.s4 1966171168
    %v1715 = vunpack.c.0.s8 %v1714
    %v1716 = vlaneseq
    %v1717 = vshrl.u32 %v1716, 7
    %v1718 = vsub.s32 %v1715, %v1717
    %v1719 = vrot.slane %v1712, %v1718
    %v1721 = vadd.f32 %v1549, %v1719
    %v1722 = vxor.u32 %v1721, 2147483648
    %v1723 = vmul.f32 %v1722, 1.442695
    %v1724 = vpow.pop %v1723
    %v1725 = vadd.f32 %v1724, 1.0
    %v1726 = vrcp.pop %v1725
    %v1727 = vmul.f32 1.0, %v1726
    %v1728 = vtanh.pop %v1721
    %v1730 = vrot.slane %v1727, 1
    %v1732 = vmul.f32 %v1730, %v1542
    %v1734 = vrot.slane %v1728, 2
    %v1736 = vmul.f32 %v1727, %v1734
    %v1737 = vadd.f32 %v1732, %v1736
    %v1738 = vtanh.pop %v1737
    %v1739 = vrot.slane %v1727, 3
    %v1741 = vmul.f32 %v1739, %v1738
    %1742 = vst [vmem:[#allocation2 + $0x6] sm:$0x1] %v1741
    %s1743 = scalar_lea.vmem [#allocation3], 7
    %v1744 = vld [vmem:[%s1743] ss:$8 sm:$0xf]
    %1745 = vmatprep.subr.mxu0 %v376
    %1746 = vmatpush1.msra.mxu0 %v375
    %1747 = vmatprep.subr.mxu0 %v372
    %1748 = vmatpush1.msra.mxu0 %v371
    %1749 = vmatprep.subr.mxu0 %v368
    %1750 = vmatpush1.msra.mxu0 %v367
    %1751 = vmatprep.subr.mxu0 %v364
    %1752 = vmatpush1.msra.mxu0 %v363
    %1753 = vmatprep.subr.mxu0 %v360
    %1754 = vmatpush1.msra.mxu0 %v359
    %1755 = vmatprep.subr.mxu0 %v356
    %1756 = vmatpush1.msra.mxu0 %v355
    %1757 = vmatprep.subr.mxu0 %v352
    %1758 = vmatpush1.msra.mxu0 %v351
    %1759 = vmatprep.subr.mxu0 %v348
    %1760 = vmatpush1.msra.mxu0 %v347
    %1761 = vmatprep.subr.mxu0 %v344
    %1762 = vmatpush1.msra.mxu0 %v343
    %1763 = vmatprep.subr.mxu0 %v340
    %1764 = vmatpush1.msra.mxu0 %v339
    %1765 = vmatprep.subr.mxu0 %v336
    %1766 = vmatpush1.msra.mxu0 %v335
    %1767 = vmatprep.subr.mxu0 %v332
    %1768 = vmatpush1.msra.mxu0 %v331
    %1769 = vmatprep.subr.mxu0 %v328
    %1770 = vmatpush1.msra.mxu0 %v327
    %1771 = vmatprep.subr.mxu0 %v324
    %1772 = vmatpush1.msra.mxu0 %v323
    %1773 = vmatprep.subr.mxu0 %v320
    %1774 = vmatpush1.msra.mxu0 %v319
    %1775 = vmatprep.subr.mxu0 %v316
    %1776 = vmatpush1.msra.mxu0 %v315
    %1777 = vmatprep.subr.mxu0 0.0
    %1778 = vmatpush2.msra.mxu0 0.0
    %1779 = vmatprep.subr.mxu0 0.0
    %1780 = vmatpush2.msra.mxu0 0.0
    %1781 = vmatprep.subr.mxu0 0.0
    %1782 = vmatpush2.msra.mxu0 0.0
    %1783 = vmatprep.subr.mxu0 0.0
    %1784 = vmatpush2.msra.mxu0 0.0
    %1785 = vmatprep.subr.mxu0 0.0
    %1786 = vmatpush2.msra.mxu0 0.0
    %1787 = vmatprep.subr.mxu0 0.0
    %1788 = vmatpush2.msra.mxu0 0.0
    %1789 = vmatprep.subr.mxu0 0.0
    %1790 = vmatpush2.msra.mxu0 0.0
    %1791 = vmatprep.subr.mxu0 0.0
    %1792 = vmatpush2.msra.mxu0 0.0
    %1793 = vmatprep.subr.mxu0 0.0
    %1794 = vmatpush2.msra.mxu0 0.0
    %1795 = vmatprep.subr.mxu0 0.0
    %1796 = vmatpush2.msra.mxu0 0.0
    %1797 = vmatprep.subr.mxu0 0.0
    %1798 = vmatpush2.msra.mxu0 0.0
    %1799 = vmatprep.subr.mxu0 0.0
    %1800 = vmatpush2.msra.mxu0 0.0
    %1801 = vmatprep.subr.mxu0 0.0
    %1802 = vmatpush2.msra.mxu0 0.0
    %1803 = vmatprep.subr.mxu0 0.0
    %1804 = vmatpush2.msra.mxu0 0.0
    %1805 = vmatprep.subr.mxu0 0.0
    %1806 = vmatpush2.msra.mxu0 0.0
    %1807 = vmatprep.subr.mxu0 0.0
    %1808 = vmatpush2.msra.mxu0 0.0
    %1809 = vmatprep.mubr.f32.mxu0 0.0
    %1810 = vmatmul.mubr.f32.gmra.mxu0 %v1741
    %v1811 = vpop.f32.mrf.mxu0
    %v1812 = vadd.f32 0.0, %v1811
    %v1813 = vpop.f32.mrf.mxu0
    %v1814 = vadd.f32 0.0, %v1813
    %1815 = vdwg.mxu0
    %1816 = vmatprep.subr.mxu0 %v378
    %1817 = vmatpush1.msra.mxu0 %v377
    %1818 = vmatprep.subr.mxu0 %v374
    %1819 = vmatpush1.msra.mxu0 %v373
    %1820 = vmatprep.subr.mxu0 %v370
    %1821 = vmatpush1.msra.mxu0 %v369
    %1822 = vmatprep.subr.mxu0 %v366
    %1823 = vmatpush1.msra.mxu0 %v365
    %1824 = vmatprep.subr.mxu0 %v362
    %1825 = vmatpush1.msra.mxu0 %v361
    %1826 = vmatprep.subr.mxu0 %v358
    %1827 = vmatpush1.msra.mxu0 %v357
    %1828 = vmatprep.subr.mxu0 %v354
    %1829 = vmatpush1.msra.mxu0 %v353
    %1830 = vmatprep.subr.mxu0 %v350
    %1831 = vmatpush1.msra.mxu0 %v349
    %1832 = vmatprep.subr.mxu0 %v346
    %1833 = vmatpush1.msra.mxu0 %v345
    %1834 = vmatprep.subr.mxu0 %v342
    %1835 = vmatpush1.msra.mxu0 %v341
    %1836 = vmatprep.subr.mxu0 %v338
    %1837 = vmatpush1.msra.mxu0 %v337
    %1838 = vmatprep.subr.mxu0 %v334
    %1839 = vmatpush1.msra.mxu0 %v333
    %1840 = vmatprep.subr.mxu0 %v330
    %1841 = vmatpush1.msra.mxu0 %v329
    %1842 = vmatprep.subr.mxu0 %v326
    %1843 = vmatpush1.msra.mxu0 %v325
    %1844 = vmatprep.subr.mxu0 %v322
    %1845 = vmatpush1.msra.mxu0 %v321
    %1846 = vmatprep.subr.mxu0 %v318
    %1847 = vmatpush1.msra.mxu0 %v317
    %1848 = vmatprep.subr.mxu0 0.0
    %1849 = vmatpush2.msra.mxu0 0.0
    %1850 = vmatprep.subr.mxu0 0.0
    %1851 = vmatpush2.msra.mxu0 0.0
    %1852 = vmatprep.subr.mxu0 0.0
    %1853 = vmatpush2.msra.mxu0 0.0
    %1854 = vmatprep.subr.mxu0 0.0
    %1855 = vmatpush2.msra.mxu0 0.0
    %1856 = vmatprep.subr.mxu0 0.0
    %1857 = vmatpush2.msra.mxu0 0.0
    %1858 = vmatprep.subr.mxu0 0.0
    %1859 = vmatpush2.msra.mxu0 0.0
    %1860 = vmatprep.subr.mxu0 0.0
    %1861 = vmatpush2.msra.mxu0 0.0
    %1862 = vmatprep.subr.mxu0 0.0
    %1863 = vmatpush2.msra.mxu0 0.0
    %1864 = vmatprep.subr.mxu0 0.0
    %1865 = vmatpush2.msra.mxu0 0.0
    %1866 = vmatprep.subr.mxu0 0.0
    %1867 = vmatpush2.msra.mxu0 0.0
    %1868 = vmatprep.subr.mxu0 0.0
    %1869 = vmatpush2.msra.mxu0 0.0
    %1870 = vmatprep.subr.mxu0 0.0
    %1871 = vmatpush2.msra.mxu0 0.0
    %1872 = vmatprep.subr.mxu0 0.0
    %1873 = vmatpush2.msra.mxu0 0.0
    %1874 = vmatprep.subr.mxu0 0.0
    %1875 = vmatpush2.msra.mxu0 0.0
    %1876 = vmatprep.subr.mxu0 0.0
    %1877 = vmatpush2.msra.mxu0 0.0
    %1878 = vmatprep.subr.mxu0 0.0
    %1879 = vmatpush2.msra.mxu0 0.0
    %1880 = vmatprep.mubr.f32.mxu0 0.0
    %1881 = vmatmul.mubr.f32.gmra.mxu0 %v1741
    %v1882 = vpop.f32.mrf.mxu0
    %v1883 = vadd.f32 0.0, %v1882
    %v1884 = vpop.f32.mrf.mxu0
    %v1885 = vadd.f32 0.0, %v1884
    %1886 = vdwg.mxu0
    %v1891 = vcombine.low %v1812, %v1814
    %v1892 = vcombine.low %v1883, %v1885
    %v1894 = vunpack.c.l.s4 1966171168
    %v1895 = vunpack.c.0.s8 %v1894
    %v1896 = vlaneseq
    %v1897 = vshrl.u32 %v1896, 7
    %v1898 = vsub.s32 %v1895, %v1897
    %v1899 = vrot.slane %v1891, %v1898
    %v1901 = vunpack.c.l.s4 1966171168
    %v1902 = vunpack.c.0.s8 %v1901
    %v1903 = vlaneseq
    %v1904 = vshrl.u32 %v1903, 7
    %v1905 = vsub.s32 %v1902, %v1904
    %v1906 = vrot.slane %v1892, %v1905
    %v1907 = vcombine.low %v1899, %v1906
    %v1909 = vunpack.c.l.s4 1966171168
    %v1910 = vunpack.c.0.s8 %v1909
    %v1911 = vlaneseq
    %v1912 = vshrl.u32 %v1911, 7
    %v1913 = vsub.s32 %v1910, %v1912
    %v1914 = vrot.slane %v1907, %v1913
    %v1916 = vadd.f32 %v1744, %v1914
    %v1917 = vxor.u32 %v1916, 2147483648
    %v1918 = vmul.f32 %v1917, 1.442695
    %v1919 = vpow.pop %v1918
    %v1920 = vadd.f32 %v1919, 1.0
    %v1921 = vrcp.pop %v1920
    %v1922 = vmul.f32 1.0, %v1921
    %v1923 = vtanh.pop %v1916
    %v1925 = vrot.slane %v1922, 1
    %v1927 = vmul.f32 %v1925, %v1737
    %v1929 = vrot.slane %v1923, 2
    %v1931 = vmul.f32 %v1922, %v1929
    %v1932 = vadd.f32 %v1927, %v1931
    %v1933 = vtanh.pop %v1932
    %v1934 = vrot.slane %v1922, 3
    %v1936 = vmul.f32 %v1934, %v1933
    %1937 = vst [vmem:[#allocation2 + $0x7] sm:$0x1] %v1936
    %v1938 = vld [vmem:[#allocation2] sm:$0xff]
    %v1939 = vld [vmem:[#allocation10] sm:$0xff]
    %v1940 = vld [vmem:[#allocation10 + $0x8] sm:$0xff]
    %v1941 = vld [vmem:[#allocation10 + $0x10] sm:$0xff]
    %v1942 = vld [vmem:[#allocation10 + $0x18] sm:$0xff]
    %v1943 = vld [vmem:[#allocation10 + $0x20] sm:$0xff]
    %v1944 = vld [vmem:[#allocation10 + $0x28] sm:$0xff]
    %v1945 = vld [vmem:[#allocation10 + $0x30] sm:$0xff]
    %v1946 = vld [vmem:[#allocation10 + $0x38] sm:$0xff]
    %v1947 = vld [vmem:[#allocation10 + $0x40] sm:$0xff]
    %v1948 = vld [vmem:[#allocation10 + $0x48] sm:$0xff]
    %v1949 = vld [vmem:[#allocation10 + $0x50] sm:$0xff]
    %v1950 = vld [vmem:[#allocation10 + $0x58] sm:$0xff]
    %v1951 = vld [vmem:[#allocation10 + $0x60] sm:$0xff]
    %v1952 = vld [vmem:[#allocation10 + $0x68] sm:$0xff]
    %v1953 = vld [vmem:[#allocation10 + $0x70] sm:$0xff]
    %v1954 = vld [vmem:[#allocation10 + $0x78] sm:$0xff]
    %v1955 = vld [vmem:[#allocation10 + $0x80] sm:$0xff]
    %v1956 = vld [vmem:[#allocation10 + $0x88] sm:$0xff]
    %v1957 = vld [vmem:[#allocation10 + $0x90] sm:$0xff]
    %v1958 = vld [vmem:[#allocation10 + $0x98] sm:$0xff]
    %v1959 = vld [vmem:[#allocation10 + $0xa0] sm:$0xff]
    %v1960 = vld [vmem:[#allocation10 + $0xa8] sm:$0xff]
    %v1961 = vld [vmem:[#allocation10 + $0xb0] sm:$0xff]
    %v1962 = vld [vmem:[#allocation10 + $0xb8] sm:$0xff]
    %v1963 = vld [vmem:[#allocation10 + $0xc0] sm:$0xff]
    %v1964 = vld [vmem:[#allocation10 + $0xc8] sm:$0xff]
    %v1965 = vld [vmem:[#allocation10 + $0xd0] sm:$0xff]
    %v1966 = vld [vmem:[#allocation10 + $0xd8] sm:$0xff]
    %v1967 = vld [vmem:[#allocation10 + $0xe0] sm:$0xff]
    %v1968 = vld [vmem:[#allocation10 + $0xe8] sm:$0xff]
    %v1969 = vld [vmem:[#allocation10 + $0xf0] sm:$0xff]
    %v1970 = vld [vmem:[#allocation10 + $0xf8] sm:$0xff]
    %v1971 = vld [vmem:[#allocation10 + $0x100] sm:$0xff]
    %v1972 = vld [vmem:[#allocation10 + $0x108] sm:$0xff]
    %v1973 = vld [vmem:[#allocation10 + $0x110] sm:$0xff]
    %v1974 = vld [vmem:[#allocation10 + $0x118] sm:$0xff]
    %v1975 = vld [vmem:[#allocation10 + $0x120] sm:$0xff]
    %v1976 = vld [vmem:[#allocation10 + $0x128] sm:$0xff]
    %v1977 = vld [vmem:[#allocation10 + $0x130] sm:$0xff]
    %v1978 = vld [vmem:[#allocation10 + $0x138] sm:$0xff]
    %v1979 = vld [vmem:[#allocation10 + $0x140] sm:$0xff]
    %v1980 = vld [vmem:[#allocation10 + $0x148] sm:$0xff]
    %v1981 = vld [vmem:[#allocation10 + $0x150] sm:$0xff]
    %v1982 = vld [vmem:[#allocation10 + $0x158] sm:$0xff]
    %v1983 = vld [vmem:[#allocation10 + $0x160] sm:$0xff]
    %v1984 = vld [vmem:[#allocation10 + $0x168] sm:$0xff]
    %v1985 = vld [vmem:[#allocation10 + $0x170] sm:$0xff]
    %v1986 = vld [vmem:[#allocation10 + $0x178] sm:$0xff]
    %v1987 = vld [vmem:[#allocation10 + $0x180] sm:$0xff]
    %v1988 = vld [vmem:[#allocation10 + $0x188] sm:$0xff]
    %v1989 = vld [vmem:[#allocation10 + $0x190] sm:$0xff]
    %v1990 = vld [vmem:[#allocation10 + $0x198] sm:$0xff]
    %v1991 = vld [vmem:[#allocation10 + $0x1a0] sm:$0xff]
    %v1992 = vld [vmem:[#allocation10 + $0x1a8] sm:$0xff]
    %v1993 = vld [vmem:[#allocation10 + $0x1b0] sm:$0xff]
    %v1994 = vld [vmem:[#allocation10 + $0x1b8] sm:$0xff]
    %v1995 = vld [vmem:[#allocation10 + $0x1c0] sm:$0xff]
    %v1996 = vld [vmem:[#allocation10 + $0x1c8] sm:$0xff]
    %v1997 = vld [vmem:[#allocation10 + $0x1d0] sm:$0xff]
    %v1998 = vld [vmem:[#allocation10 + $0x1d8] sm:$0xff]
    %v1999 = vld [vmem:[#allocation10 + $0x1e0] sm:$0xff]
    %v2000 = vld [vmem:[#allocation10 + $0x1e8] sm:$0xff]
    %v2001 = vld [vmem:[#allocation10 + $0x1f0] sm:$0xff]
    %v2002 = vld [vmem:[#allocation10 + $0x1f8] sm:$0xff]
    %v2003 = vld [vmem:[%s6] sm:$0xf]
    %v2005 = vlaneseq
    %v2006 = vshrl.u32 %v2005, 7
    %v2007 = vsub.s32 0, %v2006
    %v2008 = vrot.slane %v2003, %v2007
    %v2009 = vlaneseq
    %v2010 = vshrl.u32 %v2009, 7
    %v2011 = vsub.s32 1, %v2010
    %v2012 = vrot.slane %v2003, %v2011
    %v2013 = vlaneseq
    %v2014 = vshrl.u32 %v2013, 7
    %v2015 = vsub.s32 2, %v2014
    %v2016 = vrot.slane %v2003, %v2015
    %v2017 = vlaneseq
    %v2018 = vshrl.u32 %v2017, 7
    %v2019 = vsub.s32 3, %v2018
    %v2020 = vrot.slane %v2003, %v2019
    %2025 = vmatprep.subr.mxu0 %v2000
    %2026 = vmatpush1.msra.mxu0 %v1999
    %2027 = vmatprep.subr.mxu0 %v1996
    %2028 = vmatpush1.msra.mxu0 %v1995
    %2029 = vmatprep.subr.mxu0 %v1992
    %2030 = vmatpush1.msra.mxu0 %v1991
    %2031 = vmatprep.subr.mxu0 %v1988
    %2032 = vmatpush1.msra.mxu0 %v1987
    %2033 = vmatprep.subr.mxu0 %v1984
    %2034 = vmatpush1.msra.mxu0 %v1983
    %2035 = vmatprep.subr.mxu0 %v1980
    %2036 = vmatpush1.msra.mxu0 %v1979
    %2037 = vmatprep.subr.mxu0 %v1976
    %2038 = vmatpush1.msra.mxu0 %v1975
    %2039 = vmatprep.subr.mxu0 %v1972
    %2040 = vmatpush1.msra.mxu0 %v1971
    %2041 = vmatprep.subr.mxu0 %v1968
    %2042 = vmatpush1.msra.mxu0 %v1967
    %2043 = vmatprep.subr.mxu0 %v1964
    %2044 = vmatpush1.msra.mxu0 %v1963
    %2045 = vmatprep.subr.mxu0 %v1960
    %2046 = vmatpush1.msra.mxu0 %v1959
    %2047 = vmatprep.subr.mxu0 %v1956
    %2048 = vmatpush1.msra.mxu0 %v1955
    %2049 = vmatprep.subr.mxu0 %v1952
    %2050 = vmatpush1.msra.mxu0 %v1951
    %2051 = vmatprep.subr.mxu0 %v1948
    %2052 = vmatpush1.msra.mxu0 %v1947
    %2053 = vmatprep.subr.mxu0 %v1944
    %2054 = vmatpush1.msra.mxu0 %v1943
    %2055 = vmatprep.subr.mxu0 %v1940
    %2056 = vmatpush1.msra.mxu0 %v1939
    %2057 = vmatprep.subr.mxu0 0.0
    %2058 = vmatpush2.msra.mxu0 0.0
    %2059 = vmatprep.subr.mxu0 0.0
    %2060 = vmatpush2.msra.mxu0 0.0
    %2061 = vmatprep.subr.mxu0 0.0
    %2062 = vmatpush2.msra.mxu0 0.0
    %2063 = vmatprep.subr.mxu0 0.0
    %2064 = vmatpush2.msra.mxu0 0.0
    %2065 = vmatprep.subr.mxu0 0.0
    %2066 = vmatpush2.msra.mxu0 0.0
    %2067 = vmatprep.subr.mxu0 0.0
    %2068 = vmatpush2.msra.mxu0 0.0
    %2069 = vmatprep.subr.mxu0 0.0
    %2070 = vmatpush2.msra.mxu0 0.0
    %2071 = vmatprep.subr.mxu0 0.0
    %2072 = vmatpush2.msra.mxu0 0.0
    %2073 = vmatprep.subr.mxu0 0.0
    %2074 = vmatpush2.msra.mxu0 0.0
    %2075 = vmatprep.subr.mxu0 0.0
    %2076 = vmatpush2.msra.mxu0 0.0
    %2077 = vmatprep.subr.mxu0 0.0
    %2078 = vmatpush2.msra.mxu0 0.0
    %2079 = vmatprep.subr.mxu0 0.0
    %2080 = vmatpush2.msra.mxu0 0.0
    %2081 = vmatprep.subr.mxu0 0.0
    %2082 = vmatpush2.msra.mxu0 0.0
    %2083 = vmatprep.subr.mxu0 0.0
    %2084 = vmatpush2.msra.mxu0 0.0
    %2085 = vmatprep.subr.mxu0 0.0
    %2086 = vmatpush2.msra.mxu0 0.0
    %2087 = vmatprep.subr.mxu0 0.0
    %2088 = vmatpush2.msra.mxu0 0.0
    %2089 = vmatprep.mubr.f32.mxu0 0.0
    %2090 = vmatmul.mubr.f32.gmra.mxu0 %v1938
    %v2091 = vpop.f32.mrf.mxu0
    %v2092 = vadd.f32 %v2008, %v2091
    %v2093 = vpop.f32.mrf.mxu0
    %v2094 = vadd.f32 %v2012, %v2093
    %2095 = vdwg.mxu0
    %2096 = vmatprep.subr.mxu0 %v2002
    %2097 = vmatpush1.msra.mxu0 %v2001
    %2098 = vmatprep.subr.mxu0 %v1998
    %2099 = vmatpush1.msra.mxu0 %v1997
    %2100 = vmatprep.subr.mxu0 %v1994
    %2101 = vmatpush1.msra.mxu0 %v1993
    %2102 = vmatprep.subr.mxu0 %v1990
    %2103 = vmatpush1.msra.mxu0 %v1989
    %2104 = vmatprep.subr.mxu0 %v1986
    %2105 = vmatpush1.msra.mxu0 %v1985
    %2106 = vmatprep.subr.mxu0 %v1982
    %2107 = vmatpush1.msra.mxu0 %v1981
    %2108 = vmatprep.subr.mxu0 %v1978
    %2109 = vmatpush1.msra.mxu0 %v1977
    %2110 = vmatprep.subr.mxu0 %v1974
    %2111 = vmatpush1.msra.mxu0 %v1973
    %2112 = vmatprep.subr.mxu0 %v1970
    %2113 = vmatpush1.msra.mxu0 %v1969
    %2114 = vmatprep.subr.mxu0 %v1966
    %2115 = vmatpush1.msra.mxu0 %v1965
    %2116 = vmatprep.subr.mxu0 %v1962
    %2117 = vmatpush1.msra.mxu0 %v1961
    %2118 = vmatprep.subr.mxu0 %v1958
    %2119 = vmatpush1.msra.mxu0 %v1957
    %2120 = vmatprep.subr.mxu0 %v1954
    %2121 = vmatpush1.msra.mxu0 %v1953
    %2122 = vmatprep.subr.mxu0 %v1950
    %2123 = vmatpush1.msra.mxu0 %v1949
    %2124 = vmatprep.subr.mxu0 %v1946
    %2125 = vmatpush1.msra.mxu0 %v1945
    %2126 = vmatprep.subr.mxu0 %v1942
    %2127 = vmatpush1.msra.mxu0 %v1941
    %2128 = vmatprep.subr.mxu0 0.0
    %2129 = vmatpush2.msra.mxu0 0.0
    %2130 = vmatprep.subr.mxu0 0.0
    %2131 = vmatpush2.msra.mxu0 0.0
    %2132 = vmatprep.subr.mxu0 0.0
    %2133 = vmatpush2.msra.mxu0 0.0
    %2134 = vmatprep.subr.mxu0 0.0
    %2135 = vmatpush2.msra.mxu0 0.0
    %2136 = vmatprep.subr.mxu0 0.0
    %2137 = vmatpush2.msra.mxu0 0.0
    %2138 = vmatprep.subr.mxu0 0.0
    %2139 = vmatpush2.msra.mxu0 0.0
    %2140 = vmatprep.subr.mxu0 0.0
    %2141 = vmatpush2.msra.mxu0 0.0
    %2142 = vmatprep.subr.mxu0 0.0
    %2143 = vmatpush2.msra.mxu0 0.0
    %2144 = vmatprep.subr.mxu0 0.0
    %2145 = vmatpush2.msra.mxu0 0.0
    %2146 = vmatprep.subr.mxu0 0.0
    %2147 = vmatpush2.msra.mxu0 0.0
    %2148 = vmatprep.subr.mxu0 0.0
    %2149 = vmatpush2.msra.mxu0 0.0
    %2150 = vmatprep.subr.mxu0 0.0
    %2151 = vmatpush2.msra.mxu0 0.0
    %2152 = vmatprep.subr.mxu0 0.0
    %2153 = vmatpush2.msra.mxu0 0.0
    %2154 = vmatprep.subr.mxu0 0.0
    %2155 = vmatpush2.msra.mxu0 0.0
    %2156 = vmatprep.subr.mxu0 0.0
    %2157 = vmatpush2.msra.mxu0 0.0
    %2158 = vmatprep.subr.mxu0 0.0
    %2159 = vmatpush2.msra.mxu0 0.0
    %2160 = vmatprep.mubr.f32.mxu0 0.0
    %2161 = vmatmul.mubr.f32.gmra.mxu0 %v1938
    %v2162 = vpop.f32.mrf.mxu0
    %v2163 = vadd.f32 %v2016, %v2162
    %v2164 = vpop.f32.mrf.mxu0
    %v2165 = vadd.f32 %v2020, %v2164
    %2166 = vdwg.mxu0
    %2167 = vst [vmem:[#allocation4] sm:$0xff] %v2092
    %2168 = vst [vmem:[#allocation4 + $0x8] sm:$0xff] %v2094
    %2169 = vst [vmem:[#allocation4 + $0x10] sm:$0xff] %v2163
    %2170 = vst [vmem:[#allocation4 + $0x18] sm:$0xff] %v2165
    %v2171 = vld [vmem:[#allocation11] sm:$0xff]
    %v2172 = vld [vmem:[#allocation11 + $0x8] sm:$0xff]
    %v2173 = vld [vmem:[#allocation11 + $0x10] sm:$0xff]
    %v2174 = vld [vmem:[#allocation11 + $0x18] sm:$0xff]
    %v2175 = vld [vmem:[#allocation11 + $0x20] sm:$0xff]
    %v2176 = vld [vmem:[#allocation11 + $0x28] sm:$0xff]
    %v2177 = vld [vmem:[#allocation11 + $0x30] sm:$0xff]
    %v2178 = vld [vmem:[#allocation11 + $0x38] sm:$0xff]
    %v2179 = vld [vmem:[#allocation11 + $0x40] sm:$0xff]
    %v2180 = vld [vmem:[#allocation11 + $0x48] sm:$0xff]
    %v2181 = vld [vmem:[#allocation11 + $0x50] sm:$0xff]
    %v2182 = vld [vmem:[#allocation11 + $0x58] sm:$0xff]
    %v2183 = vld [vmem:[#allocation11 + $0x60] sm:$0xff]
    %v2184 = vld [vmem:[#allocation11 + $0x68] sm:$0xff]
    %v2185 = vld [vmem:[#allocation11 + $0x70] sm:$0xff]
    %v2186 = vld [vmem:[#allocation11 + $0x78] sm:$0xff]
    %v2187 = vld [vmem:[#allocation11 + $0x80] sm:$0xff]
    %v2188 = vld [vmem:[#allocation11 + $0x88] sm:$0xff]
    %v2189 = vld [vmem:[#allocation11 + $0x90] sm:$0xff]
    %v2190 = vld [vmem:[#allocation11 + $0x98] sm:$0xff]
    %v2191 = vld [vmem:[#allocation11 + $0xa0] sm:$0xff]
    %v2192 = vld [vmem:[#allocation11 + $0xa8] sm:$0xff]
    %v2193 = vld [vmem:[#allocation11 + $0xb0] sm:$0xff]
    %v2194 = vld [vmem:[#allocation11 + $0xb8] sm:$0xff]
    %v2195 = vld [vmem:[#allocation11 + $0xc0] sm:$0xff]
    %v2196 = vld [vmem:[#allocation11 + $0xc8] sm:$0xff]
    %v2197 = vld [vmem:[#allocation11 + $0xd0] sm:$0xff]
    %v2198 = vld [vmem:[#allocation11 + $0xd8] sm:$0xff]
    %v2199 = vld [vmem:[#allocation11 + $0xe0] sm:$0xff]
    %v2200 = vld [vmem:[#allocation11 + $0xe8] sm:$0xff]
    %v2201 = vld [vmem:[#allocation11 + $0xf0] sm:$0xff]
    %v2202 = vld [vmem:[#allocation11 + $0xf8] sm:$0xff]
    %v2203 = vld [vmem:[#allocation11 + $0x100] sm:$0xff]
    %v2204 = vld [vmem:[#allocation11 + $0x108] sm:$0xff]
    %v2205 = vld [vmem:[#allocation11 + $0x110] sm:$0xff]
    %v2206 = vld [vmem:[#allocation11 + $0x118] sm:$0xff]
    %v2207 = vld [vmem:[#allocation11 + $0x120] sm:$0xff]
    %v2208 = vld [vmem:[#allocation11 + $0x128] sm:$0xff]
    %v2209 = vld [vmem:[#allocation11 + $0x130] sm:$0xff]
    %v2210 = vld [vmem:[#allocation11 + $0x138] sm:$0xff]
    %v2211 = vld [vmem:[#allocation11 + $0x140] sm:$0xff]
    %v2212 = vld [vmem:[#allocation11 + $0x148] sm:$0xff]
    %v2213 = vld [vmem:[#allocation11 + $0x150] sm:$0xff]
    %v2214 = vld [vmem:[#allocation11 + $0x158] sm:$0xff]
    %v2215 = vld [vmem:[#allocation11 + $0x160] sm:$0xff]
    %v2216 = vld [vmem:[#allocation11 + $0x168] sm:$0xff]
    %v2217 = vld [vmem:[#allocation11 + $0x170] sm:$0xff]
    %v2218 = vld [vmem:[#allocation11 + $0x178] sm:$0xff]
    %v2219 = vld [vmem:[#allocation11 + $0x180] sm:$0xff]
    %v2220 = vld [vmem:[#allocation11 + $0x188] sm:$0xff]
    %v2221 = vld [vmem:[#allocation11 + $0x190] sm:$0xff]
    %v2222 = vld [vmem:[#allocation11 + $0x198] sm:$0xff]
    %v2223 = vld [vmem:[#allocation11 + $0x1a0] sm:$0xff]
    %v2224 = vld [vmem:[#allocation11 + $0x1a8] sm:$0xff]
    %v2225 = vld [vmem:[#allocation11 + $0x1b0] sm:$0xff]
    %v2226 = vld [vmem:[#allocation11 + $0x1b8] sm:$0xff]
    %v2227 = vld [vmem:[#allocation11 + $0x1c0] sm:$0xff]
    %v2228 = vld [vmem:[#allocation11 + $0x1c8] sm:$0xff]
    %v2229 = vld [vmem:[#allocation11 + $0x1d0] sm:$0xff]
    %v2230 = vld [vmem:[#allocation11 + $0x1d8] sm:$0xff]
    %v2231 = vld [vmem:[#allocation11 + $0x1e0] sm:$0xff]
    %v2232 = vld [vmem:[#allocation11 + $0x1e8] sm:$0xff]
    %v2233 = vld [vmem:[#allocation11 + $0x1f0] sm:$0xff]
    %v2234 = vld [vmem:[#allocation11 + $0x1f8] sm:$0xff]
    %v2235 = vld [vmem:[#allocation4] ss:$8 sm:$0xf]
    %2236 = vmatprep.subr.mxu0 %v2232
    %2237 = vmatpush1.msra.mxu0 %v2231
    %2238 = vmatprep.subr.mxu0 %v2228
    %2239 = vmatpush1.msra.mxu0 %v2227
    %2240 = vmatprep.subr.mxu0 %v2224
    %2241 = vmatpush1.msra.mxu0 %v2223
    %2242 = vmatprep.subr.mxu0 %v2220
    %2243 = vmatpush1.msra.mxu0 %v2219
    %2244 = vmatprep.subr.mxu0 %v2216
    %2245 = vmatpush1.msra.mxu0 %v2215
    %2246 = vmatprep.subr.mxu0 %v2212
    %2247 = vmatpush1.msra.mxu0 %v2211
    %2248 = vmatprep.subr.mxu0 %v2208
    %2249 = vmatpush1.msra.mxu0 %v2207
    %2250 = vmatprep.subr.mxu0 %v2204
    %2251 = vmatpush1.msra.mxu0 %v2203
    %2252 = vmatprep.subr.mxu0 %v2200
    %2253 = vmatpush1.msra.mxu0 %v2199
    %2254 = vmatprep.subr.mxu0 %v2196
    %2255 = vmatpush1.msra.mxu0 %v2195
    %2256 = vmatprep.subr.mxu0 %v2192
    %2257 = vmatpush1.msra.mxu0 %v2191
    %2258 = vmatprep.subr.mxu0 %v2188
    %2259 = vmatpush1.msra.mxu0 %v2187
    %2260 = vmatprep.subr.mxu0 %v2184
    %2261 = vmatpush1.msra.mxu0 %v2183
    %2262 = vmatprep.subr.mxu0 %v2180
    %2263 = vmatpush1.msra.mxu0 %v2179
    %2264 = vmatprep.subr.mxu0 %v2176
    %2265 = vmatpush1.msra.mxu0 %v2175
    %2266 = vmatprep.subr.mxu0 %v2172
    %2267 = vmatpush1.msra.mxu0 %v2171
    %2268 = vmatprep.subr.mxu0 0.0
    %2269 = vmatpush2.msra.mxu0 0.0
    %2270 = vmatprep.subr.mxu0 0.0
    %2271 = vmatpush2.msra.mxu0 0.0
    %2272 = vmatprep.subr.mxu0 0.0
    %2273 = vmatpush2.msra.mxu0 0.0
    %2274 = vmatprep.subr.mxu0 0.0
    %2275 = vmatpush2.msra.mxu0 0.0
    %2276 = vmatprep.subr.mxu0 0.0
    %2277 = vmatpush2.msra.mxu0 0.0
    %2278 = vmatprep.subr.mxu0 0.0
    %2279 = vmatpush2.msra.mxu0 0.0
    %2280 = vmatprep.subr.mxu0 0.0
    %2281 = vmatpush2.msra.mxu0 0.0
    %2282 = vmatprep.subr.mxu0 0.0
    %2283 = vmatpush2.msra.mxu0 0.0
    %2284 = vmatprep.subr.mxu0 0.0
    %2285 = vmatpush2.msra.mxu0 0.0
    %2286 = vmatprep.subr.mxu0 0.0
    %2287 = vmatpush2.msra.mxu0 0.0
    %2288 = vmatprep.subr.mxu0 0.0
    %2289 = vmatpush2.msra.mxu0 0.0
    %2290 = vmatprep.subr.mxu0 0.0
    %2291 = vmatpush2.msra.mxu0 0.0
    %2292 = vmatprep.subr.mxu0 0.0
    %2293 = vmatpush2.msra.mxu0 0.0
    %2294 = vmatprep.subr.mxu0 0.0
    %2295 = vmatpush2.msra.mxu0 0.0
    %2296 = vmatprep.subr.mxu0 0.0
    %2297 = vmatpush2.msra.mxu0 0.0
    %2298 = vmatprep.subr.mxu0 0.0
    %2299 = vmatpush2.msra.mxu0 0.0
    %2300 = vmatprep.mubr.f32.mxu0 0.0
    %2301 = vmatmul.mubr.f32.gmra.mxu0 0.0
    %v2302 = vpop.f32.mrf.mxu0
    %v2303 = vadd.f32 0.0, %v2302
    %v2304 = vpop.f32.mrf.mxu0
    %v2305 = vadd.f32 0.0, %v2304
    %2306 = vdwg.mxu0
    %2307 = vmatprep.subr.mxu0 %v2234
    %2308 = vmatpush1.msra.mxu0 %v2233
    %2309 = vmatprep.subr.mxu0 %v2230
    %2310 = vmatpush1.msra.mxu0 %v2229
    %2311 = vmatprep.subr.mxu0 %v2226
    %2312 = vmatpush1.msra.mxu0 %v2225
    %2313 = vmatprep.subr.mxu0 %v2222
    %2314 = vmatpush1.msra.mxu0 %v2221
    %2315 = vmatprep.subr.mxu0 %v2218
    %2316 = vmatpush1.msra.mxu0 %v2217
    %2317 = vmatprep.subr.mxu0 %v2214
    %2318 = vmatpush1.msra.mxu0 %v2213
    %2319 = vmatprep.subr.mxu0 %v2210
    %2320 = vmatpush1.msra.mxu0 %v2209
    %2321 = vmatprep.subr.mxu0 %v2206
    %2322 = vmatpush1.msra.mxu0 %v2205
    %2323 = vmatprep.subr.mxu0 %v2202
    %2324 = vmatpush1.msra.mxu0 %v2201
    %2325 = vmatprep.subr.mxu0 %v2198
    %2326 = vmatpush1.msra.mxu0 %v2197
    %2327 = vmatprep.subr.mxu0 %v2194
    %2328 = vmatpush1.msra.mxu0 %v2193
    %2329 = vmatprep.subr.mxu0 %v2190
    %2330 = vmatpush1.msra.mxu0 %v2189
    %2331 = vmatprep.subr.mxu0 %v2186
    %2332 = vmatpush1.msra.mxu0 %v2185
    %2333 = vmatprep.subr.mxu0 %v2182
    %2334 = vmatpush1.msra.mxu0 %v2181
    %2335 = vmatprep.subr.mxu0 %v2178
    %2336 = vmatpush1.msra.mxu0 %v2177
    %2337 = vmatprep.subr.mxu0 %v2174
    %2338 = vmatpush1.msra.mxu0 %v2173
    %2339 = vmatprep.subr.mxu0 0.0
    %2340 = vmatpush2.msra.mxu0 0.0
    %2341 = vmatprep.subr.mxu0 0.0
    %2342 = vmatpush2.msra.mxu0 0.0
    %2343 = vmatprep.subr.mxu0 0.0
    %2344 = vmatpush2.msra.mxu0 0.0
    %2345 = vmatprep.subr.mxu0 0.0
    %2346 = vmatpush2.msra.mxu0 0.0
    %2347 = vmatprep.subr.mxu0 0.0
    %2348 = vmatpush2.msra.mxu0 0.0
    %2349 = vmatprep.subr.mxu0 0.0
    %2350 = vmatpush2.msra.mxu0 0.0
    %2351 = vmatprep.subr.mxu0 0.0
    %2352 = vmatpush2.msra.mxu0 0.0
    %2353 = vmatprep.subr.mxu0 0.0
    %2354 = vmatpush2.msra.mxu0 0.0
    %2355 = vmatprep.subr.mxu0 0.0
    %2356 = vmatpush2.msra.mxu0 0.0
    %2357 = vmatprep.subr.mxu0 0.0
    %2358 = vmatpush2.msra.mxu0 0.0
    %2359 = vmatprep.subr.mxu0 0.0
    %2360 = vmatpush2.msra.mxu0 0.0
    %2361 = vmatprep.subr.mxu0 0.0
    %2362 = vmatpush2.msra.mxu0 0.0
    %2363 = vmatprep.subr.mxu0 0.0
    %2364 = vmatpush2.msra.mxu0 0.0
    %2365 = vmatprep.subr.mxu0 0.0
    %2366 = vmatpush2.msra.mxu0 0.0
    %2367 = vmatprep.subr.mxu0 0.0
    %2368 = vmatpush2.msra.mxu0 0.0
    %2369 = vmatprep.subr.mxu0 0.0
    %2370 = vmatpush2.msra.mxu0 0.0
    %2371 = vmatprep.mubr.f32.mxu0 0.0
    %2372 = vmatmul.mubr.f32.gmra.mxu0 0.0
    %v2373 = vpop.f32.mrf.mxu0
    %v2374 = vadd.f32 0.0, %v2373
    %v2375 = vpop.f32.mrf.mxu0
    %v2376 = vadd.f32 0.0, %v2375
    %2377 = vdwg.mxu0
    %v2382 = vcombine.low %v2303, %v2305
    %v2383 = vcombine.low %v2374, %v2376
    %v2385 = vunpack.c.l.s4 1966171168
    %v2386 = vunpack.c.0.s8 %v2385
    %v2387 = vlaneseq
    %v2388 = vshrl.u32 %v2387, 7
    %v2389 = vsub.s32 %v2386, %v2388
    %v2390 = vrot.slane %v2382, %v2389
    %v2392 = vunpack.c.l.s4 1966171168
    %v2393 = vunpack.c.0.s8 %v2392
    %v2394 = vlaneseq
    %v2395 = vshrl.u32 %v2394, 7
    %v2396 = vsub.s32 %v2393, %v2395
    %v2397 = vrot.slane %v2383, %v2396
    %v2398 = vcombine.low %v2390, %v2397
    %v2400 = vunpack.c.l.s4 1966171168
    %v2401 = vunpack.c.0.s8 %v2400
    %v2402 = vlaneseq
    %v2403 = vshrl.u32 %v2402, 7
    %v2404 = vsub.s32 %v2401, %v2403
    %v2405 = vrot.slane %v2398, %v2404
    %v2407 = vadd.f32 %v2235, %v2405
    %v2408 = vxor.u32 %v2407, 2147483648
    %v2409 = vmul.f32 %v2408, 1.442695
    %v2410 = vpow.pop %v2409
    %v2411 = vadd.f32 %v2410, 1.0
    %v2412 = vrcp.pop %v2411
    %v2413 = vmul.f32 1.0, %v2412
    %v2414 = vtanh.pop %v2407
    %v2416 = vrot.slane %v2413, 1
    %v2418 = vmul.f32 %v2416, 0.0
    %v2420 = vrot.slane %v2414, 2
    %v2422 = vmul.f32 %v2413, %v2420
    %v2423 = vadd.f32 %v2418, %v2422
    %v2424 = vtanh.pop %v2423
    %v2425 = vrot.slane %v2413, 3
    %v2427 = vmul.f32 %v2425, %v2424
    %s2428 = scalar_lea.vmem [#allocation4], 1
    %v2429 = vld [vmem:[%s2428] ss:$8 sm:$0xf]
    %2430 = vmatprep.subr.mxu0 %v2232
    %2431 = vmatpush1.msra.mxu0 %v2231
    %2432 = vmatprep.subr.mxu0 %v2228
    %2433 = vmatpush1.msra.mxu0 %v2227
    %2434 = vmatprep.subr.mxu0 %v2224
    %2435 = vmatpush1.msra.mxu0 %v2223
    %2436 = vmatprep.subr.mxu0 %v2220
    %2437 = vmatpush1.msra.mxu0 %v2219
    %2438 = vmatprep.subr.mxu0 %v2216
    %2439 = vmatpush1.msra.mxu0 %v2215
    %2440 = vmatprep.subr.mxu0 %v2212
    %2441 = vmatpush1.msra.mxu0 %v2211
    %2442 = vmatprep.subr.mxu0 %v2208
    %2443 = vmatpush1.msra.mxu0 %v2207
    %2444 = vmatprep.subr.mxu0 %v2204
    %2445 = vmatpush1.msra.mxu0 %v2203
    %2446 = vmatprep.subr.mxu0 %v2200
    %2447 = vmatpush1.msra.mxu0 %v2199
    %2448 = vmatprep.subr.mxu0 %v2196
    %2449 = vmatpush1.msra.mxu0 %v2195
    %2450 = vmatprep.subr.mxu0 %v2192
    %2451 = vmatpush1.msra.mxu0 %v2191
    %2452 = vmatprep.subr.mxu0 %v2188
    %2453 = vmatpush1.msra.mxu0 %v2187
    %2454 = vmatprep.subr.mxu0 %v2184
    %2455 = vmatpush1.msra.mxu0 %v2183
    %2456 = vmatprep.subr.mxu0 %v2180
    %2457 = vmatpush1.msra.mxu0 %v2179
    %2458 = vmatprep.subr.mxu0 %v2176
    %2459 = vmatpush1.msra.mxu0 %v2175
    %2460 = vmatprep.subr.mxu0 %v2172
    %2461 = vmatpush1.msra.mxu0 %v2171
    %2462 = vmatprep.subr.mxu0 0.0
    %2463 = vmatpush2.msra.mxu0 0.0
    %2464 = vmatprep.subr.mxu0 0.0
    %2465 = vmatpush2.msra.mxu0 0.0
    %2466 = vmatprep.subr.mxu0 0.0
    %2467 = vmatpush2.msra.mxu0 0.0
    %2468 = vmatprep.subr.mxu0 0.0
    %2469 = vmatpush2.msra.mxu0 0.0
    %2470 = vmatprep.subr.mxu0 0.0
    %2471 = vmatpush2.msra.mxu0 0.0
    %2472 = vmatprep.subr.mxu0 0.0
    %2473 = vmatpush2.msra.mxu0 0.0
    %2474 = vmatprep.subr.mxu0 0.0
    %2475 = vmatpush2.msra.mxu0 0.0
    %2476 = vmatprep.subr.mxu0 0.0
    %2477 = vmatpush2.msra.mxu0 0.0
    %2478 = vmatprep.subr.mxu0 0.0
    %2479 = vmatpush2.msra.mxu0 0.0
    %2480 = vmatprep.subr.mxu0 0.0
    %2481 = vmatpush2.msra.mxu0 0.0
    %2482 = vmatprep.subr.mxu0 0.0
    %2483 = vmatpush2.msra.mxu0 0.0
    %2484 = vmatprep.subr.mxu0 0.0
    %2485 = vmatpush2.msra.mxu0 0.0
    %2486 = vmatprep.subr.mxu0 0.0
    %2487 = vmatpush2.msra.mxu0 0.0
    %2488 = vmatprep.subr.mxu0 0.0
    %2489 = vmatpush2.msra.mxu0 0.0
    %2490 = vmatprep.subr.mxu0 0.0
    %2491 = vmatpush2.msra.mxu0 0.0
    %2492 = vmatprep.subr.mxu0 0.0
    %2493 = vmatpush2.msra.mxu0 0.0
    %2494 = vmatprep.mubr.f32.mxu0 0.0
    %2495 = vmatmul.mubr.f32.gmra.mxu0 %v2427
    %v2496 = vpop.f32.mrf.mxu0
    %v2497 = vadd.f32 0.0, %v2496
    %v2498 = vpop.f32.mrf.mxu0
    %v2499 = vadd.f32 0.0, %v2498
    %2500 = vdwg.mxu0
    %2501 = vmatprep.subr.mxu0 %v2234
    %2502 = vmatpush1.msra.mxu0 %v2233
    %2503 = vmatprep.subr.mxu0 %v2230
    %2504 = vmatpush1.msra.mxu0 %v2229
    %2505 = vmatprep.subr.mxu0 %v2226
    %2506 = vmatpush1.msra.mxu0 %v2225
    %2507 = vmatprep.subr.mxu0 %v2222
    %2508 = vmatpush1.msra.mxu0 %v2221
    %2509 = vmatprep.subr.mxu0 %v2218
    %2510 = vmatpush1.msra.mxu0 %v2217
    %2511 = vmatprep.subr.mxu0 %v2214
    %2512 = vmatpush1.msra.mxu0 %v2213
    %2513 = vmatprep.subr.mxu0 %v2210
    %2514 = vmatpush1.msra.mxu0 %v2209
    %2515 = vmatprep.subr.mxu0 %v2206
    %2516 = vmatpush1.msra.mxu0 %v2205
    %2517 = vmatprep.subr.mxu0 %v2202
    %2518 = vmatpush1.msra.mxu0 %v2201
    %2519 = vmatprep.subr.mxu0 %v2198
    %2520 = vmatpush1.msra.mxu0 %v2197
    %2521 = vmatprep.subr.mxu0 %v2194
    %2522 = vmatpush1.msra.mxu0 %v2193
    %2523 = vmatprep.subr.mxu0 %v2190
    %2524 = vmatpush1.msra.mxu0 %v2189
    %2525 = vmatprep.subr.mxu0 %v2186
    %2526 = vmatpush1.msra.mxu0 %v2185
    %2527 = vmatprep.subr.mxu0 %v2182
    %2528 = vmatpush1.msra.mxu0 %v2181
    %2529 = vmatprep.subr.mxu0 %v2178
    %2530 = vmatpush1.msra.mxu0 %v2177
    %2531 = vmatprep.subr.mxu0 %v2174
    %2532 = vmatpush1.msra.mxu0 %v2173
    %2533 = vmatprep.subr.mxu0 0.0
    %2534 = vmatpush2.msra.mxu0 0.0
    %2535 = vmatprep.subr.mxu0 0.0
    %2536 = vmatpush2.msra.mxu0 0.0
    %2537 = vmatprep.subr.mxu0 0.0
    %2538 = vmatpush2.msra.mxu0 0.0
    %2539 = vmatprep.subr.mxu0 0.0
    %2540 = vmatpush2.msra.mxu0 0.0
    %2541 = vmatprep.subr.mxu0 0.0
    %2542 = vmatpush2.msra.mxu0 0.0
    %2543 = vmatprep.subr.mxu0 0.0
    %2544 = vmatpush2.msra.mxu0 0.0
    %2545 = vmatprep.subr.mxu0 0.0
    %2546 = vmatpush2.msra.mxu0 0.0
    %2547 = vmatprep.subr.mxu0 0.0
    %2548 = vmatpush2.msra.mxu0 0.0
    %2549 = vmatprep.subr.mxu0 0.0
    %2550 = vmatpush2.msra.mxu0 0.0
    %2551 = vmatprep.subr.mxu0 0.0
    %2552 = vmatpush2.msra.mxu0 0.0
    %2553 = vmatprep.subr.mxu0 0.0
    %2554 = vmatpush2.msra.mxu0 0.0
    %2555 = vmatprep.subr.mxu0 0.0
    %2556 = vmatpush2.msra.mxu0 0.0
    %2557 = vmatprep.subr.mxu0 0.0
    %2558 = vmatpush2.msra.mxu0 0.0
    %2559 = vmatprep.subr.mxu0 0.0
    %2560 = vmatpush2.msra.mxu0 0.0
    %2561 = vmatprep.subr.mxu0 0.0
    %2562 = vmatpush2.msra.mxu0 0.0
    %2563 = vmatprep.subr.mxu0 0.0
    %2564 = vmatpush2.msra.mxu0 0.0
    %2565 = vmatprep.mubr.f32.mxu0 0.0
    %2566 = vmatmul.mubr.f32.gmra.mxu0 %v2427
    %v2567 = vpop.f32.mrf.mxu0
    %v2568 = vadd.f32 0.0, %v2567
    %v2569 = vpop.f32.mrf.mxu0
    %v2570 = vadd.f32 0.0, %v2569
    %2571 = vdwg.mxu0
    %v2576 = vcombine.low %v2497, %v2499
    %v2577 = vcombine.low %v2568, %v2570
    %v2579 = vunpack.c.l.s4 1966171168
    %v2580 = vunpack.c.0.s8 %v2579
    %v2581 = vlaneseq
    %v2582 = vshrl.u32 %v2581, 7
    %v2583 = vsub.s32 %v2580, %v2582
    %v2584 = vrot.slane %v2576, %v2583
    %v2586 = vunpack.c.l.s4 1966171168
    %v2587 = vunpack.c.0.s8 %v2586
    %v2588 = vlaneseq
    %v2589 = vshrl.u32 %v2588, 7
    %v2590 = vsub.s32 %v2587, %v2589
    %v2591 = vrot.slane %v2577, %v2590
    %v2592 = vcombine.low %v2584, %v2591
    %v2594 = vunpack.c.l.s4 1966171168
    %v2595 = vunpack.c.0.s8 %v2594
    %v2596 = vlaneseq
    %v2597 = vshrl.u32 %v2596, 7
    %v2598 = vsub.s32 %v2595, %v2597
    %v2599 = vrot.slane %v2592, %v2598
    %v2601 = vadd.f32 %v2429, %v2599
    %v2602 = vxor.u32 %v2601, 2147483648
    %v2603 = vmul.f32 %v2602, 1.442695
    %v2604 = vpow.pop %v2603
    %v2605 = vadd.f32 %v2604, 1.0
    %v2606 = vrcp.pop %v2605
    %v2607 = vmul.f32 1.0, %v2606
    %v2608 = vtanh.pop %v2601
    %v2610 = vrot.slane %v2607, 1
    %v2612 = vmul.f32 %v2610, %v2423
    %v2614 = vrot.slane %v2608, 2
    %v2616 = vmul.f32 %v2607, %v2614
    %v2617 = vadd.f32 %v2612, %v2616
    %v2618 = vtanh.pop %v2617
    %v2619 = vrot.slane %v2607, 3
    %v2621 = vmul.f32 %v2619, %v2618
    %s2622 = scalar_lea.vmem [#allocation4], 2
    %v2623 = vld [vmem:[%s2622] ss:$8 sm:$0xf]
    %2624 = vmatprep.subr.mxu0 %v2232
    %2625 = vmatpush1.msra.mxu0 %v2231
    %2626 = vmatprep.subr.mxu0 %v2228
    %2627 = vmatpush1.msra.mxu0 %v2227
    %2628 = vmatprep.subr.mxu0 %v2224
    %2629 = vmatpush1.msra.mxu0 %v2223
    %2630 = vmatprep.subr.mxu0 %v2220
    %2631 = vmatpush1.msra.mxu0 %v2219
    %2632 = vmatprep.subr.mxu0 %v2216
    %2633 = vmatpush1.msra.mxu0 %v2215
    %2634 = vmatprep.subr.mxu0 %v2212
    %2635 = vmatpush1.msra.mxu0 %v2211
    %2636 = vmatprep.subr.mxu0 %v2208
    %2637 = vmatpush1.msra.mxu0 %v2207
    %2638 = vmatprep.subr.mxu0 %v2204
    %2639 = vmatpush1.msra.mxu0 %v2203
    %2640 = vmatprep.subr.mxu0 %v2200
    %2641 = vmatpush1.msra.mxu0 %v2199
    %2642 = vmatprep.subr.mxu0 %v2196
    %2643 = vmatpush1.msra.mxu0 %v2195
    %2644 = vmatprep.subr.mxu0 %v2192
    %2645 = vmatpush1.msra.mxu0 %v2191
    %2646 = vmatprep.subr.mxu0 %v2188
    %2647 = vmatpush1.msra.mxu0 %v2187
    %2648 = vmatprep.subr.mxu0 %v2184
    %2649 = vmatpush1.msra.mxu0 %v2183
    %2650 = vmatprep.subr.mxu0 %v2180
    %2651 = vmatpush1.msra.mxu0 %v2179
    %2652 = vmatprep.subr.mxu0 %v2176
    %2653 = vmatpush1.msra.mxu0 %v2175
    %2654 = vmatprep.subr.mxu0 %v2172
    %2655 = vmatpush1.msra.mxu0 %v2171
    %2656 = vmatprep.subr.mxu0 0.0
    %2657 = vmatpush2.msra.mxu0 0.0
    %2658 = vmatprep.subr.mxu0 0.0
    %2659 = vmatpush2.msra.mxu0 0.0
    %2660 = vmatprep.subr.mxu0 0.0
    %2661 = vmatpush2.msra.mxu0 0.0
    %2662 = vmatprep.subr.mxu0 0.0
    %2663 = vmatpush2.msra.mxu0 0.0
    %2664 = vmatprep.subr.mxu0 0.0
    %2665 = vmatpush2.msra.mxu0 0.0
    %2666 = vmatprep.subr.mxu0 0.0
    %2667 = vmatpush2.msra.mxu0 0.0
    %2668 = vmatprep.subr.mxu0 0.0
    %2669 = vmatpush2.msra.mxu0 0.0
    %2670 = vmatprep.subr.mxu0 0.0
    %2671 = vmatpush2.msra.mxu0 0.0
    %2672 = vmatprep.subr.mxu0 0.0
    %2673 = vmatpush2.msra.mxu0 0.0
    %2674 = vmatprep.subr.mxu0 0.0
    %2675 = vmatpush2.msra.mxu0 0.0
    %2676 = vmatprep.subr.mxu0 0.0
    %2677 = vmatpush2.msra.mxu0 0.0
    %2678 = vmatprep.subr.mxu0 0.0
    %2679 = vmatpush2.msra.mxu0 0.0
    %2680 = vmatprep.subr.mxu0 0.0
    %2681 = vmatpush2.msra.mxu0 0.0
    %2682 = vmatprep.subr.mxu0 0.0
    %2683 = vmatpush2.msra.mxu0 0.0
    %2684 = vmatprep.subr.mxu0 0.0
    %2685 = vmatpush2.msra.mxu0 0.0
    %2686 = vmatprep.subr.mxu0 0.0
    %2687 = vmatpush2.msra.mxu0 0.0
    %2688 = vmatprep.mubr.f32.mxu0 0.0
    %2689 = vmatmul.mubr.f32.gmra.mxu0 %v2621
    %v2690 = vpop.f32.mrf.mxu0
    %v2691 = vadd.f32 0.0, %v2690
    %v2692 = vpop.f32.mrf.mxu0
    %v2693 = vadd.f32 0.0, %v2692
    %2694 = vdwg.mxu0
    %2695 = vmatprep.subr.mxu0 %v2234
    %2696 = vmatpush1.msra.mxu0 %v2233
    %2697 = vmatprep.subr.mxu0 %v2230
    %2698 = vmatpush1.msra.mxu0 %v2229
    %2699 = vmatprep.subr.mxu0 %v2226
    %2700 = vmatpush1.msra.mxu0 %v2225
    %2701 = vmatprep.subr.mxu0 %v2222
    %2702 = vmatpush1.msra.mxu0 %v2221
    %2703 = vmatprep.subr.mxu0 %v2218
    %2704 = vmatpush1.msra.mxu0 %v2217
    %2705 = vmatprep.subr.mxu0 %v2214
    %2706 = vmatpush1.msra.mxu0 %v2213
    %2707 = vmatprep.subr.mxu0 %v2210
    %2708 = vmatpush1.msra.mxu0 %v2209
    %2709 = vmatprep.subr.mxu0 %v2206
    %2710 = vmatpush1.msra.mxu0 %v2205
    %2711 = vmatprep.subr.mxu0 %v2202
    %2712 = vmatpush1.msra.mxu0 %v2201
    %2713 = vmatprep.subr.mxu0 %v2198
    %2714 = vmatpush1.msra.mxu0 %v2197
    %2715 = vmatprep.subr.mxu0 %v2194
    %2716 = vmatpush1.msra.mxu0 %v2193
    %2717 = vmatprep.subr.mxu0 %v2190
    %2718 = vmatpush1.msra.mxu0 %v2189
    %2719 = vmatprep.subr.mxu0 %v2186
    %2720 = vmatpush1.msra.mxu0 %v2185
    %2721 = vmatprep.subr.mxu0 %v2182
    %2722 = vmatpush1.msra.mxu0 %v2181
    %2723 = vmatprep.subr.mxu0 %v2178
    %2724 = vmatpush1.msra.mxu0 %v2177
    %2725 = vmatprep.subr.mxu0 %v2174
    %2726 = vmatpush1.msra.mxu0 %v2173
    %2727 = vmatprep.subr.mxu0 0.0
    %2728 = vmatpush2.msra.mxu0 0.0
    %2729 = vmatprep.subr.mxu0 0.0
    %2730 = vmatpush2.msra.mxu0 0.0
    %2731 = vmatprep.subr.mxu0 0.0
    %2732 = vmatpush2.msra.mxu0 0.0
    %2733 = vmatprep.subr.mxu0 0.0
    %2734 = vmatpush2.msra.mxu0 0.0
    %2735 = vmatprep.subr.mxu0 0.0
    %2736 = vmatpush2.msra.mxu0 0.0
    %2737 = vmatprep.subr.mxu0 0.0
    %2738 = vmatpush2.msra.mxu0 0.0
    %2739 = vmatprep.subr.mxu0 0.0
    %2740 = vmatpush2.msra.mxu0 0.0
    %2741 = vmatprep.subr.mxu0 0.0
    %2742 = vmatpush2.msra.mxu0 0.0
    %2743 = vmatprep.subr.mxu0 0.0
    %2744 = vmatpush2.msra.mxu0 0.0
    %2745 = vmatprep.subr.mxu0 0.0
    %2746 = vmatpush2.msra.mxu0 0.0
    %2747 = vmatprep.subr.mxu0 0.0
    %2748 = vmatpush2.msra.mxu0 0.0
    %2749 = vmatprep.subr.mxu0 0.0
    %2750 = vmatpush2.msra.mxu0 0.0
    %2751 = vmatprep.subr.mxu0 0.0
    %2752 = vmatpush2.msra.mxu0 0.0
    %2753 = vmatprep.subr.mxu0 0.0
    %2754 = vmatpush2.msra.mxu0 0.0
    %2755 = vmatprep.subr.mxu0 0.0
    %2756 = vmatpush2.msra.mxu0 0.0
    %2757 = vmatprep.subr.mxu0 0.0
    %2758 = vmatpush2.msra.mxu0 0.0
    %2759 = vmatprep.mubr.f32.mxu0 0.0
    %2760 = vmatmul.mubr.f32.gmra.mxu0 %v2621
    %v2761 = vpop.f32.mrf.mxu0
    %v2762 = vadd.f32 0.0, %v2761
    %v2763 = vpop.f32.mrf.mxu0
    %v2764 = vadd.f32 0.0, %v2763
    %2765 = vdwg.mxu0
    %v2770 = vcombine.low %v2691, %v2693
    %v2771 = vcombine.low %v2762, %v2764
    %v2773 = vunpack.c.l.s4 1966171168
    %v2774 = vunpack.c.0.s8 %v2773
    %v2775 = vlaneseq
    %v2776 = vshrl.u32 %v2775, 7
    %v2777 = vsub.s32 %v2774, %v2776
    %v2778 = vrot.slane %v2770, %v2777
    %v2780 = vunpack.c.l.s4 1966171168
    %v2781 = vunpack.c.0.s8 %v2780
    %v2782 = vlaneseq
    %v2783 = vshrl.u32 %v2782, 7
    %v2784 = vsub.s32 %v2781, %v2783
    %v2785 = vrot.slane %v2771, %v2784
    %v2786 = vcombine.low %v2778, %v2785
    %v2788 = vunpack.c.l.s4 1966171168
    %v2789 = vunpack.c.0.s8 %v2788
    %v2790 = vlaneseq
    %v2791 = vshrl.u32 %v2790, 7
    %v2792 = vsub.s32 %v2789, %v2791
    %v2793 = vrot.slane %v2786, %v2792
    %v2795 = vadd.f32 %v2623, %v2793
    %v2796 = vxor.u32 %v2795, 2147483648
    %v2797 = vmul.f32 %v2796, 1.442695
    %v2798 = vpow.pop %v2797
    %v2799 = vadd.f32 %v2798, 1.0
    %v2800 = vrcp.pop %v2799
    %v2801 = vmul.f32 1.0, %v2800
    %v2802 = vtanh.pop %v2795
    %v2804 = vrot.slane %v2801, 1
    %v2806 = vmul.f32 %v2804, %v2617
    %v2808 = vrot.slane %v2802, 2
    %v2810 = vmul.f32 %v2801, %v2808
    %v2811 = vadd.f32 %v2806, %v2810
    %v2812 = vtanh.pop %v2811
    %v2813 = vrot.slane %v2801, 3
    %v2815 = vmul.f32 %v2813, %v2812
    %s2816 = scalar_lea.vmem [#allocation4], 3
    %v2817 = vld [vmem:[%s2816] ss:$8 sm:$0xf]
    %2818 = vmatprep.subr.mxu0 %v2232
    %2819 = vmatpush1.msra.mxu0 %v2231
    %2820 = vmatprep.subr.mxu0 %v2228
    %2821 = vmatpush1.msra.mxu0 %v2227
    %2822 = vmatprep.subr.mxu0 %v2224
    %2823 = vmatpush1.msra.mxu0 %v2223
    %2824 = vmatprep.subr.mxu0 %v2220
    %2825 = vmatpush1.msra.mxu0 %v2219
    %2826 = vmatprep.subr.mxu0 %v2216
    %2827 = vmatpush1.msra.mxu0 %v2215
    %2828 = vmatprep.subr.mxu0 %v2212
    %2829 = vmatpush1.msra.mxu0 %v2211
    %2830 = vmatprep.subr.mxu0 %v2208
    %2831 = vmatpush1.msra.mxu0 %v2207
    %2832 = vmatprep.subr.mxu0 %v2204
    %2833 = vmatpush1.msra.mxu0 %v2203
    %2834 = vmatprep.subr.mxu0 %v2200
    %2835 = vmatpush1.msra.mxu0 %v2199
    %2836 = vmatprep.subr.mxu0 %v2196
    %2837 = vmatpush1.msra.mxu0 %v2195
    %2838 = vmatprep.subr.mxu0 %v2192
    %2839 = vmatpush1.msra.mxu0 %v2191
    %2840 = vmatprep.subr.mxu0 %v2188
    %2841 = vmatpush1.msra.mxu0 %v2187
    %2842 = vmatprep.subr.mxu0 %v2184
    %2843 = vmatpush1.msra.mxu0 %v2183
    %2844 = vmatprep.subr.mxu0 %v2180
    %2845 = vmatpush1.msra.mxu0 %v2179
    %2846 = vmatprep.subr.mxu0 %v2176
    %2847 = vmatpush1.msra.mxu0 %v2175
    %2848 = vmatprep.subr.mxu0 %v2172
    %2849 = vmatpush1.msra.mxu0 %v2171
    %2850 = vmatprep.subr.mxu0 0.0
    %2851 = vmatpush2.msra.mxu0 0.0
    %2852 = vmatprep.subr.mxu0 0.0
    %2853 = vmatpush2.msra.mxu0 0.0
    %2854 = vmatprep.subr.mxu0 0.0
    %2855 = vmatpush2.msra.mxu0 0.0
    %2856 = vmatprep.subr.mxu0 0.0
    %2857 = vmatpush2.msra.mxu0 0.0
    %2858 = vmatprep.subr.mxu0 0.0
    %2859 = vmatpush2.msra.mxu0 0.0
    %2860 = vmatprep.subr.mxu0 0.0
    %2861 = vmatpush2.msra.mxu0 0.0
    %2862 = vmatprep.subr.mxu0 0.0
    %2863 = vmatpush2.msra.mxu0 0.0
    %2864 = vmatprep.subr.mxu0 0.0
    %2865 = vmatpush2.msra.mxu0 0.0
    %2866 = vmatprep.subr.mxu0 0.0
    %2867 = vmatpush2.msra.mxu0 0.0
    %2868 = vmatprep.subr.mxu0 0.0
    %2869 = vmatpush2.msra.mxu0 0.0
    %2870 = vmatprep.subr.mxu0 0.0
    %2871 = vmatpush2.msra.mxu0 0.0
    %2872 = vmatprep.subr.mxu0 0.0
    %2873 = vmatpush2.msra.mxu0 0.0
    %2874 = vmatprep.subr.mxu0 0.0
    %2875 = vmatpush2.msra.mxu0 0.0
    %2876 = vmatprep.subr.mxu0 0.0
    %2877 = vmatpush2.msra.mxu0 0.0
    %2878 = vmatprep.subr.mxu0 0.0
    %2879 = vmatpush2.msra.mxu0 0.0
    %2880 = vmatprep.subr.mxu0 0.0
    %2881 = vmatpush2.msra.mxu0 0.0
    %2882 = vmatprep.mubr.f32.mxu0 0.0
    %2883 = vmatmul.mubr.f32.gmra.mxu0 %v2815
    %v2884 = vpop.f32.mrf.mxu0
    %v2885 = vadd.f32 0.0, %v2884
    %v2886 = vpop.f32.mrf.mxu0
    %v2887 = vadd.f32 0.0, %v2886
    %2888 = vdwg.mxu0
    %2889 = vmatprep.subr.mxu0 %v2234
    %2890 = vmatpush1.msra.mxu0 %v2233
    %2891 = vmatprep.subr.mxu0 %v2230
    %2892 = vmatpush1.msra.mxu0 %v2229
    %2893 = vmatprep.subr.mxu0 %v2226
    %2894 = vmatpush1.msra.mxu0 %v2225
    %2895 = vmatprep.subr.mxu0 %v2222
    %2896 = vmatpush1.msra.mxu0 %v2221
    %2897 = vmatprep.subr.mxu0 %v2218
    %2898 = vmatpush1.msra.mxu0 %v2217
    %2899 = vmatprep.subr.mxu0 %v2214
    %2900 = vmatpush1.msra.mxu0 %v2213
    %2901 = vmatprep.subr.mxu0 %v2210
    %2902 = vmatpush1.msra.mxu0 %v2209
    %2903 = vmatprep.subr.mxu0 %v2206
    %2904 = vmatpush1.msra.mxu0 %v2205
    %2905 = vmatprep.subr.mxu0 %v2202
    %2906 = vmatpush1.msra.mxu0 %v2201
    %2907 = vmatprep.subr.mxu0 %v2198
    %2908 = vmatpush1.msra.mxu0 %v2197
    %2909 = vmatprep.subr.mxu0 %v2194
    %2910 = vmatpush1.msra.mxu0 %v2193
    %2911 = vmatprep.subr.mxu0 %v2190
    %2912 = vmatpush1.msra.mxu0 %v2189
    %2913 = vmatprep.subr.mxu0 %v2186
    %2914 = vmatpush1.msra.mxu0 %v2185
    %2915 = vmatprep.subr.mxu0 %v2182
    %2916 = vmatpush1.msra.mxu0 %v2181
    %2917 = vmatprep.subr.mxu0 %v2178
    %2918 = vmatpush1.msra.mxu0 %v2177
    %2919 = vmatprep.subr.mxu0 %v2174
    %2920 = vmatpush1.msra.mxu0 %v2173
    %2921 = vmatprep.subr.mxu0 0.0
    %2922 = vmatpush2.msra.mxu0 0.0
    %2923 = vmatprep.subr.mxu0 0.0
    %2924 = vmatpush2.msra.mxu0 0.0
    %2925 = vmatprep.subr.mxu0 0.0
    %2926 = vmatpush2.msra.mxu0 0.0
    %2927 = vmatprep.subr.mxu0 0.0
    %2928 = vmatpush2.msra.mxu0 0.0
    %2929 = vmatprep.subr.mxu0 0.0
    %2930 = vmatpush2.msra.mxu0 0.0
    %2931 = vmatprep.subr.mxu0 0.0
    %2932 = vmatpush2.msra.mxu0 0.0
    %2933 = vmatprep.subr.mxu0 0.0
    %2934 = vmatpush2.msra.mxu0 0.0
    %2935 = vmatprep.subr.mxu0 0.0
    %2936 = vmatpush2.msra.mxu0 0.0
    %2937 = vmatprep.subr.mxu0 0.0
    %2938 = vmatpush2.msra.mxu0 0.0
    %2939 = vmatprep.subr.mxu0 0.0
    %2940 = vmatpush2.msra.mxu0 0.0
    %2941 = vmatprep.subr.mxu0 0.0
    %2942 = vmatpush2.msra.mxu0 0.0
    %2943 = vmatprep.subr.mxu0 0.0
    %2944 = vmatpush2.msra.mxu0 0.0
    %2945 = vmatprep.subr.mxu0 0.0
    %2946 = vmatpush2.msra.mxu0 0.0
    %2947 = vmatprep.subr.mxu0 0.0
    %2948 = vmatpush2.msra.mxu0 0.0
    %2949 = vmatprep.subr.mxu0 0.0
    %2950 = vmatpush2.msra.mxu0 0.0
    %2951 = vmatprep.subr.mxu0 0.0
    %2952 = vmatpush2.msra.mxu0 0.0
    %2953 = vmatprep.mubr.f32.mxu0 0.0
    %2954 = vmatmul.mubr.f32.gmra.mxu0 %v2815
    %v2955 = vpop.f32.mrf.mxu0
    %v2956 = vadd.f32 0.0, %v2955
    %v2957 = vpop.f32.mrf.mxu0
    %v2958 = vadd.f32 0.0, %v2957
    %2959 = vdwg.mxu0
    %v2964 = vcombine.low %v2885, %v2887
    %v2965 = vcombine.low %v2956, %v2958
    %v2967 = vunpack.c.l.s4 1966171168
    %v2968 = vunpack.c.0.s8 %v2967
    %v2969 = vlaneseq
    %v2970 = vshrl.u32 %v2969, 7
    %v2971 = vsub.s32 %v2968, %v2970
    %v2972 = vrot.slane %v2964, %v2971
    %v2974 = vunpack.c.l.s4 1966171168
    %v2975 = vunpack.c.0.s8 %v2974
    %v2976 = vlaneseq
    %v2977 = vshrl.u32 %v2976, 7
    %v2978 = vsub.s32 %v2975, %v2977
    %v2979 = vrot.slane %v2965, %v2978
    %v2980 = vcombine.low %v2972, %v2979
    %v2982 = vunpack.c.l.s4 1966171168
    %v2983 = vunpack.c.0.s8 %v2982
    %v2984 = vlaneseq
    %v2985 = vshrl.u32 %v2984, 7
    %v2986 = vsub.s32 %v2983, %v2985
    %v2987 = vrot.slane %v2980, %v2986
    %v2989 = vadd.f32 %v2817, %v2987
    %v2990 = vxor.u32 %v2989, 2147483648
    %v2991 = vmul.f32 %v2990, 1.442695
    %v2992 = vpow.pop %v2991
    %v2993 = vadd.f32 %v2992, 1.0
    %v2994 = vrcp.pop %v2993
    %v2995 = vmul.f32 1.0, %v2994
    %v2996 = vtanh.pop %v2989
    %v2998 = vrot.slane %v2995, 1
    %v3000 = vmul.f32 %v2998, %v2811
    %v3002 = vrot.slane %v2996, 2
    %v3004 = vmul.f32 %v2995, %v3002
    %v3005 = vadd.f32 %v3000, %v3004
    %v3006 = vtanh.pop %v3005
    %v3007 = vrot.slane %v2995, 3
    %v3009 = vmul.f32 %v3007, %v3006
    %s3010 = scalar_lea.vmem [#allocation4], 4
    %v3011 = vld [vmem:[%s3010] ss:$8 sm:$0xf]
    %3012 = vmatprep.subr.mxu0 %v2232
    %3013 = vmatpush1.msra.mxu0 %v2231
    %3014 = vmatprep.subr.mxu0 %v2228
    %3015 = vmatpush1.msra.mxu0 %v2227
    %3016 = vmatprep.subr.mxu0 %v2224
    %3017 = vmatpush1.msra.mxu0 %v2223
    %3018 = vmatprep.subr.mxu0 %v2220
    %3019 = vmatpush1.msra.mxu0 %v2219
    %3020 = vmatprep.subr.mxu0 %v2216
    %3021 = vmatpush1.msra.mxu0 %v2215
    %3022 = vmatprep.subr.mxu0 %v2212
    %3023 = vmatpush1.msra.mxu0 %v2211
    %3024 = vmatprep.subr.mxu0 %v2208
    %3025 = vmatpush1.msra.mxu0 %v2207
    %3026 = vmatprep.subr.mxu0 %v2204
    %3027 = vmatpush1.msra.mxu0 %v2203
    %3028 = vmatprep.subr.mxu0 %v2200
    %3029 = vmatpush1.msra.mxu0 %v2199
    %3030 = vmatprep.subr.mxu0 %v2196
    %3031 = vmatpush1.msra.mxu0 %v2195
    %3032 = vmatprep.subr.mxu0 %v2192
    %3033 = vmatpush1.msra.mxu0 %v2191
    %3034 = vmatprep.subr.mxu0 %v2188
    %3035 = vmatpush1.msra.mxu0 %v2187
    %3036 = vmatprep.subr.mxu0 %v2184
    %3037 = vmatpush1.msra.mxu0 %v2183
    %3038 = vmatprep.subr.mxu0 %v2180
    %3039 = vmatpush1.msra.mxu0 %v2179
    %3040 = vmatprep.subr.mxu0 %v2176
    %3041 = vmatpush1.msra.mxu0 %v2175
    %3042 = vmatprep.subr.mxu0 %v2172
    %3043 = vmatpush1.msra.mxu0 %v2171
    %3044 = vmatprep.subr.mxu0 0.0
    %3045 = vmatpush2.msra.mxu0 0.0
    %3046 = vmatprep.subr.mxu0 0.0
    %3047 = vmatpush2.msra.mxu0 0.0
    %3048 = vmatprep.subr.mxu0 0.0
    %3049 = vmatpush2.msra.mxu0 0.0
    %3050 = vmatprep.subr.mxu0 0.0
    %3051 = vmatpush2.msra.mxu0 0.0
    %3052 = vmatprep.subr.mxu0 0.0
    %3053 = vmatpush2.msra.mxu0 0.0
    %3054 = vmatprep.subr.mxu0 0.0
    %3055 = vmatpush2.msra.mxu0 0.0
    %3056 = vmatprep.subr.mxu0 0.0
    %3057 = vmatpush2.msra.mxu0 0.0
    %3058 = vmatprep.subr.mxu0 0.0
    %3059 = vmatpush2.msra.mxu0 0.0
    %3060 = vmatprep.subr.mxu0 0.0
    %3061 = vmatpush2.msra.mxu0 0.0
    %3062 = vmatprep.subr.mxu0 0.0
    %3063 = vmatpush2.msra.mxu0 0.0
    %3064 = vmatprep.subr.mxu0 0.0
    %3065 = vmatpush2.msra.mxu0 0.0
    %3066 = vmatprep.subr.mxu0 0.0
    %3067 = vmatpush2.msra.mxu0 0.0
    %3068 = vmatprep.subr.mxu0 0.0
    %3069 = vmatpush2.msra.mxu0 0.0
    %3070 = vmatprep.subr.mxu0 0.0
    %3071 = vmatpush2.msra.mxu0 0.0
    %3072 = vmatprep.subr.mxu0 0.0
    %3073 = vmatpush2.msra.mxu0 0.0
    %3074 = vmatprep.subr.mxu0 0.0
    %3075 = vmatpush2.msra.mxu0 0.0
    %3076 = vmatprep.mubr.f32.mxu0 0.0
    %3077 = vmatmul.mubr.f32.gmra.mxu0 %v3009
    %v3078 = vpop.f32.mrf.mxu0
    %v3079 = vadd.f32 0.0, %v3078
    %v3080 = vpop.f32.mrf.mxu0
    %v3081 = vadd.f32 0.0, %v3080
    %3082 = vdwg.mxu0
    %3083 = vmatprep.subr.mxu0 %v2234
    %3084 = vmatpush1.msra.mxu0 %v2233
    %3085 = vmatprep.subr.mxu0 %v2230
    %3086 = vmatpush1.msra.mxu0 %v2229
    %3087 = vmatprep.subr.mxu0 %v2226
    %3088 = vmatpush1.msra.mxu0 %v2225
    %3089 = vmatprep.subr.mxu0 %v2222
    %3090 = vmatpush1.msra.mxu0 %v2221
    %3091 = vmatprep.subr.mxu0 %v2218
    %3092 = vmatpush1.msra.mxu0 %v2217
    %3093 = vmatprep.subr.mxu0 %v2214
    %3094 = vmatpush1.msra.mxu0 %v2213
    %3095 = vmatprep.subr.mxu0 %v2210
    %3096 = vmatpush1.msra.mxu0 %v2209
    %3097 = vmatprep.subr.mxu0 %v2206
    %3098 = vmatpush1.msra.mxu0 %v2205
    %3099 = vmatprep.subr.mxu0 %v2202
    %3100 = vmatpush1.msra.mxu0 %v2201
    %3101 = vmatprep.subr.mxu0 %v2198
    %3102 = vmatpush1.msra.mxu0 %v2197
    %3103 = vmatprep.subr.mxu0 %v2194
    %3104 = vmatpush1.msra.mxu0 %v2193
    %3105 = vmatprep.subr.mxu0 %v2190
    %3106 = vmatpush1.msra.mxu0 %v2189
    %3107 = vmatprep.subr.mxu0 %v2186
    %3108 = vmatpush1.msra.mxu0 %v2185
    %3109 = vmatprep.subr.mxu0 %v2182
    %3110 = vmatpush1.msra.mxu0 %v2181
    %3111 = vmatprep.subr.mxu0 %v2178
    %3112 = vmatpush1.msra.mxu0 %v2177
    %3113 = vmatprep.subr.mxu0 %v2174
    %3114 = vmatpush1.msra.mxu0 %v2173
    %3115 = vmatprep.subr.mxu0 0.0
    %3116 = vmatpush2.msra.mxu0 0.0
    %3117 = vmatprep.subr.mxu0 0.0
    %3118 = vmatpush2.msra.mxu0 0.0
    %3119 = vmatprep.subr.mxu0 0.0
    %3120 = vmatpush2.msra.mxu0 0.0
    %3121 = vmatprep.subr.mxu0 0.0
    %3122 = vmatpush2.msra.mxu0 0.0
    %3123 = vmatprep.subr.mxu0 0.0
    %3124 = vmatpush2.msra.mxu0 0.0
    %3125 = vmatprep.subr.mxu0 0.0
    %3126 = vmatpush2.msra.mxu0 0.0
    %3127 = vmatprep.subr.mxu0 0.0
    %3128 = vmatpush2.msra.mxu0 0.0
    %3129 = vmatprep.subr.mxu0 0.0
    %3130 = vmatpush2.msra.mxu0 0.0
    %3131 = vmatprep.subr.mxu0 0.0
    %3132 = vmatpush2.msra.mxu0 0.0
    %3133 = vmatprep.subr.mxu0 0.0
    %3134 = vmatpush2.msra.mxu0 0.0
    %3135 = vmatprep.subr.mxu0 0.0
    %3136 = vmatpush2.msra.mxu0 0.0
    %3137 = vmatprep.subr.mxu0 0.0
    %3138 = vmatpush2.msra.mxu0 0.0
    %3139 = vmatprep.subr.mxu0 0.0
    %3140 = vmatpush2.msra.mxu0 0.0
    %3141 = vmatprep.subr.mxu0 0.0
    %3142 = vmatpush2.msra.mxu0 0.0
    %3143 = vmatprep.subr.mxu0 0.0
    %3144 = vmatpush2.msra.mxu0 0.0
    %3145 = vmatprep.subr.mxu0 0.0
    %3146 = vmatpush2.msra.mxu0 0.0
    %3147 = vmatprep.mubr.f32.mxu0 0.0
    %3148 = vmatmul.mubr.f32.gmra.mxu0 %v3009
    %v3149 = vpop.f32.mrf.mxu0
    %v3150 = vadd.f32 0.0, %v3149
    %v3151 = vpop.f32.mrf.mxu0
    %v3152 = vadd.f32 0.0, %v3151
    %3153 = vdwg.mxu0
    %v3158 = vcombine.low %v3079, %v3081
    %v3159 = vcombine.low %v3150, %v3152
    %v3161 = vunpack.c.l.s4 1966171168
    %v3162 = vunpack.c.0.s8 %v3161
    %v3163 = vlaneseq
    %v3164 = vshrl.u32 %v3163, 7
    %v3165 = vsub.s32 %v3162, %v3164
    %v3166 = vrot.slane %v3158, %v3165
    %v3168 = vunpack.c.l.s4 1966171168
    %v3169 = vunpack.c.0.s8 %v3168
    %v3170 = vlaneseq
    %v3171 = vshrl.u32 %v3170, 7
    %v3172 = vsub.s32 %v3169, %v3171
    %v3173 = vrot.slane %v3159, %v3172
    %v3174 = vcombine.low %v3166, %v3173
    %v3176 = vunpack.c.l.s4 1966171168
    %v3177 = vunpack.c.0.s8 %v3176
    %v3178 = vlaneseq
    %v3179 = vshrl.u32 %v3178, 7
    %v3180 = vsub.s32 %v3177, %v3179
    %v3181 = vrot.slane %v3174, %v3180
    %v3183 = vadd.f32 %v3011, %v3181
    %v3184 = vxor.u32 %v3183, 2147483648
    %v3185 = vmul.f32 %v3184, 1.442695
    %v3186 = vpow.pop %v3185
    %v3187 = vadd.f32 %v3186, 1.0
    %v3188 = vrcp.pop %v3187
    %v3189 = vmul.f32 1.0, %v3188
    %v3190 = vtanh.pop %v3183
    %v3192 = vrot.slane %v3189, 1
    %v3194 = vmul.f32 %v3192, %v3005
    %v3196 = vrot.slane %v3190, 2
    %v3198 = vmul.f32 %v3189, %v3196
    %v3199 = vadd.f32 %v3194, %v3198
    %v3200 = vtanh.pop %v3199
    %v3201 = vrot.slane %v3189, 3
    %v3203 = vmul.f32 %v3201, %v3200
    %s3204 = scalar_lea.vmem [#allocation4], 5
    %v3205 = vld [vmem:[%s3204] ss:$8 sm:$0xf]
    %3206 = vmatprep.subr.mxu0 %v2232
    %3207 = vmatpush1.msra.mxu0 %v2231
    %3208 = vmatprep.subr.mxu0 %v2228
    %3209 = vmatpush1.msra.mxu0 %v2227
    %3210 = vmatprep.subr.mxu0 %v2224
    %3211 = vmatpush1.msra.mxu0 %v2223
    %3212 = vmatprep.subr.mxu0 %v2220
    %3213 = vmatpush1.msra.mxu0 %v2219
    %3214 = vmatprep.subr.mxu0 %v2216
    %3215 = vmatpush1.msra.mxu0 %v2215
    %3216 = vmatprep.subr.mxu0 %v2212
    %3217 = vmatpush1.msra.mxu0 %v2211
    %3218 = vmatprep.subr.mxu0 %v2208
    %3219 = vmatpush1.msra.mxu0 %v2207
    %3220 = vmatprep.subr.mxu0 %v2204
    %3221 = vmatpush1.msra.mxu0 %v2203
    %3222 = vmatprep.subr.mxu0 %v2200
    %3223 = vmatpush1.msra.mxu0 %v2199
    %3224 = vmatprep.subr.mxu0 %v2196
    %3225 = vmatpush1.msra.mxu0 %v2195
    %3226 = vmatprep.subr.mxu0 %v2192
    %3227 = vmatpush1.msra.mxu0 %v2191
    %3228 = vmatprep.subr.mxu0 %v2188
    %3229 = vmatpush1.msra.mxu0 %v2187
    %3230 = vmatprep.subr.mxu0 %v2184
    %3231 = vmatpush1.msra.mxu0 %v2183
    %3232 = vmatprep.subr.mxu0 %v2180
    %3233 = vmatpush1.msra.mxu0 %v2179
    %3234 = vmatprep.subr.mxu0 %v2176
    %3235 = vmatpush1.msra.mxu0 %v2175
    %3236 = vmatprep.subr.mxu0 %v2172
    %3237 = vmatpush1.msra.mxu0 %v2171
    %3238 = vmatprep.subr.mxu0 0.0
    %3239 = vmatpush2.msra.mxu0 0.0
    %3240 = vmatprep.subr.mxu0 0.0
    %3241 = vmatpush2.msra.mxu0 0.0
    %3242 = vmatprep.subr.mxu0 0.0
    %3243 = vmatpush2.msra.mxu0 0.0
    %3244 = vmatprep.subr.mxu0 0.0
    %3245 = vmatpush2.msra.mxu0 0.0
    %3246 = vmatprep.subr.mxu0 0.0
    %3247 = vmatpush2.msra.mxu0 0.0
    %3248 = vmatprep.subr.mxu0 0.0
    %3249 = vmatpush2.msra.mxu0 0.0
    %3250 = vmatprep.subr.mxu0 0.0
    %3251 = vmatpush2.msra.mxu0 0.0
    %3252 = vmatprep.subr.mxu0 0.0
    %3253 = vmatpush2.msra.mxu0 0.0
    %3254 = vmatprep.subr.mxu0 0.0
    %3255 = vmatpush2.msra.mxu0 0.0
    %3256 = vmatprep.subr.mxu0 0.0
    %3257 = vmatpush2.msra.mxu0 0.0
    %3258 = vmatprep.subr.mxu0 0.0
    %3259 = vmatpush2.msra.mxu0 0.0
    %3260 = vmatprep.subr.mxu0 0.0
    %3261 = vmatpush2.msra.mxu0 0.0
    %3262 = vmatprep.subr.mxu0 0.0
    %3263 = vmatpush2.msra.mxu0 0.0
    %3264 = vmatprep.subr.mxu0 0.0
    %3265 = vmatpush2.msra.mxu0 0.0
    %3266 = vmatprep.subr.mxu0 0.0
    %3267 = vmatpush2.msra.mxu0 0.0
    %3268 = vmatprep.subr.mxu0 0.0
    %3269 = vmatpush2.msra.mxu0 0.0
    %3270 = vmatprep.mubr.f32.mxu0 0.0
    %3271 = vmatmul.mubr.f32.gmra.mxu0 %v3203
    %v3272 = vpop.f32.mrf.mxu0
    %v3273 = vadd.f32 0.0, %v3272
    %v3274 = vpop.f32.mrf.mxu0
    %v3275 = vadd.f32 0.0, %v3274
    %3276 = vdwg.mxu0
    %3277 = vmatprep.subr.mxu0 %v2234
    %3278 = vmatpush1.msra.mxu0 %v2233
    %3279 = vmatprep.subr.mxu0 %v2230
    %3280 = vmatpush1.msra.mxu0 %v2229
    %3281 = vmatprep.subr.mxu0 %v2226
    %3282 = vmatpush1.msra.mxu0 %v2225
    %3283 = vmatprep.subr.mxu0 %v2222
    %3284 = vmatpush1.msra.mxu0 %v2221
    %3285 = vmatprep.subr.mxu0 %v2218
    %3286 = vmatpush1.msra.mxu0 %v2217
    %3287 = vmatprep.subr.mxu0 %v2214
    %3288 = vmatpush1.msra.mxu0 %v2213
    %3289 = vmatprep.subr.mxu0 %v2210
    %3290 = vmatpush1.msra.mxu0 %v2209
    %3291 = vmatprep.subr.mxu0 %v2206
    %3292 = vmatpush1.msra.mxu0 %v2205
    %3293 = vmatprep.subr.mxu0 %v2202
    %3294 = vmatpush1.msra.mxu0 %v2201
    %3295 = vmatprep.subr.mxu0 %v2198
    %3296 = vmatpush1.msra.mxu0 %v2197
    %3297 = vmatprep.subr.mxu0 %v2194
    %3298 = vmatpush1.msra.mxu0 %v2193
    %3299 = vmatprep.subr.mxu0 %v2190
    %3300 = vmatpush1.msra.mxu0 %v2189
    %3301 = vmatprep.subr.mxu0 %v2186
    %3302 = vmatpush1.msra.mxu0 %v2185
    %3303 = vmatprep.subr.mxu0 %v2182
    %3304 = vmatpush1.msra.mxu0 %v2181
    %3305 = vmatprep.subr.mxu0 %v2178
    %3306 = vmatpush1.msra.mxu0 %v2177
    %3307 = vmatprep.subr.mxu0 %v2174
    %3308 = vmatpush1.msra.mxu0 %v2173
    %3309 = vmatprep.subr.mxu0 0.0
    %3310 = vmatpush2.msra.mxu0 0.0
    %3311 = vmatprep.subr.mxu0 0.0
    %3312 = vmatpush2.msra.mxu0 0.0
    %3313 = vmatprep.subr.mxu0 0.0
    %3314 = vmatpush2.msra.mxu0 0.0
    %3315 = vmatprep.subr.mxu0 0.0
    %3316 = vmatpush2.msra.mxu0 0.0
    %3317 = vmatprep.subr.mxu0 0.0
    %3318 = vmatpush2.msra.mxu0 0.0
    %3319 = vmatprep.subr.mxu0 0.0
    %3320 = vmatpush2.msra.mxu0 0.0
    %3321 = vmatprep.subr.mxu0 0.0
    %3322 = vmatpush2.msra.mxu0 0.0
    %3323 = vmatprep.subr.mxu0 0.0
    %3324 = vmatpush2.msra.mxu0 0.0
    %3325 = vmatprep.subr.mxu0 0.0
    %3326 = vmatpush2.msra.mxu0 0.0
    %3327 = vmatprep.subr.mxu0 0.0
    %3328 = vmatpush2.msra.mxu0 0.0
    %3329 = vmatprep.subr.mxu0 0.0
    %3330 = vmatpush2.msra.mxu0 0.0
    %3331 = vmatprep.subr.mxu0 0.0
    %3332 = vmatpush2.msra.mxu0 0.0
    %3333 = vmatprep.subr.mxu0 0.0
    %3334 = vmatpush2.msra.mxu0 0.0
    %3335 = vmatprep.subr.mxu0 0.0
    %3336 = vmatpush2.msra.mxu0 0.0
    %3337 = vmatprep.subr.mxu0 0.0
    %3338 = vmatpush2.msra.mxu0 0.0
    %3339 = vmatprep.subr.mxu0 0.0
    %3340 = vmatpush2.msra.mxu0 0.0
    %3341 = vmatprep.mubr.f32.mxu0 0.0
    %3342 = vmatmul.mubr.f32.gmra.mxu0 %v3203
    %v3343 = vpop.f32.mrf.mxu0
    %v3344 = vadd.f32 0.0, %v3343
    %v3345 = vpop.f32.mrf.mxu0
    %v3346 = vadd.f32 0.0, %v3345
    %3347 = vdwg.mxu0
    %v3352 = vcombine.low %v3273, %v3275
    %v3353 = vcombine.low %v3344, %v3346
    %v3355 = vunpack.c.l.s4 1966171168
    %v3356 = vunpack.c.0.s8 %v3355
    %v3357 = vlaneseq
    %v3358 = vshrl.u32 %v3357, 7
    %v3359 = vsub.s32 %v3356, %v3358
    %v3360 = vrot.slane %v3352, %v3359
    %v3362 = vunpack.c.l.s4 1966171168
    %v3363 = vunpack.c.0.s8 %v3362
    %v3364 = vlaneseq
    %v3365 = vshrl.u32 %v3364, 7
    %v3366 = vsub.s32 %v3363, %v3365
    %v3367 = vrot.slane %v3353, %v3366
    %v3368 = vcombine.low %v3360, %v3367
    %v3370 = vunpack.c.l.s4 1966171168
    %v3371 = vunpack.c.0.s8 %v3370
    %v3372 = vlaneseq
    %v3373 = vshrl.u32 %v3372, 7
    %v3374 = vsub.s32 %v3371, %v3373
    %v3375 = vrot.slane %v3368, %v3374
    %v3377 = vadd.f32 %v3205, %v3375
    %v3378 = vxor.u32 %v3377, 2147483648
    %v3379 = vmul.f32 %v3378, 1.442695
    %v3380 = vpow.pop %v3379
    %v3381 = vadd.f32 %v3380, 1.0
    %v3382 = vrcp.pop %v3381
    %v3383 = vmul.f32 1.0, %v3382
    %v3384 = vtanh.pop %v3377
    %v3386 = vrot.slane %v3383, 1
    %v3388 = vmul.f32 %v3386, %v3199
    %v3390 = vrot.slane %v3384, 2
    %v3392 = vmul.f32 %v3383, %v3390
    %v3393 = vadd.f32 %v3388, %v3392
    %v3394 = vtanh.pop %v3393
    %v3395 = vrot.slane %v3383, 3
    %v3397 = vmul.f32 %v3395, %v3394
    %s3398 = scalar_lea.vmem [#allocation4], 6
    %v3399 = vld [vmem:[%s3398] ss:$8 sm:$0xf]
    %3400 = vmatprep.subr.mxu0 %v2232
    %3401 = vmatpush1.msra.mxu0 %v2231
    %3402 = vmatprep.subr.mxu0 %v2228
    %3403 = vmatpush1.msra.mxu0 %v2227
    %3404 = vmatprep.subr.mxu0 %v2224
    %3405 = vmatpush1.msra.mxu0 %v2223
    %3406 = vmatprep.subr.mxu0 %v2220
    %3407 = vmatpush1.msra.mxu0 %v2219
    %3408 = vmatprep.subr.mxu0 %v2216
    %3409 = vmatpush1.msra.mxu0 %v2215
    %3410 = vmatprep.subr.mxu0 %v2212
    %3411 = vmatpush1.msra.mxu0 %v2211
    %3412 = vmatprep.subr.mxu0 %v2208
    %3413 = vmatpush1.msra.mxu0 %v2207
    %3414 = vmatprep.subr.mxu0 %v2204
    %3415 = vmatpush1.msra.mxu0 %v2203
    %3416 = vmatprep.subr.mxu0 %v2200
    %3417 = vmatpush1.msra.mxu0 %v2199
    %3418 = vmatprep.subr.mxu0 %v2196
    %3419 = vmatpush1.msra.mxu0 %v2195
    %3420 = vmatprep.subr.mxu0 %v2192
    %3421 = vmatpush1.msra.mxu0 %v2191
    %3422 = vmatprep.subr.mxu0 %v2188
    %3423 = vmatpush1.msra.mxu0 %v2187
    %3424 = vmatprep.subr.mxu0 %v2184
    %3425 = vmatpush1.msra.mxu0 %v2183
    %3426 = vmatprep.subr.mxu0 %v2180
    %3427 = vmatpush1.msra.mxu0 %v2179
    %3428 = vmatprep.subr.mxu0 %v2176
    %3429 = vmatpush1.msra.mxu0 %v2175
    %3430 = vmatprep.subr.mxu0 %v2172
    %3431 = vmatpush1.msra.mxu0 %v2171
    %3432 = vmatprep.subr.mxu0 0.0
    %3433 = vmatpush2.msra.mxu0 0.0
    %3434 = vmatprep.subr.mxu0 0.0
    %3435 = vmatpush2.msra.mxu0 0.0
    %3436 = vmatprep.subr.mxu0 0.0
    %3437 = vmatpush2.msra.mxu0 0.0
    %3438 = vmatprep.subr.mxu0 0.0
    %3439 = vmatpush2.msra.mxu0 0.0
    %3440 = vmatprep.subr.mxu0 0.0
    %3441 = vmatpush2.msra.mxu0 0.0
    %3442 = vmatprep.subr.mxu0 0.0
    %3443 = vmatpush2.msra.mxu0 0.0
    %3444 = vmatprep.subr.mxu0 0.0
    %3445 = vmatpush2.msra.mxu0 0.0
    %3446 = vmatprep.subr.mxu0 0.0
    %3447 = vmatpush2.msra.mxu0 0.0
    %3448 = vmatprep.subr.mxu0 0.0
    %3449 = vmatpush2.msra.mxu0 0.0
    %3450 = vmatprep.subr.mxu0 0.0
    %3451 = vmatpush2.msra.mxu0 0.0
    %3452 = vmatprep.subr.mxu0 0.0
    %3453 = vmatpush2.msra.mxu0 0.0
    %3454 = vmatprep.subr.mxu0 0.0
    %3455 = vmatpush2.msra.mxu0 0.0
    %3456 = vmatprep.subr.mxu0 0.0
    %3457 = vmatpush2.msra.mxu0 0.0
    %3458 = vmatprep.subr.mxu0 0.0
    %3459 = vmatpush2.msra.mxu0 0.0
    %3460 = vmatprep.subr.mxu0 0.0
    %3461 = vmatpush2.msra.mxu0 0.0
    %3462 = vmatprep.subr.mxu0 0.0
    %3463 = vmatpush2.msra.mxu0 0.0
    %3464 = vmatprep.mubr.f32.mxu0 0.0
    %3465 = vmatmul.mubr.f32.gmra.mxu0 %v3397
    %v3466 = vpop.f32.mrf.mxu0
    %v3467 = vadd.f32 0.0, %v3466
    %v3468 = vpop.f32.mrf.mxu0
    %v3469 = vadd.f32 0.0, %v3468
    %3470 = vdwg.mxu0
    %3471 = vmatprep.subr.mxu0 %v2234
    %3472 = vmatpush1.msra.mxu0 %v2233
    %3473 = vmatprep.subr.mxu0 %v2230
    %3474 = vmatpush1.msra.mxu0 %v2229
    %3475 = vmatprep.subr.mxu0 %v2226
    %3476 = vmatpush1.msra.mxu0 %v2225
    %3477 = vmatprep.subr.mxu0 %v2222
    %3478 = vmatpush1.msra.mxu0 %v2221
    %3479 = vmatprep.subr.mxu0 %v2218
    %3480 = vmatpush1.msra.mxu0 %v2217
    %3481 = vmatprep.subr.mxu0 %v2214
    %3482 = vmatpush1.msra.mxu0 %v2213
    %3483 = vmatprep.subr.mxu0 %v2210
    %3484 = vmatpush1.msra.mxu0 %v2209
    %3485 = vmatprep.subr.mxu0 %v2206
    %3486 = vmatpush1.msra.mxu0 %v2205
    %3487 = vmatprep.subr.mxu0 %v2202
    %3488 = vmatpush1.msra.mxu0 %v2201
    %3489 = vmatprep.subr.mxu0 %v2198
    %3490 = vmatpush1.msra.mxu0 %v2197
    %3491 = vmatprep.subr.mxu0 %v2194
    %3492 = vmatpush1.msra.mxu0 %v2193
    %3493 = vmatprep.subr.mxu0 %v2190
    %3494 = vmatpush1.msra.mxu0 %v2189
    %3495 = vmatprep.subr.mxu0 %v2186
    %3496 = vmatpush1.msra.mxu0 %v2185
    %3497 = vmatprep.subr.mxu0 %v2182
    %3498 = vmatpush1.msra.mxu0 %v2181
    %3499 = vmatprep.subr.mxu0 %v2178
    %3500 = vmatpush1.msra.mxu0 %v2177
    %3501 = vmatprep.subr.mxu0 %v2174
    %3502 = vmatpush1.msra.mxu0 %v2173
    %3503 = vmatprep.subr.mxu0 0.0
    %3504 = vmatpush2.msra.mxu0 0.0
    %3505 = vmatprep.subr.mxu0 0.0
    %3506 = vmatpush2.msra.mxu0 0.0
    %3507 = vmatprep.subr.mxu0 0.0
    %3508 = vmatpush2.msra.mxu0 0.0
    %3509 = vmatprep.subr.mxu0 0.0
    %3510 = vmatpush2.msra.mxu0 0.0
    %3511 = vmatprep.subr.mxu0 0.0
    %3512 = vmatpush2.msra.mxu0 0.0
    %3513 = vmatprep.subr.mxu0 0.0
    %3514 = vmatpush2.msra.mxu0 0.0
    %3515 = vmatprep.subr.mxu0 0.0
    %3516 = vmatpush2.msra.mxu0 0.0
    %3517 = vmatprep.subr.mxu0 0.0
    %3518 = vmatpush2.msra.mxu0 0.0
    %3519 = vmatprep.subr.mxu0 0.0
    %3520 = vmatpush2.msra.mxu0 0.0
    %3521 = vmatprep.subr.mxu0 0.0
    %3522 = vmatpush2.msra.mxu0 0.0
    %3523 = vmatprep.subr.mxu0 0.0
    %3524 = vmatpush2.msra.mxu0 0.0
    %3525 = vmatprep.subr.mxu0 0.0
    %3526 = vmatpush2.msra.mxu0 0.0
    %3527 = vmatprep.subr.mxu0 0.0
    %3528 = vmatpush2.msra.mxu0 0.0
    %3529 = vmatprep.subr.mxu0 0.0
    %3530 = vmatpush2.msra.mxu0 0.0
    %3531 = vmatprep.subr.mxu0 0.0
    %3532 = vmatpush2.msra.mxu0 0.0
    %3533 = vmatprep.subr.mxu0 0.0
    %3534 = vmatpush2.msra.mxu0 0.0
    %3535 = vmatprep.mubr.f32.mxu0 0.0
    %3536 = vmatmul.mubr.f32.gmra.mxu0 %v3397
    %v3537 = vpop.f32.mrf.mxu0
    %v3538 = vadd.f32 0.0, %v3537
    %v3539 = vpop.f32.mrf.mxu0
    %v3540 = vadd.f32 0.0, %v3539
    %3541 = vdwg.mxu0
    %v3546 = vcombine.low %v3467, %v3469
    %v3547 = vcombine.low %v3538, %v3540
    %v3549 = vunpack.c.l.s4 1966171168
    %v3550 = vunpack.c.0.s8 %v3549
    %v3551 = vlaneseq
    %v3552 = vshrl.u32 %v3551, 7
    %v3553 = vsub.s32 %v3550, %v3552
    %v3554 = vrot.slane %v3546, %v3553
    %v3556 = vunpack.c.l.s4 1966171168
    %v3557 = vunpack.c.0.s8 %v3556
    %v3558 = vlaneseq
    %v3559 = vshrl.u32 %v3558, 7
    %v3560 = vsub.s32 %v3557, %v3559
    %v3561 = vrot.slane %v3547, %v3560
    %v3562 = vcombine.low %v3554, %v3561
    %v3564 = vunpack.c.l.s4 1966171168
    %v3565 = vunpack.c.0.s8 %v3564
    %v3566 = vlaneseq
    %v3567 = vshrl.u32 %v3566, 7
    %v3568 = vsub.s32 %v3565, %v3567
    %v3569 = vrot.slane %v3562, %v3568
    %v3571 = vadd.f32 %v3399, %v3569
    %v3572 = vxor.u32 %v3571, 2147483648
    %v3573 = vmul.f32 %v3572, 1.442695
    %v3574 = vpow.pop %v3573
    %v3575 = vadd.f32 %v3574, 1.0
    %v3576 = vrcp.pop %v3575
    %v3577 = vmul.f32 1.0, %v3576
    %v3578 = vtanh.pop %v3571
    %v3580 = vrot.slane %v3577, 1
    %v3582 = vmul.f32 %v3580, %v3393
    %v3584 = vrot.slane %v3578, 2
    %v3586 = vmul.f32 %v3577, %v3584
    %v3587 = vadd.f32 %v3582, %v3586
    %v3588 = vtanh.pop %v3587
    %v3589 = vrot.slane %v3577, 3
    %v3591 = vmul.f32 %v3589, %v3588
    %s3592 = scalar_lea.vmem [#allocation4], 7
    %v3593 = vld [vmem:[%s3592] ss:$8 sm:$0xf]
    %3594 = vmatprep.subr.mxu0 %v2232
    %3595 = vmatpush1.msra.mxu0 %v2231
    %3596 = vmatprep.subr.mxu0 %v2228
    %3597 = vmatpush1.msra.mxu0 %v2227
    %3598 = vmatprep.subr.mxu0 %v2224
    %3599 = vmatpush1.msra.mxu0 %v2223
    %3600 = vmatprep.subr.mxu0 %v2220
    %3601 = vmatpush1.msra.mxu0 %v2219
    %3602 = vmatprep.subr.mxu0 %v2216
    %3603 = vmatpush1.msra.mxu0 %v2215
    %3604 = vmatprep.subr.mxu0 %v2212
    %3605 = vmatpush1.msra.mxu0 %v2211
    %3606 = vmatprep.subr.mxu0 %v2208
    %3607 = vmatpush1.msra.mxu0 %v2207
    %3608 = vmatprep.subr.mxu0 %v2204
    %3609 = vmatpush1.msra.mxu0 %v2203
    %3610 = vmatprep.subr.mxu0 %v2200
    %3611 = vmatpush1.msra.mxu0 %v2199
    %3612 = vmatprep.subr.mxu0 %v2196
    %3613 = vmatpush1.msra.mxu0 %v2195
    %3614 = vmatprep.subr.mxu0 %v2192
    %3615 = vmatpush1.msra.mxu0 %v2191
    %3616 = vmatprep.subr.mxu0 %v2188
    %3617 = vmatpush1.msra.mxu0 %v2187
    %3618 = vmatprep.subr.mxu0 %v2184
    %3619 = vmatpush1.msra.mxu0 %v2183
    %3620 = vmatprep.subr.mxu0 %v2180
    %3621 = vmatpush1.msra.mxu0 %v2179
    %3622 = vmatprep.subr.mxu0 %v2176
    %3623 = vmatpush1.msra.mxu0 %v2175
    %3624 = vmatprep.subr.mxu0 %v2172
    %3625 = vmatpush1.msra.mxu0 %v2171
    %3626 = vmatprep.subr.mxu0 0.0
    %3627 = vmatpush2.msra.mxu0 0.0
    %3628 = vmatprep.subr.mxu0 0.0
    %3629 = vmatpush2.msra.mxu0 0.0
    %3630 = vmatprep.subr.mxu0 0.0
    %3631 = vmatpush2.msra.mxu0 0.0
    %3632 = vmatprep.subr.mxu0 0.0
    %3633 = vmatpush2.msra.mxu0 0.0
    %3634 = vmatprep.subr.mxu0 0.0
    %3635 = vmatpush2.msra.mxu0 0.0
    %3636 = vmatprep.subr.mxu0 0.0
    %3637 = vmatpush2.msra.mxu0 0.0
    %3638 = vmatprep.subr.mxu0 0.0
    %3639 = vmatpush2.msra.mxu0 0.0
    %3640 = vmatprep.subr.mxu0 0.0
    %3641 = vmatpush2.msra.mxu0 0.0
    %3642 = vmatprep.subr.mxu0 0.0
    %3643 = vmatpush2.msra.mxu0 0.0
    %3644 = vmatprep.subr.mxu0 0.0
    %3645 = vmatpush2.msra.mxu0 0.0
    %3646 = vmatprep.subr.mxu0 0.0
    %3647 = vmatpush2.msra.mxu0 0.0
    %3648 = vmatprep.subr.mxu0 0.0
    %3649 = vmatpush2.msra.mxu0 0.0
    %3650 = vmatprep.subr.mxu0 0.0
    %3651 = vmatpush2.msra.mxu0 0.0
    %3652 = vmatprep.subr.mxu0 0.0
    %3653 = vmatpush2.msra.mxu0 0.0
    %3654 = vmatprep.subr.mxu0 0.0
    %3655 = vmatpush2.msra.mxu0 0.0
    %3656 = vmatprep.subr.mxu0 0.0
    %3657 = vmatpush2.msra.mxu0 0.0
    %3658 = vmatprep.mubr.f32.mxu0 0.0
    %3659 = vmatmul.mubr.f32.gmra.mxu0 %v3591
    %v3660 = vpop.f32.mrf.mxu0
    %v3661 = vadd.f32 0.0, %v3660
    %v3662 = vpop.f32.mrf.mxu0
    %v3663 = vadd.f32 0.0, %v3662
    %3664 = vdwg.mxu0
    %3665 = vmatprep.subr.mxu0 %v2234
    %3666 = vmatpush1.msra.mxu0 %v2233
    %3667 = vmatprep.subr.mxu0 %v2230
    %3668 = vmatpush1.msra.mxu0 %v2229
    %3669 = vmatprep.subr.mxu0 %v2226
    %3670 = vmatpush1.msra.mxu0 %v2225
    %3671 = vmatprep.subr.mxu0 %v2222
    %3672 = vmatpush1.msra.mxu0 %v2221
    %3673 = vmatprep.subr.mxu0 %v2218
    %3674 = vmatpush1.msra.mxu0 %v2217
    %3675 = vmatprep.subr.mxu0 %v2214
    %3676 = vmatpush1.msra.mxu0 %v2213
    %3677 = vmatprep.subr.mxu0 %v2210
    %3678 = vmatpush1.msra.mxu0 %v2209
    %3679 = vmatprep.subr.mxu0 %v2206
    %3680 = vmatpush1.msra.mxu0 %v2205
    %3681 = vmatprep.subr.mxu0 %v2202
    %3682 = vmatpush1.msra.mxu0 %v2201
    %3683 = vmatprep.subr.mxu0 %v2198
    %3684 = vmatpush1.msra.mxu0 %v2197
    %3685 = vmatprep.subr.mxu0 %v2194
    %3686 = vmatpush1.msra.mxu0 %v2193
    %3687 = vmatprep.subr.mxu0 %v2190
    %3688 = vmatpush1.msra.mxu0 %v2189
    %3689 = vmatprep.subr.mxu0 %v2186
    %3690 = vmatpush1.msra.mxu0 %v2185
    %3691 = vmatprep.subr.mxu0 %v2182
    %3692 = vmatpush1.msra.mxu0 %v2181
    %3693 = vmatprep.subr.mxu0 %v2178
    %3694 = vmatpush1.msra.mxu0 %v2177
    %3695 = vmatprep.subr.mxu0 %v2174
    %3696 = vmatpush1.msra.mxu0 %v2173
    %3697 = vmatprep.subr.mxu0 0.0
    %3698 = vmatpush2.msra.mxu0 0.0
    %3699 = vmatprep.subr.mxu0 0.0
    %3700 = vmatpush2.msra.mxu0 0.0
    %3701 = vmatprep.subr.mxu0 0.0
    %3702 = vmatpush2.msra.mxu0 0.0
    %3703 = vmatprep.subr.mxu0 0.0
    %3704 = vmatpush2.msra.mxu0 0.0
    %3705 = vmatprep.subr.mxu0 0.0
    %3706 = vmatpush2.msra.mxu0 0.0
    %3707 = vmatprep.subr.mxu0 0.0
    %3708 = vmatpush2.msra.mxu0 0.0
    %3709 = vmatprep.subr.mxu0 0.0
    %3710 = vmatpush2.msra.mxu0 0.0
    %3711 = vmatprep.subr.mxu0 0.0
    %3712 = vmatpush2.msra.mxu0 0.0
    %3713 = vmatprep.subr.mxu0 0.0
    %3714 = vmatpush2.msra.mxu0 0.0
    %3715 = vmatprep.subr.mxu0 0.0
    %3716 = vmatpush2.msra.mxu0 0.0
    %3717 = vmatprep.subr.mxu0 0.0
    %3718 = vmatpush2.msra.mxu0 0.0
    %3719 = vmatprep.subr.mxu0 0.0
    %3720 = vmatpush2.msra.mxu0 0.0
    %3721 = vmatprep.subr.mxu0 0.0
    %3722 = vmatpush2.msra.mxu0 0.0
    %3723 = vmatprep.subr.mxu0 0.0
    %3724 = vmatpush2.msra.mxu0 0.0
    %3725 = vmatprep.subr.mxu0 0.0
    %3726 = vmatpush2.msra.mxu0 0.0
    %3727 = vmatprep.subr.mxu0 0.0
    %3728 = vmatpush2.msra.mxu0 0.0
    %3729 = vmatprep.mubr.f32.mxu0 0.0
    %3730 = vmatmul.mubr.f32.gmra.mxu0 %v3591
    %v3731 = vpop.f32.mrf.mxu0
    %v3732 = vadd.f32 0.0, %v3731
    %v3733 = vpop.f32.mrf.mxu0
    %v3734 = vadd.f32 0.0, %v3733
    %3735 = vdwg.mxu0
    %v3740 = vcombine.low %v3661, %v3663
    %v3741 = vcombine.low %v3732, %v3734
    %v3743 = vunpack.c.l.s4 1966171168
    %v3744 = vunpack.c.0.s8 %v3743
    %v3745 = vlaneseq
    %v3746 = vshrl.u32 %v3745, 7
    %v3747 = vsub.s32 %v3744, %v3746
    %v3748 = vrot.slane %v3740, %v3747
    %v3750 = vunpack.c.l.s4 1966171168
    %v3751 = vunpack.c.0.s8 %v3750
    %v3752 = vlaneseq
    %v3753 = vshrl.u32 %v3752, 7
    %v3754 = vsub.s32 %v3751, %v3753
    %v3755 = vrot.slane %v3741, %v3754
    %v3756 = vcombine.low %v3748, %v3755
    %v3758 = vunpack.c.l.s4 1966171168
    %v3759 = vunpack.c.0.s8 %v3758
    %v3760 = vlaneseq
    %v3761 = vshrl.u32 %v3760, 7
    %v3762 = vsub.s32 %v3759, %v3761
    %v3763 = vrot.slane %v3756, %v3762
    %v3765 = vadd.f32 %v3593, %v3763
    %v3766 = vxor.u32 %v3765, 2147483648
    %v3767 = vmul.f32 %v3766, 1.442695
    %v3768 = vpow.pop %v3767
    %v3769 = vadd.f32 %v3768, 1.0
    %v3770 = vrcp.pop %v3769
    %v3771 = vmul.f32 1.0, %v3770
    %v3772 = vtanh.pop %v3765
    %v3774 = vrot.slane %v3771, 1
    %v3776 = vmul.f32 %v3774, %v3587
    %v3778 = vrot.slane %v3772, 2
    %v3780 = vmul.f32 %v3771, %v3778
    %v3781 = vadd.f32 %v3776, %v3780
    %v3782 = vtanh.pop %v3781
    %v3783 = vrot.slane %v3771, 3
    %v3785 = vmul.f32 %v3783, %v3782
    %3786 = vst [vmem:[#allocation13] sm:$0x1] %v3785
    // Predicated region
    $region46: #{encoder_forward.1} parent=1 // pred_check
      _
    $region47: #{encoder_forward.1} parent=1 // pred_check_branch
      %3788 = sbr.rel (0) target = $region49
    $region48: #{encoder_forward.1} parent=1 // pred_region
      %s3790 = ssub.s32 16, 16
      %3791 = vsyncadd [#allocation7], %s3790
      %s3793 = sshll.u32 [#allocation13], 4
      %s3794 = int_to_ptr.vmem [resolvable:$true] %s3793
      %3796 = dma.vmem_to_hbm [thread:$0]  %s3794, 16, %s7, [#allocation7]
    $region49: #{encoder_forward.1} parent=1 // pred_fallthru
      _
    // Predicated region
    $region50: #{encoder_forward.1} parent=1 // pred_check
      _
    $region51: #{encoder_forward.1} parent=1 // pred_check_branch
      %3798 = sbr.rel (0) target = $region53
    $region52: #{encoder_forward.1} parent=1 // pred_region
      %3799 = dma.done [#allocation7], 16
    $region53: #{encoder_forward.1} parent=1 // pred_fallthru
      _
    %3800 = vsyncpa [#allocation6], 1
    %3801 = vsyncpa [#allocation9], 1
    %3802 = vsyncpa [#allocation12], 1
    %3803 = vsyncpa [#allocation7], 1

</llo_original>
